<compile_context>
chip_gen: v6e
topology: v6e:2x2x1
jax: 0.10.0
libtpu: 0.0.40
codegen_flags: <defaults>
</compile_context>

<pallas_src>
import math

import jax
import jax.numpy as jnp
from jax.experimental import pallas as pl
from jax.experimental.pallas import tpu as pltpu

# ---------------- model config (small, BERT-shaped) ----------------
VOCAB      = 100
MAX_POS    = 16
HIDDEN     = 128
N_LAYERS   = 2
N_HEADS    = 4
HEAD_DIM   = HIDDEN // N_HEADS      # 32
INTER      = 512                    # 4 * hidden
OUT_FEATS  = 512                    # feature_extractor output (as in the module)
LN_EPS     = 1e-12


def _layernorm(x, g, b):
    mean = jnp.mean(x, axis=-1, keepdims=True)
    c = x - mean
    var = jnp.mean(c * c, axis=-1, keepdims=True)
    return c * jax.lax.rsqrt(var + LN_EPS) * g + b


# ---------------- fused per-batch-element kernel ----------------
def _make_kernel(S):
    H, nH, Dh = HIDDEN, N_HEADS, HEAD_DIM

    def kernel(ids_ref, word_emb_ref, pos_emb_ref, type_emb_ref, mask_ref,
               emb_g_ref, emb_b_ref,
               wqkv_ref, bqkv_ref, wo_ref, bo_ref, ln1_g_ref, ln1_b_ref,
               wi_ref, bi_ref, wf_ref, bf_ref, ln2_g_ref, ln2_b_ref,
               featw_ref, featb_ref, o_ref, emb_sc):
        b = pl.program_id(0)

        # --- fused embedding gather: one row per token of this batch element ---
        for s in range(S):                      # static unroll, dynamic row index
            tok = ids_ref[b, s]
            emb_sc[pl.ds(s, 1), :] = word_emb_ref[pl.ds(tok, 1), :]
        x = emb_sc[...] + pos_emb_ref[0:S, :] + type_emb_ref[0:1, :]   # (S, H) f32

        # --- embedding LayerNorm ---
        h = _layernorm(x, emb_g_ref[...], emb_b_ref[...])

        # --- attention mask bias, computed + broadcast ONCE ---
        mask_row = mask_ref[...].reshape(1, S)                  # raw 0/1 mask
        bias_full = jnp.broadcast_to((1.0 - mask_row) * -10000.0, (S, S))

        # --- encoder layers (static unroll: N_LAYERS = 2) ---
        for lp in range(N_LAYERS):
            # fused QKV projection: (S, H) @ (H, 3H), bf16 in / f32 accumulate.
            # 1/sqrt(head_dim) is folded into the Q columns of wqkv at init.
            h_bf = h.astype(jnp.bfloat16)
            qkv = jnp.dot(h_bf, wqkv_ref[lp],
                          preferred_element_type=jnp.float32) + bqkv_ref[lp]
            qkv_bf = qkv.astype(jnp.bfloat16)        # single cast, sliced per head

            wo_l = wo_ref[lp]                        # (H, H) bf16
            attn = jnp.zeros((S, H), jnp.float32)
            for hh in range(nH):
                c0 = hh * Dh
                q_h = qkv_bf[:, c0:c0 + Dh]
                k_h = qkv_bf[:, H + c0:H + c0 + Dh]
                v_h = qkv_bf[:, 2 * H + c0:2 * H + c0 + Dh]
                # scores: (S, S) = q_h @ k_h^T (contract head_dim)
                sc = jax.lax.dot_general(
                    q_h, k_h, (((1,), (1,)), ((), ())),
                    preferred_element_type=jnp.float32)
                sc = sc + bias_full
                m = jnp.max(sc, axis=-1, keepdims=True)
                p = jnp.exp(sc - m)
                denom = jnp.sum(p, axis=-1, keepdims=True)
                p = p * pl.reciprocal(denom, approx=True)
                ctx = jnp.dot(p.astype(jnp.bfloat16), v_h,
                              preferred_element_type=jnp.float32)       # (S, Dh)
                # per-head slice of the output projection: no lane concatenate
                attn = attn + jnp.dot(ctx.astype(jnp.bfloat16),
                                      wo_l[c0:c0 + Dh, :],
                                      preferred_element_type=jnp.float32)
            attn = attn + bo_ref[lp]
            h = _layernorm(attn + h, ln1_g_ref[lp], ln1_b_ref[lp])

            inter = jnp.dot(h.astype(jnp.bfloat16), wi_ref[lp],
                            preferred_element_type=jnp.float32) + bi_ref[lp]
            # tanh-approx GELU (see TODO at top); keep VPU/EUP math in f32
            inter = 0.5 * inter * (
                1.0 + jnp.tanh(0.7978845608028654 *
                               (inter + 0.044715 * inter * inter * inter)))
            ffn = jnp.dot(inter.astype(jnp.bfloat16), wf_ref[lp],
                          preferred_element_type=jnp.float32) + bf_ref[lp]
            h = _layernorm(ffn + h, ln2_g_ref[lp], ln2_b_ref[lp])

        # --- CLS pooling (row 0) + feature extractor (dropout = identity) ---
        cls = h[0:1, :]                                                   # (1, H)
        feat = jnp.dot(cls.astype(jnp.bfloat16), featw_ref[...],
                       preferred_element_type=jnp.float32) + featb_ref[...]
        o_ref[...] = feat.reshape(1, 1, OUT_FEATS)

    return kernel


# ---------------- pallas_call wrapper ----------------
def pallas_text_model(input_ids, attention_mask, params, B, S):
    vmem = pl.BlockSpec(memory_space=pltpu.MemorySpace.VMEM)   # whole array in VMEM
    smem = pl.BlockSpec(memory_space=pltpu.MemorySpace.SMEM)   # token ids (scalars)

    mask = attention_mask.astype(jnp.float32).reshape(B, 1, S)

    in_specs = [
        smem,                                               # input_ids  (B, S) int32
        vmem,                                               # word_emb   (VOCAB, H)
        vmem,                                               # pos_emb    (MAX_POS, H)
        vmem,                                               # type_emb   (2, H)
        pl.BlockSpec((1, 1, S), lambda b: (b, 0, 0)),       # mask       (B, 1, S)
    ] + [vmem] * 16                                         # all weights / LN params

    out = pl.pallas_call(
        _make_kernel(S),
        grid=(B,),
        out_shape=jax.ShapeDtypeStruct((B, 1, OUT_FEATS), jnp.float32),
        in_specs=in_specs,
        out_specs=pl.BlockSpec((1, 1, OUT_FEATS), lambda b: (b, 0, 0)),
        scratch_shapes=[pltpu.VMEM((S, HIDDEN), jnp.float32)],
        compiler_params=pltpu.CompilerParams(
            dimension_semantics=("parallel",)),              # 2 TCs on v7x
    )(input_ids,
      params["word_emb"], params["pos_emb"], params["type_emb"], mask,
      params["emb_ln_g"], params["emb_ln_b"],
      params["wqkv"], params["bqkv"], params["wo"], params["bo"],
      params["ln1_g"], params["ln1_b"],
      params["wi"], params["bi"], params["wf"], params["bf"],
      params["ln2_g"], params["ln2_b"],
      params["feat_w"], params["feat_b"])
    return out.reshape(B, OUT_FEATS)


# ---------------- deterministic parameter init (fused / stacked layout) ----------------
def init_params(key):
    keys = iter(jax.random.split(key, 64))

    def w(shape):
        return jax.random.normal(next(keys), shape, jnp.float32) * 0.02

    def stack(make):
        return jnp.stack([make() for _ in range(N_LAYERS)], axis=0)

    H = HIDDEN
    q_scale = 1.0 / math.sqrt(HEAD_DIM)

    def make_wqkv():
        # fold the attention 1/sqrt(head_dim) scale into the Q projection
        # (if loading real weights, scale the Q bias the same way)
        return jnp.concatenate([w((H, H)) * q_scale, w((H, H)), w((H, H))], axis=1)

    params = {
        "word_emb": w((VOCAB, H)),
        "pos_emb": w((MAX_POS, H)),
        "type_emb": w((2, H)),
        "emb_ln_g": jnp.ones((1, H), jnp.float32),
        "emb_ln_b": jnp.zeros((1, H), jnp.float32),
        # matmul weights in bf16 (native MXU input), biases / LN params in f32
        "wqkv": stack(make_wqkv).astype(jnp.bfloat16),
        "bqkv": jnp.zeros((N_LAYERS, 1, 3 * H), jnp.float32),
        "wo": stack(lambda: w((H, H))).astype(jnp.bfloat16),
        "bo": jnp.zeros((N_LAYERS, 1, H), jnp.float32),
        "ln1_g": jnp.ones((N_LAYERS, 1, H), jnp.float32),
        "ln1_b": jnp.zeros((N_LAYERS, 1, H), jnp.float32),
        "wi": stack(lambda: w((H, INTER))).astype(jnp.bfloat16),
        "bi": jnp.zeros((N_LAYERS, 1, INTER), jnp.float32),
        "wf": stack(lambda: w((INTER, H))).astype(jnp.bfloat16),
        "bf": jnp.zeros((N_LAYERS, 1, H), jnp.float32),
        "ln2_g": jnp.ones((N_LAYERS, 1, H), jnp.float32),
        "ln2_b": jnp.zeros((N_LAYERS, 1, H), jnp.float32),
        "feat_w": w((H, OUT_FEATS)).astype(jnp.bfloat16),
        "feat_b": jnp.zeros((1, OUT_FEATS), jnp.float32),
    }
    return params


# ---------------- forward pass (mirrors TextModel.forward) ----------------
def text_model_forward(params, input_ids, attention_mask):
    B, S = input_ids.shape
    # Everything (embedding gather + LN, 2 encoder layers, CLS pooling,
    # feature_extractor) runs inside a single pallas_call.
    return pallas_text_model(input_ids, attention_mask, params, B, S)   # (B, 512)


if __name__ == "__main__":
    key = jax.random.PRNGKey(0)
    k_params, k_ids = jax.random.split(key)

    params = init_params(k_params)

    B, S = 2, 8
    input_ids = jax.random.randint(k_ids, (B, S), 0, VOCAB, dtype=jnp.int32)
    attention_mask = jnp.array(
        [[1, 1, 1, 1, 1, 1, 1, 1],
         [1, 1, 1, 1, 1, 1, 0, 0]], dtype=jnp.int32
    )

    out = jax.jit(text_model_forward)(params, input_ids, attention_mask)
    out = jax.block_until_ready(out)
    assert out.shape == (B, OUT_FEATS) and out.dtype == jnp.float32
    assert bool(jnp.all(jnp.isfinite(out)))
    print("KERNEL_OK")
</pallas_src>

<mosaic_0001>
module attributes {stable_mosaic.version = 11 : i64} {
  func.func @kernel(%arg0: i32, %arg1: memref<2x8xi32, #tpu.memory_space<smem>>, %arg2: memref<100x128xf32, #tpu.memory_space<vmem>>, %arg3: memref<16x128xf32, #tpu.memory_space<vmem>>, %arg4: memref<2x128xf32, #tpu.memory_space<vmem>>, %arg5: memref<1x1x8xf32, #tpu.memory_space<vmem>>, %arg6: memref<1x128xf32, #tpu.memory_space<vmem>>, %arg7: memref<1x128xf32, #tpu.memory_space<vmem>>, %arg8: memref<2x128x384xbf16, #tpu.memory_space<vmem>>, %arg9: memref<2x1x384xf32, #tpu.memory_space<vmem>>, %arg10: memref<2x128x128xbf16, #tpu.memory_space<vmem>>, %arg11: memref<2x1x128xf32, #tpu.memory_space<vmem>>, %arg12: memref<2x1x128xf32, #tpu.memory_space<vmem>>, %arg13: memref<2x1x128xf32, #tpu.memory_space<vmem>>, %arg14: memref<2x128x512xbf16, #tpu.memory_space<vmem>>, %arg15: memref<2x1x512xf32, #tpu.memory_space<vmem>>, %arg16: memref<2x512x128xbf16, #tpu.memory_space<vmem>>, %arg17: memref<2x1x128xf32, #tpu.memory_space<vmem>>, %arg18: memref<2x1x128xf32, #tpu.memory_space<vmem>>, %arg19: memref<2x1x128xf32, #tpu.memory_space<vmem>>, %arg20: memref<128x512xbf16, #tpu.memory_space<vmem>>, %arg21: memref<1x512xf32, #tpu.memory_space<vmem>>, %arg22: memref<1x1x512xf32, #tpu.memory_space<vmem>>, %arg23: memref<8x128xf32, #tpu.memory_space<vmem>>) attributes {dimension_semantics = [#tpu.dimension_semantics<parallel>], iteration_bounds = array<i64: 2>, scalar_prefetch = 0 : i64, scratch_operands = 1 : i64, tpu.core_type = #tpu.core_type<tc>, window_params = [{transform_indices = @transform_0, window_bounds = array<i64: 2, 8>}, {pipeline_mode = #tpu.pipeline_mode<synchronous>, transform_indices = @transform_1, window_bounds = array<i64: 100, 128>}, {pipeline_mode = #tpu.pipeline_mode<synchronous>, transform_indices = @transform_2, window_bounds = array<i64: 16, 128>}, {pipeline_mode = #tpu.pipeline_mode<synchronous>, transform_indices = @transform_3, window_bounds = array<i64: 2, 128>}, {transform_indices = @transform_4, window_bounds = array<i64: 1, 1, 8>}, {pipeline_mode = #tpu.pipeline_mode<synchronous>, transform_indices = @transform_5, window_bounds = array<i64: 1, 128>}, {pipeline_mode = #tpu.pipeline_mode<synchronous>, transform_indices = @transform_6, window_bounds = array<i64: 1, 128>}, {pipeline_mode = #tpu.pipeline_mode<synchronous>, transform_indices = @transform_7, window_bounds = array<i64: 2, 128, 384>}, {pipeline_mode = #tpu.pipeline_mode<synchronous>, transform_indices = @transform_8, window_bounds = array<i64: 2, 1, 384>}, {pipeline_mode = #tpu.pipeline_mode<synchronous>, transform_indices = @transform_9, window_bounds = array<i64: 2, 128, 128>}, {pipeline_mode = #tpu.pipeline_mode<synchronous>, transform_indices = @transform_10, window_bounds = array<i64: 2, 1, 128>}, {pipeline_mode = #tpu.pipeline_mode<synchronous>, transform_indices = @transform_11, window_bounds = array<i64: 2, 1, 128>}, {pipeline_mode = #tpu.pipeline_mode<synchronous>, transform_indices = @transform_12, window_bounds = array<i64: 2, 1, 128>}, {pipeline_mode = #tpu.pipeline_mode<synchronous>, transform_indices = @transform_13, window_bounds = array<i64: 2, 128, 512>}, {pipeline_mode = #tpu.pipeline_mode<synchronous>, transform_indices = @transform_14, window_bounds = array<i64: 2, 1, 512>}, {pipeline_mode = #tpu.pipeline_mode<synchronous>, transform_indices = @transform_15, window_bounds = array<i64: 2, 512, 128>}, {pipeline_mode = #tpu.pipeline_mode<synchronous>, transform_indices = @transform_16, window_bounds = array<i64: 2, 1, 128>}, {pipeline_mode = #tpu.pipeline_mode<synchronous>, transform_indices = @transform_17, window_bounds = array<i64: 2, 1, 128>}, {pipeline_mode = #tpu.pipeline_mode<synchronous>, transform_indices = @transform_18, window_bounds = array<i64: 2, 1, 128>}, {pipeline_mode = #tpu.pipeline_mode<synchronous>, transform_indices = @transform_19, window_bounds = array<i64: 128, 512>}, {pipeline_mode = #tpu.pipeline_mode<synchronous>, transform_indices = @transform_20, window_bounds = array<i64: 1, 512>}, {transform_indices = @transform_21, window_bounds = array<i64: 1, 1, 512>}]} {
    %0 = arith.index_cast %arg0 : i32 to index
    %c0 = arith.constant 0 : index
    %1 = memref.load %arg1[%0, %c0] : memref<2x8xi32, #tpu.memory_space<smem>>
    %2 = arith.index_cast %1 : i32 to index
    %c0_0 = arith.constant 0 : index
    %3 = vector.load %arg2[%2, %c0_0] : memref<100x128xf32, #tpu.memory_space<vmem>>, vector<1x128xf32>
    %c0_1 = arith.constant 0 : index
    %c0_2 = arith.constant 0 : index
    %4 = vector.load %arg23[%c0_1, %c0_2] : memref<8x128xf32, #tpu.memory_space<vmem>>, vector<1x128xf32>
    tpu.vector_store %arg23[%c0_1, %c0_2], %3 {strides = array<i32>} : memref<8x128xf32, #tpu.memory_space<vmem>>, vector<1x128xf32>,
    %5 = arith.index_cast %arg0 : i32 to index
    %c1 = arith.constant 1 : index
    %6 = memref.load %arg1[%5, %c1] : memref<2x8xi32, #tpu.memory_space<smem>>
    %7 = arith.index_cast %6 : i32 to index
    %c0_3 = arith.constant 0 : index
    %8 = vector.load %arg2[%7, %c0_3] : memref<100x128xf32, #tpu.memory_space<vmem>>, vector<1x128xf32>
    %c1_4 = arith.constant 1 : index
    %c0_5 = arith.constant 0 : index
    %9 = vector.load %arg23[%c1_4, %c0_5] : memref<8x128xf32, #tpu.memory_space<vmem>>, vector<1x128xf32>
    tpu.vector_store %arg23[%c1_4, %c0_5], %8 {strides = array<i32>} : memref<8x128xf32, #tpu.memory_space<vmem>>, vector<1x128xf32>,
    %10 = arith.index_cast %arg0 : i32 to index
    %c2 = arith.constant 2 : index
    %11 = memref.load %arg1[%10, %c2] : memref<2x8xi32, #tpu.memory_space<smem>>
    %12 = arith.index_cast %11 : i32 to index
    %c0_6 = arith.constant 0 : index
    %13 = vector.load %arg2[%12, %c0_6] : memref<100x128xf32, #tpu.memory_space<vmem>>, vector<1x128xf32>
    %c2_7 = arith.constant 2 : index
    %c0_8 = arith.constant 0 : index
    %14 = vector.load %arg23[%c2_7, %c0_8] : memref<8x128xf32, #tpu.memory_space<vmem>>, vector<1x128xf32>
    tpu.vector_store %arg23[%c2_7, %c0_8], %13 {strides = array<i32>} : memref<8x128xf32, #tpu.memory_space<vmem>>, vector<1x128xf32>,
    %15 = arith.index_cast %arg0 : i32 to index
    %c3 = arith.constant 3 : index
    %16 = memref.load %arg1[%15, %c3] : memref<2x8xi32, #tpu.memory_space<smem>>
    %17 = arith.index_cast %16 : i32 to index
    %c0_9 = arith.constant 0 : index
    %18 = vector.load %arg2[%17, %c0_9] : memref<100x128xf32, #tpu.memory_space<vmem>>, vector<1x128xf32>
    %c3_10 = arith.constant 3 : index
    %c0_11 = arith.constant 0 : index
    %19 = vector.load %arg23[%c3_10, %c0_11] : memref<8x128xf32, #tpu.memory_space<vmem>>, vector<1x128xf32>
    tpu.vector_store %arg23[%c3_10, %c0_11], %18 {strides = array<i32>} : memref<8x128xf32, #tpu.memory_space<vmem>>, vector<1x128xf32>,
    %20 = arith.index_cast %arg0 : i32 to index
    %c4 = arith.constant 4 : index
    %21 = memref.load %arg1[%20, %c4] : memref<2x8xi32, #tpu.memory_space<smem>>
    %22 = arith.index_cast %21 : i32 to index
    %c0_12 = arith.constant 0 : index
    %23 = vector.load %arg2[%22, %c0_12] : memref<100x128xf32, #tpu.memory_space<vmem>>, vector<1x128xf32>
    %c4_13 = arith.constant 4 : index
    %c0_14 = arith.constant 0 : index
    %24 = vector.load %arg23[%c4_13, %c0_14] : memref<8x128xf32, #tpu.memory_space<vmem>>, vector<1x128xf32>
    tpu.vector_store %arg23[%c4_13, %c0_14], %23 {strides = array<i32>} : memref<8x128xf32, #tpu.memory_space<vmem>>, vector<1x128xf32>,
    %25 = arith.index_cast %arg0 : i32 to index
    %c5 = arith.constant 5 : index
    %26 = memref.load %arg1[%25, %c5] : memref<2x8xi32, #tpu.memory_space<smem>>
    %27 = arith.index_cast %26 : i32 to index
    %c0_15 = arith.constant 0 : index
    %28 = vector.load %arg2[%27, %c0_15] : memref<100x128xf32, #tpu.memory_space<vmem>>, vector<1x128xf32>
    %c5_16 = arith.constant 5 : index
    %c0_17 = arith.constant 0 : index
    %29 = vector.load %arg23[%c5_16, %c0_17] : memref<8x128xf32, #tpu.memory_space<vmem>>, vector<1x128xf32>
    tpu.vector_store %arg23[%c5_16, %c0_17], %28 {strides = array<i32>} : memref<8x128xf32, #tpu.memory_space<vmem>>, vector<1x128xf32>,
    %30 = arith.index_cast %arg0 : i32 to index
    %c6 = arith.constant 6 : index
    %31 = memref.load %arg1[%30, %c6] : memref<2x8xi32, #tpu.memory_space<smem>>
    %32 = arith.index_cast %31 : i32 to index
    %c0_18 = arith.constant 0 : index
    %33 = vector.load %arg2[%32, %c0_18] : memref<100x128xf32, #tpu.memory_space<vmem>>, vector<1x128xf32>
    %c6_19 = arith.constant 6 : index
    %c0_20 = arith.constant 0 : index
    %34 = vector.load %arg23[%c6_19, %c0_20] : memref<8x128xf32, #tpu.memory_space<vmem>>, vector<1x128xf32>
    tpu.vector_store %arg23[%c6_19, %c0_20], %33 {strides = array<i32>} : memref<8x128xf32, #tpu.memory_space<vmem>>, vector<1x128xf32>,
    %35 = arith.index_cast %arg0 : i32 to index
    %c7 = arith.constant 7 : index
    %36 = memref.load %arg1[%35, %c7] : memref<2x8xi32, #tpu.memory_space<smem>>
    %37 = arith.index_cast %36 : i32 to index
    %c0_21 = arith.constant 0 : index
    %38 = vector.load %arg2[%37, %c0_21] : memref<100x128xf32, #tpu.memory_space<vmem>>, vector<1x128xf32>
    %c7_22 = arith.constant 7 : index
    %c0_23 = arith.constant 0 : index
    %39 = vector.load %arg23[%c7_22, %c0_23] : memref<8x128xf32, #tpu.memory_space<vmem>>, vector<1x128xf32>
    tpu.vector_store %arg23[%c7_22, %c0_23], %38 {strides = array<i32>} : memref<8x128xf32, #tpu.memory_space<vmem>>, vector<1x128xf32>,
    %c0_24 = arith.constant 0 : index
    %c0_25 = arith.constant 0 : index
    %40 = vector.load %arg23[%c0_24, %c0_25] : memref<8x128xf32, #tpu.memory_space<vmem>>, vector<8x128xf32>
    %c0_26 = arith.constant 0 : index
    %c0_27 = arith.constant 0 : index
    %41 = vector.load %arg3[%c0_26, %c0_27] : memref<16x128xf32, #tpu.memory_space<vmem>>, vector<8x128xf32>
    %42 = arith.addf %40, %41 : vector<8x128xf32>
    %c0_28 = arith.constant 0 : index
    %c0_29 = arith.constant 0 : index
    %43 = vector.load %arg4[%c0_28, %c0_29] : memref<2x128xf32, #tpu.memory_space<vmem>>, vector<1x128xf32>
    %44 = vector.broadcast %43 : vector<1x128xf32> to vector<8x128xf32>
    %45 = arith.addf %42, %44 : vector<8x128xf32>
    %c0_30 = arith.constant 0 : index
    %c0_31 = arith.constant 0 : index
    %46 = vector.load %arg6[%c0_30, %c0_31] : memref<1x128xf32, #tpu.memory_space<vmem>>, vector<1x128xf32>
    %c0_32 = arith.constant 0 : index
    %c0_33 = arith.constant 0 : index
    %47 = vector.load %arg7[%c0_32, %c0_33] : memref<1x128xf32, #tpu.memory_space<vmem>>, vector<1x128xf32>
    %cst = arith.constant dense<0.000000e+00> : vector<8xf32>
    %48 = vector.multi_reduction <add>, %45, %cst [1] : vector<8x128xf32> to vector<8xf32>
    %49 = vector.shape_cast %48 : vector<8xf32> to vector<8x1xf32>
    %cst_34 = arith.constant 1.280000e+02 : f32
    %50 = vector.broadcast %cst_34 : f32 to vector<8x1xf32>
    %51 = arith.divf %49, %50 : vector<8x1xf32>
    %52 = vector.broadcast %51 : vector<8x1xf32> to vector<8x128xf32>
    %53 = arith.subf %45, %52 : vector<8x128xf32>
    %54 = arith.mulf %53, %53 : vector<8x128xf32>
    %cst_35 = arith.constant dense<0.000000e+00> : vector<8xf32>
    %55 = vector.multi_reduction <add>, %54, %cst_35 [1] : vector<8x128xf32> to vector<8xf32>
    %56 = vector.shape_cast %55 : vector<8xf32> to vector<8x1xf32>
    %cst_36 = arith.constant 1.280000e+02 : f32
    %57 = vector.broadcast %cst_36 : f32 to vector<8x1xf32>
    %58 = arith.divf %56, %57 : vector<8x1xf32>
    %cst_37 = arith.constant 9.99999996E-13 : f32
    %59 = vector.broadcast %cst_37 : f32 to vector<8x1xf32>
    %60 = arith.addf %58, %59 : vector<8x1xf32>
    %61 = math.rsqrt %60 : vector<8x1xf32>
    %62 = vector.broadcast %61 : vector<8x1xf32> to vector<8x128xf32>
    %63 = arith.mulf %53, %62 : vector<8x128xf32>
    %64 = vector.broadcast %46 : vector<1x128xf32> to vector<8x128xf32>
    %65 = arith.mulf %63, %64 : vector<8x128xf32>
    %66 = vector.broadcast %47 : vector<1x128xf32> to vector<8x128xf32>
    %67 = arith.addf %65, %66 : vector<8x128xf32>
    %c0_38 = arith.constant 0 : index
    %c0_39 = arith.constant 0 : index
    %c0_40 = arith.constant 0 : index
    %68 = vector.load %arg5[%c0_38, %c0_39, %c0_40] : memref<1x1x8xf32, #tpu.memory_space<vmem>>, vector<1x1x8xf32>
    %69 = vector.shape_cast %68 : vector<1x1x8xf32> to vector<1x8xf32>
    %cst_41 = arith.constant 1.000000e+00 : f32
    %70 = vector.broadcast %cst_41 : f32 to vector<1x8xf32>
    %71 = arith.subf %70, %69 : vector<1x8xf32>
    %cst_42 = arith.constant -1.000000e+04 : f32
    %72 = vector.broadcast %cst_42 : f32 to vector<1x8xf32>
    %73 = arith.mulf %71, %72 : vector<1x8xf32>
    %74 = vector.shape_cast %73 : vector<1x8xf32> to vector<1x8xf32>
    %75 = vector.broadcast %74 : vector<1x8xf32> to vector<8x8xf32>
    %76 = arith.truncf %67 : vector<8x128xf32> to vector<8x128xbf16>
    %c0_43 = arith.constant 0 : index
    %c0_44 = arith.constant 0 : index
    %c0_45 = arith.constant 0 : index
    %77 = vector.load %arg8[%c0_43, %c0_44, %c0_45] : memref<2x128x384xbf16, #tpu.memory_space<vmem>>, vector<1x128x384xbf16>
    %78 = vector.shape_cast %77 : vector<1x128x384xbf16> to vector<128x384xbf16>
    %cst_46 = arith.constant dense<0.000000e+00> : vector<8x384xf32>
    %79 = tpu.matmul %76, %78, %cst_46 {dimension_numbers = #tpu.dot_dimension_numbers<[1], [0], [0], [1], [0, 0, 1, 1], [], []>} : vector<8x128xbf16>, vector<128x384xbf16>, vector<8x384xf32> -> vector<8x384xf32>
    %c0_47 = arith.constant 0 : index
    %c0_48 = arith.constant 0 : index
    %c0_49 = arith.constant 0 : index
    %80 = vector.load %arg9[%c0_47, %c0_48, %c0_49] : memref<2x1x384xf32, #tpu.memory_space<vmem>>, vector<1x1x384xf32>
    %81 = vector.shape_cast %80 : vector<1x1x384xf32> to vector<1x384xf32>
    %82 = vector.broadcast %81 : vector<1x384xf32> to vector<8x384xf32>
    %83 = arith.addf %79, %82 : vector<8x384xf32>
    %84 = arith.truncf %83 : vector<8x384xf32> to vector<8x384xbf16>
    %c0_50 = arith.constant 0 : index
    %c0_51 = arith.constant 0 : index
    %c0_52 = arith.constant 0 : index
    %85 = vector.load %arg10[%c0_50, %c0_51, %c0_52] : memref<2x128x128xbf16, #tpu.memory_space<vmem>>, vector<1x128x128xbf16>
    %86 = vector.shape_cast %85 : vector<1x128x128xbf16> to vector<128x128xbf16>
    %cst_53 = arith.constant 0.000000e+00 : f32
    %87 = vector.broadcast %cst_53 : f32 to vector<8x128xf32>
    %88 = vector.extract_strided_slice %84 {offsets = [0, 0], sizes = [8, 32], strides = [1, 1]} : vector<8x384xbf16> to vector<8x32xbf16>
    %89 = vector.extract_strided_slice %84 {offsets = [0, 128], sizes = [8, 32], strides = [1, 1]} : vector<8x384xbf16> to vector<8x32xbf16>
    %90 = vector.extract_strided_slice %84 {offsets = [0, 256], sizes = [8, 32], strides = [1, 1]} : vector<8x384xbf16> to vector<8x32xbf16>
    %cst_54 = arith.constant dense<0.000000e+00> : vector<8x8xf32>
    %91 = tpu.matmul %88, %89, %cst_54 {dimension_numbers = #tpu.dot_dimension_numbers<[1], [1], [0], [0], [0, 0, 1, 0], [], []>} : vector<8x32xbf16>, vector<8x32xbf16>, vector<8x8xf32> -> vector<8x8xf32>
    %92 = arith.addf %91, %75 : vector<8x8xf32>
    %cst_55 = arith.constant dense<0xFF800000> : vector<8xf32>
    %93 = vector.multi_reduction <maximumf>, %92, %cst_55 [1] : vector<8x8xf32> to vector<8xf32>
    %94 = vector.shape_cast %93 : vector<8xf32> to vector<8x1xf32>
    %95 = vector.broadcast %94 : vector<8x1xf32> to vector<8x8xf32>
    %96 = arith.subf %92, %95 : vector<8x8xf32>
    %97 = math.exp %96 : vector<8x8xf32>
    %cst_56 = arith.constant dense<0.000000e+00> : vector<8xf32>
    %98 = vector.multi_reduction <add>, %97, %cst_56 [1] : vector<8x8xf32> to vector<8xf32>
    %99 = vector.shape_cast %98 : vector<8xf32> to vector<8x1xf32>
    %100 = tpu.reciprocal %99 {approx = true} : vector<8x1xf32> -> vector<8x1xf32>
    %101 = vector.broadcast %100 : vector<8x1xf32> to vector<8x8xf32>
    %102 = arith.mulf %97, %101 : vector<8x8xf32>
    %103 = arith.truncf %102 : vector<8x8xf32> to vector<8x8xbf16>
    %cst_57 = arith.constant dense<0.000000e+00> : vector<8x32xf32>
    %104 = tpu.matmul %103, %90, %cst_57 {dimension_numbers = #tpu.dot_dimension_numbers<[1], [0], [0], [1], [0, 0, 1, 1], [], []>} : vector<8x8xbf16>, vector<8x32xbf16>, vector<8x32xf32> -> vector<8x32xf32>
    %105 = arith.truncf %104 : vector<8x32xf32> to vector<8x32xbf16>
    %106 = vector.extract_strided_slice %86 {offsets = [0, 0], sizes = [32, 128], strides = [1, 1]} : vector<128x128xbf16> to vector<32x128xbf16>
    %cst_58 = arith.constant dense<0.000000e+00> : vector<8x128xf32>
    %107 = tpu.matmul %105, %106, %cst_58 {dimension_numbers = #tpu.dot_dimension_numbers<[1], [0], [0], [1], [0, 0, 1, 1], [], []>} : vector<8x32xbf16>, vector<32x128xbf16>, vector<8x128xf32> -> vector<8x128xf32>
    %108 = arith.addf %87, %107 : vector<8x128xf32>
    %109 = vector.extract_strided_slice %84 {offsets = [0, 32], sizes = [8, 32], strides = [1, 1]} : vector<8x384xbf16> to vector<8x32xbf16>
    %110 = vector.extract_strided_slice %84 {offsets = [0, 160], sizes = [8, 32], strides = [1, 1]} : vector<8x384xbf16> to vector<8x32xbf16>
    %111 = vector.extract_strided_slice %84 {offsets = [0, 288], sizes = [8, 32], strides = [1, 1]} : vector<8x384xbf16> to vector<8x32xbf16>
    %cst_59 = arith.constant dense<0.000000e+00> : vector<8x8xf32>
    %112 = tpu.matmul %109, %110, %cst_59 {dimension_numbers = #tpu.dot_dimension_numbers<[1], [1], [0], [0], [0, 0, 1, 0], [], []>} : vector<8x32xbf16>, vector<8x32xbf16>, vector<8x8xf32> -> vector<8x8xf32>
    %113 = arith.addf %112, %75 : vector<8x8xf32>
    %cst_60 = arith.constant dense<0xFF800000> : vector<8xf32>
    %114 = vector.multi_reduction <maximumf>, %113, %cst_60 [1] : vector<8x8xf32> to vector<8xf32>
    %115 = vector.shape_cast %114 : vector<8xf32> to vector<8x1xf32>
    %116 = vector.broadcast %115 : vector<8x1xf32> to vector<8x8xf32>
    %117 = arith.subf %113, %116 : vector<8x8xf32>
    %118 = math.exp %117 : vector<8x8xf32>
    %cst_61 = arith.constant dense<0.000000e+00> : vector<8xf32>
    %119 = vector.multi_reduction <add>, %118, %cst_61 [1] : vector<8x8xf32> to vector<8xf32>
    %120 = vector.shape_cast %119 : vector<8xf32> to vector<8x1xf32>
    %121 = tpu.reciprocal %120 {approx = true} : vector<8x1xf32> -> vector<8x1xf32>
    %122 = vector.broadcast %121 : vector<8x1xf32> to vector<8x8xf32>
    %123 = arith.mulf %118, %122 : vector<8x8xf32>
    %124 = arith.truncf %123 : vector<8x8xf32> to vector<8x8xbf16>
    %cst_62 = arith.constant dense<0.000000e+00> : vector<8x32xf32>
    %125 = tpu.matmul %124, %111, %cst_62 {dimension_numbers = #tpu.dot_dimension_numbers<[1], [0], [0], [1], [0, 0, 1, 1], [], []>} : vector<8x8xbf16>, vector<8x32xbf16>, vector<8x32xf32> -> vector<8x32xf32>
    %126 = arith.truncf %125 : vector<8x32xf32> to vector<8x32xbf16>
    %127 = vector.extract_strided_slice %86 {offsets = [32, 0], sizes = [32, 128], strides = [1, 1]} : vector<128x128xbf16> to vector<32x128xbf16>
    %cst_63 = arith.constant dense<0.000000e+00> : vector<8x128xf32>
    %128 = tpu.matmul %126, %127, %cst_63 {dimension_numbers = #tpu.dot_dimension_numbers<[1], [0], [0], [1], [0, 0, 1, 1], [], []>} : vector<8x32xbf16>, vector<32x128xbf16>, vector<8x128xf32> -> vector<8x128xf32>
    %129 = arith.addf %108, %128 : vector<8x128xf32>
    %130 = vector.extract_strided_slice %84 {offsets = [0, 64], sizes = [8, 32], strides = [1, 1]} : vector<8x384xbf16> to vector<8x32xbf16>
    %131 = vector.extract_strided_slice %84 {offsets = [0, 192], sizes = [8, 32], strides = [1, 1]} : vector<8x384xbf16> to vector<8x32xbf16>
    %132 = vector.extract_strided_slice %84 {offsets = [0, 320], sizes = [8, 32], strides = [1, 1]} : vector<8x384xbf16> to vector<8x32xbf16>
    %cst_64 = arith.constant dense<0.000000e+00> : vector<8x8xf32>
    %133 = tpu.matmul %130, %131, %cst_64 {dimension_numbers = #tpu.dot_dimension_numbers<[1], [1], [0], [0], [0, 0, 1, 0], [], []>} : vector<8x32xbf16>, vector<8x32xbf16>, vector<8x8xf32> -> vector<8x8xf32>
    %134 = arith.addf %133, %75 : vector<8x8xf32>
    %cst_65 = arith.constant dense<0xFF800000> : vector<8xf32>
    %135 = vector.multi_reduction <maximumf>, %134, %cst_65 [1] : vector<8x8xf32> to vector<8xf32>
    %136 = vector.shape_cast %135 : vector<8xf32> to vector<8x1xf32>
    %137 = vector.broadcast %136 : vector<8x1xf32> to vector<8x8xf32>
    %138 = arith.subf %134, %137 : vector<8x8xf32>
    %139 = math.exp %138 : vector<8x8xf32>
    %cst_66 = arith.constant dense<0.000000e+00> : vector<8xf32>
    %140 = vector.multi_reduction <add>, %139, %cst_66 [1] : vector<8x8xf32> to vector<8xf32>
    %141 = vector.shape_cast %140 : vector<8xf32> to vector<8x1xf32>
    %142 = tpu.reciprocal %141 {approx = true} : vector<8x1xf32> -> vector<8x1xf32>
    %143 = vector.broadcast %142 : vector<8x1xf32> to vector<8x8xf32>
    %144 = arith.mulf %139, %143 : vector<8x8xf32>
    %145 = arith.truncf %144 : vector<8x8xf32> to vector<8x8xbf16>
    %cst_67 = arith.constant dense<0.000000e+00> : vector<8x32xf32>
    %146 = tpu.matmul %145, %132, %cst_67 {dimension_numbers = #tpu.dot_dimension_numbers<[1], [0], [0], [1], [0, 0, 1, 1], [], []>} : vector<8x8xbf16>, vector<8x32xbf16>, vector<8x32xf32> -> vector<8x32xf32>
    %147 = arith.truncf %146 : vector<8x32xf32> to vector<8x32xbf16>
    %148 = vector.extract_strided_slice %86 {offsets = [64, 0], sizes = [32, 128], strides = [1, 1]} : vector<128x128xbf16> to vector<32x128xbf16>
    %cst_68 = arith.constant dense<0.000000e+00> : vector<8x128xf32>
    %149 = tpu.matmul %147, %148, %cst_68 {dimension_numbers = #tpu.dot_dimension_numbers<[1], [0], [0], [1], [0, 0, 1, 1], [], []>} : vector<8x32xbf16>, vector<32x128xbf16>, vector<8x128xf32> -> vector<8x128xf32>
    %150 = arith.addf %129, %149 : vector<8x128xf32>
    %151 = vector.extract_strided_slice %84 {offsets = [0, 96], sizes = [8, 32], strides = [1, 1]} : vector<8x384xbf16> to vector<8x32xbf16>
    %152 = vector.extract_strided_slice %84 {offsets = [0, 224], sizes = [8, 32], strides = [1, 1]} : vector<8x384xbf16> to vector<8x32xbf16>
    %153 = vector.extract_strided_slice %84 {offsets = [0, 352], sizes = [8, 32], strides = [1, 1]} : vector<8x384xbf16> to vector<8x32xbf16>
    %cst_69 = arith.constant dense<0.000000e+00> : vector<8x8xf32>
    %154 = tpu.matmul %151, %152, %cst_69 {dimension_numbers = #tpu.dot_dimension_numbers<[1], [1], [0], [0], [0, 0, 1, 0], [], []>} : vector<8x32xbf16>, vector<8x32xbf16>, vector<8x8xf32> -> vector<8x8xf32>
    %155 = arith.addf %154, %75 : vector<8x8xf32>
    %cst_70 = arith.constant dense<0xFF800000> : vector<8xf32>
    %156 = vector.multi_reduction <maximumf>, %155, %cst_70 [1] : vector<8x8xf32> to vector<8xf32>
    %157 = vector.shape_cast %156 : vector<8xf32> to vector<8x1xf32>
    %158 = vector.broadcast %157 : vector<8x1xf32> to vector<8x8xf32>
    %159 = arith.subf %155, %158 : vector<8x8xf32>
    %160 = math.exp %159 : vector<8x8xf32>
    %cst_71 = arith.constant dense<0.000000e+00> : vector<8xf32>
    %161 = vector.multi_reduction <add>, %160, %cst_71 [1] : vector<8x8xf32> to vector<8xf32>
    %162 = vector.shape_cast %161 : vector<8xf32> to vector<8x1xf32>
    %163 = tpu.reciprocal %162 {approx = true} : vector<8x1xf32> -> vector<8x1xf32>
    %164 = vector.broadcast %163 : vector<8x1xf32> to vector<8x8xf32>
    %165 = arith.mulf %160, %164 : vector<8x8xf32>
    %166 = arith.truncf %165 : vector<8x8xf32> to vector<8x8xbf16>
    %cst_72 = arith.constant dense<0.000000e+00> : vector<8x32xf32>
    %167 = tpu.matmul %166, %153, %cst_72 {dimension_numbers = #tpu.dot_dimension_numbers<[1], [0], [0], [1], [0, 0, 1, 1], [], []>} : vector<8x8xbf16>, vector<8x32xbf16>, vector<8x32xf32> -> vector<8x32xf32>
    %168 = arith.truncf %167 : vector<8x32xf32> to vector<8x32xbf16>
    %169 = vector.extract_strided_slice %86 {offsets = [96, 0], sizes = [32, 128], strides = [1, 1]} : vector<128x128xbf16> to vector<32x128xbf16>
    %cst_73 = arith.constant dense<0.000000e+00> : vector<8x128xf32>
    %170 = tpu.matmul %168, %169, %cst_73 {dimension_numbers = #tpu.dot_dimension_numbers<[1], [0], [0], [1], [0, 0, 1, 1], [], []>} : vector<8x32xbf16>, vector<32x128xbf16>, vector<8x128xf32> -> vector<8x128xf32>
    %171 = arith.addf %150, %170 : vector<8x128xf32>
    %c0_74 = arith.constant 0 : index
    %c0_75 = arith.constant 0 : index
    %c0_76 = arith.constant 0 : index
    %172 = vector.load %arg11[%c0_74, %c0_75, %c0_76] : memref<2x1x128xf32, #tpu.memory_space<vmem>>, vector<1x1x128xf32>
    %173 = vector.shape_cast %172 : vector<1x1x128xf32> to vector<1x128xf32>
    %174 = vector.broadcast %173 : vector<1x128xf32> to vector<8x128xf32>
    %175 = arith.addf %171, %174 : vector<8x128xf32>
    %176 = arith.addf %175, %67 : vector<8x128xf32>
    %c0_77 = arith.constant 0 : index
    %c0_78 = arith.constant 0 : index
    %c0_79 = arith.constant 0 : index
    %177 = vector.load %arg12[%c0_77, %c0_78, %c0_79] : memref<2x1x128xf32, #tpu.memory_space<vmem>>, vector<1x1x128xf32>
    %178 = vector.shape_cast %177 : vector<1x1x128xf32> to vector<1x128xf32>
    %c0_80 = arith.constant 0 : index
    %c0_81 = arith.constant 0 : index
    %c0_82 = arith.constant 0 : index
    %179 = vector.load %arg13[%c0_80, %c0_81, %c0_82] : memref<2x1x128xf32, #tpu.memory_space<vmem>>, vector<1x1x128xf32>
    %180 = vector.shape_cast %179 : vector<1x1x128xf32> to vector<1x128xf32>
    %cst_83 = arith.constant dense<0.000000e+00> : vector<8xf32>
    %181 = vector.multi_reduction <add>, %176, %cst_83 [1] : vector<8x128xf32> to vector<8xf32>
    %182 = vector.shape_cast %181 : vector<8xf32> to vector<8x1xf32>
    %cst_84 = arith.constant 1.280000e+02 : f32
    %183 = vector.broadcast %cst_84 : f32 to vector<8x1xf32>
    %184 = arith.divf %182, %183 : vector<8x1xf32>
    %185 = vector.broadcast %184 : vector<8x1xf32> to vector<8x128xf32>
    %186 = arith.subf %176, %185 : vector<8x128xf32>
    %187 = arith.mulf %186, %186 : vector<8x128xf32>
    %cst_85 = arith.constant dense<0.000000e+00> : vector<8xf32>
    %188 = vector.multi_reduction <add>, %187, %cst_85 [1] : vector<8x128xf32> to vector<8xf32>
    %189 = vector.shape_cast %188 : vector<8xf32> to vector<8x1xf32>
    %cst_86 = arith.constant 1.280000e+02 : f32
    %190 = vector.broadcast %cst_86 : f32 to vector<8x1xf32>
    %191 = arith.divf %189, %190 : vector<8x1xf32>
    %cst_87 = arith.constant 9.99999996E-13 : f32
    %192 = vector.broadcast %cst_87 : f32 to vector<8x1xf32>
    %193 = arith.addf %191, %192 : vector<8x1xf32>
    %194 = math.rsqrt %193 : vector<8x1xf32>
    %195 = vector.broadcast %194 : vector<8x1xf32> to vector<8x128xf32>
    %196 = arith.mulf %186, %195 : vector<8x128xf32>
    %197 = vector.broadcast %178 : vector<1x128xf32> to vector<8x128xf32>
    %198 = arith.mulf %196, %197 : vector<8x128xf32>
    %199 = vector.broadcast %180 : vector<1x128xf32> to vector<8x128xf32>
    %200 = arith.addf %198, %199 : vector<8x128xf32>
    %201 = arith.truncf %200 : vector<8x128xf32> to vector<8x128xbf16>
    %c0_88 = arith.constant 0 : index
    %c0_89 = arith.constant 0 : index
    %c0_90 = arith.constant 0 : index
    %202 = vector.load %arg14[%c0_88, %c0_89, %c0_90] : memref<2x128x512xbf16, #tpu.memory_space<vmem>>, vector<1x128x512xbf16>
    %203 = vector.shape_cast %202 : vector<1x128x512xbf16> to vector<128x512xbf16>
    %cst_91 = arith.constant dense<0.000000e+00> : vector<8x512xf32>
    %204 = tpu.matmul %201, %203, %cst_91 {dimension_numbers = #tpu.dot_dimension_numbers<[1], [0], [0], [1], [0, 0, 1, 1], [], []>} : vector<8x128xbf16>, vector<128x512xbf16>, vector<8x512xf32> -> vector<8x512xf32>
    %c0_92 = arith.constant 0 : index
    %c0_93 = arith.constant 0 : index
    %c0_94 = arith.constant 0 : index
    %205 = vector.load %arg15[%c0_92, %c0_93, %c0_94] : memref<2x1x512xf32, #tpu.memory_space<vmem>>, vector<1x1x512xf32>
    %206 = vector.shape_cast %205 : vector<1x1x512xf32> to vector<1x512xf32>
    %207 = vector.broadcast %206 : vector<1x512xf32> to vector<8x512xf32>
    %208 = arith.addf %204, %207 : vector<8x512xf32>
    %cst_95 = arith.constant 5.000000e-01 : f32
    %209 = vector.broadcast %cst_95 : f32 to vector<8x512xf32>
    %210 = arith.mulf %209, %208 : vector<8x512xf32>
    %cst_96 = arith.constant 4.471500e-02 : f32
    %211 = vector.broadcast %cst_96 : f32 to vector<8x512xf32>
    %212 = arith.mulf %211, %208 : vector<8x512xf32>
    %213 = arith.mulf %212, %208 : vector<8x512xf32>
    %214 = arith.mulf %213, %208 : vector<8x512xf32>
    %215 = arith.addf %208, %214 : vector<8x512xf32>
    %cst_97 = arith.constant 0.797884583 : f32
    %216 = vector.broadcast %cst_97 : f32 to vector<8x512xf32>
    %217 = arith.mulf %216, %215 : vector<8x512xf32>
    %218 = math.tanh %217 : vector<8x512xf32>
    %cst_98 = arith.constant 1.000000e+00 : f32
    %219 = vector.broadcast %cst_98 : f32 to vector<8x512xf32>
    %220 = arith.addf %219, %218 : vector<8x512xf32>
    %221 = arith.mulf %210, %220 : vector<8x512xf32>
    %222 = arith.truncf %221 : vector<8x512xf32> to vector<8x512xbf16>
    %c0_99 = arith.constant 0 : index
    %c0_100 = arith.constant 0 : index
    %c0_101 = arith.constant 0 : index
    %223 = vector.load %arg16[%c0_99, %c0_100, %c0_101] : memref<2x512x128xbf16, #tpu.memory_space<vmem>>, vector<1x512x128xbf16>
    %224 = vector.shape_cast %223 : vector<1x512x128xbf16> to vector<512x128xbf16>
    %cst_102 = arith.constant dense<0.000000e+00> : vector<8x128xf32>
    %225 = tpu.matmul %222, %224, %cst_102 {dimension_numbers = #tpu.dot_dimension_numbers<[1], [0], [0], [1], [0, 0, 1, 1], [], []>} : vector<8x512xbf16>, vector<512x128xbf16>, vector<8x128xf32> -> vector<8x128xf32>
    %c0_103 = arith.constant 0 : index
    %c0_104 = arith.constant 0 : index
    %c0_105 = arith.constant 0 : index
    %226 = vector.load %arg17[%c0_103, %c0_104, %c0_105] : memref<2x1x128xf32, #tpu.memory_space<vmem>>, vector<1x1x128xf32>
    %227 = vector.shape_cast %226 : vector<1x1x128xf32> to vector<1x128xf32>
    %228 = vector.broadcast %227 : vector<1x128xf32> to vector<8x128xf32>
    %229 = arith.addf %225, %228 : vector<8x128xf32>
    %230 = arith.addf %229, %200 : vector<8x128xf32>
    %c0_106 = arith.constant 0 : index
    %c0_107 = arith.constant 0 : index
    %c0_108 = arith.constant 0 : index
    %231 = vector.load %arg18[%c0_106, %c0_107, %c0_108] : memref<2x1x128xf32, #tpu.memory_space<vmem>>, vector<1x1x128xf32>
    %232 = vector.shape_cast %231 : vector<1x1x128xf32> to vector<1x128xf32>
    %c0_109 = arith.constant 0 : index
    %c0_110 = arith.constant 0 : index
    %c0_111 = arith.constant 0 : index
    %233 = vector.load %arg19[%c0_109, %c0_110, %c0_111] : memref<2x1x128xf32, #tpu.memory_space<vmem>>, vector<1x1x128xf32>
    %234 = vector.shape_cast %233 : vector<1x1x128xf32> to vector<1x128xf32>
    %cst_112 = arith.constant dense<0.000000e+00> : vector<8xf32>
    %235 = vector.multi_reduction <add>, %230, %cst_112 [1] : vector<8x128xf32> to vector<8xf32>
    %236 = vector.shape_cast %235 : vector<8xf32> to vector<8x1xf32>
    %cst_113 = arith.constant 1.280000e+02 : f32
    %237 = vector.broadcast %cst_113 : f32 to vector<8x1xf32>
    %238 = arith.divf %236, %237 : vector<8x1xf32>
    %239 = vector.broadcast %238 : vector<8x1xf32> to vector<8x128xf32>
    %240 = arith.subf %230, %239 : vector<8x128xf32>
    %241 = arith.mulf %240, %240 : vector<8x128xf32>
    %cst_114 = arith.constant dense<0.000000e+00> : vector<8xf32>
    %242 = vector.multi_reduction <add>, %241, %cst_114 [1] : vector<8x128xf32> to vector<8xf32>
    %243 = vector.shape_cast %242 : vector<8xf32> to vector<8x1xf32>
    %cst_115 = arith.constant 1.280000e+02 : f32
    %244 = vector.broadcast %cst_115 : f32 to vector<8x1xf32>
    %245 = arith.divf %243, %244 : vector<8x1xf32>
    %cst_116 = arith.constant 9.99999996E-13 : f32
    %246 = vector.broadcast %cst_116 : f32 to vector<8x1xf32>
    %247 = arith.addf %245, %246 : vector<8x1xf32>
    %248 = math.rsqrt %247 : vector<8x1xf32>
    %249 = vector.broadcast %248 : vector<8x1xf32> to vector<8x128xf32>
    %250 = arith.mulf %240, %249 : vector<8x128xf32>
    %251 = vector.broadcast %232 : vector<1x128xf32> to vector<8x128xf32>
    %252 = arith.mulf %250, %251 : vector<8x128xf32>
    %253 = vector.broadcast %234 : vector<1x128xf32> to vector<8x128xf32>
    %254 = arith.addf %252, %253 : vector<8x128xf32>
    %255 = arith.truncf %254 : vector<8x128xf32> to vector<8x128xbf16>
    %c1_117 = arith.constant 1 : index
    %c0_118 = arith.constant 0 : index
    %c0_119 = arith.constant 0 : index
    %256 = vector.load %arg8[%c1_117, %c0_118, %c0_119] : memref<2x128x384xbf16, #tpu.memory_space<vmem>>, vector<1x128x384xbf16>
    %257 = vector.shape_cast %256 : vector<1x128x384xbf16> to vector<128x384xbf16>
    %cst_120 = arith.constant dense<0.000000e+00> : vector<8x384xf32>
    %258 = tpu.matmul %255, %257, %cst_120 {dimension_numbers = #tpu.dot_dimension_numbers<[1], [0], [0], [1], [0, 0, 1, 1], [], []>} : vector<8x128xbf16>, vector<128x384xbf16>, vector<8x384xf32> -> vector<8x384xf32>
    %c1_121 = arith.constant 1 : index
    %c0_122 = arith.constant 0 : index
    %c0_123 = arith.constant 0 : index
    %259 = vector.load %arg9[%c1_121, %c0_122, %c0_123] : memref<2x1x384xf32, #tpu.memory_space<vmem>>, vector<1x1x384xf32>
    %260 = vector.shape_cast %259 : vector<1x1x384xf32> to vector<1x384xf32>
    %261 = vector.broadcast %260 : vector<1x384xf32> to vector<8x384xf32>
    %262 = arith.addf %258, %261 : vector<8x384xf32>
    %263 = arith.truncf %262 : vector<8x384xf32> to vector<8x384xbf16>
    %c1_124 = arith.constant 1 : index
    %c0_125 = arith.constant 0 : index
    %c0_126 = arith.constant 0 : index
    %264 = vector.load %arg10[%c1_124, %c0_125, %c0_126] : memref<2x128x128xbf16, #tpu.memory_space<vmem>>, vector<1x128x128xbf16>
    %265 = vector.shape_cast %264 : vector<1x128x128xbf16> to vector<128x128xbf16>
    %cst_127 = arith.constant 0.000000e+00 : f32
    %266 = vector.broadcast %cst_127 : f32 to vector<8x128xf32>
    %267 = vector.extract_strided_slice %263 {offsets = [0, 0], sizes = [8, 32], strides = [1, 1]} : vector<8x384xbf16> to vector<8x32xbf16>
    %268 = vector.extract_strided_slice %263 {offsets = [0, 128], sizes = [8, 32], strides = [1, 1]} : vector<8x384xbf16> to vector<8x32xbf16>
    %269 = vector.extract_strided_slice %263 {offsets = [0, 256], sizes = [8, 32], strides = [1, 1]} : vector<8x384xbf16> to vector<8x32xbf16>
    %cst_128 = arith.constant dense<0.000000e+00> : vector<8x8xf32>
    %270 = tpu.matmul %267, %268, %cst_128 {dimension_numbers = #tpu.dot_dimension_numbers<[1], [1], [0], [0], [0, 0, 1, 0], [], []>} : vector<8x32xbf16>, vector<8x32xbf16>, vector<8x8xf32> -> vector<8x8xf32>
    %271 = arith.addf %270, %75 : vector<8x8xf32>
    %cst_129 = arith.constant dense<0xFF800000> : vector<8xf32>
    %272 = vector.multi_reduction <maximumf>, %271, %cst_129 [1] : vector<8x8xf32> to vector<8xf32>
    %273 = vector.shape_cast %272 : vector<8xf32> to vector<8x1xf32>
    %274 = vector.broadcast %273 : vector<8x1xf32> to vector<8x8xf32>
    %275 = arith.subf %271, %274 : vector<8x8xf32>
    %276 = math.exp %275 : vector<8x8xf32>
    %cst_130 = arith.constant dense<0.000000e+00> : vector<8xf32>
    %277 = vector.multi_reduction <add>, %276, %cst_130 [1] : vector<8x8xf32> to vector<8xf32>
    %278 = vector.shape_cast %277 : vector<8xf32> to vector<8x1xf32>
    %279 = tpu.reciprocal %278 {approx = true} : vector<8x1xf32> -> vector<8x1xf32>
    %280 = vector.broadcast %279 : vector<8x1xf32> to vector<8x8xf32>
    %281 = arith.mulf %276, %280 : vector<8x8xf32>
    %282 = arith.truncf %281 : vector<8x8xf32> to vector<8x8xbf16>
    %cst_131 = arith.constant dense<0.000000e+00> : vector<8x32xf32>
    %283 = tpu.matmul %282, %269, %cst_131 {dimension_numbers = #tpu.dot_dimension_numbers<[1], [0], [0], [1], [0, 0, 1, 1], [], []>} : vector<8x8xbf16>, vector<8x32xbf16>, vector<8x32xf32> -> vector<8x32xf32>
    %284 = arith.truncf %283 : vector<8x32xf32> to vector<8x32xbf16>
    %285 = vector.extract_strided_slice %265 {offsets = [0, 0], sizes = [32, 128], strides = [1, 1]} : vector<128x128xbf16> to vector<32x128xbf16>
    %cst_132 = arith.constant dense<0.000000e+00> : vector<8x128xf32>
    %286 = tpu.matmul %284, %285, %cst_132 {dimension_numbers = #tpu.dot_dimension_numbers<[1], [0], [0], [1], [0, 0, 1, 1], [], []>} : vector<8x32xbf16>, vector<32x128xbf16>, vector<8x128xf32> -> vector<8x128xf32>
    %287 = arith.addf %266, %286 : vector<8x128xf32>
    %288 = vector.extract_strided_slice %263 {offsets = [0, 32], sizes = [8, 32], strides = [1, 1]} : vector<8x384xbf16> to vector<8x32xbf16>
    %289 = vector.extract_strided_slice %263 {offsets = [0, 160], sizes = [8, 32], strides = [1, 1]} : vector<8x384xbf16> to vector<8x32xbf16>
    %290 = vector.extract_strided_slice %263 {offsets = [0, 288], sizes = [8, 32], strides = [1, 1]} : vector<8x384xbf16> to vector<8x32xbf16>
    %cst_133 = arith.constant dense<0.000000e+00> : vector<8x8xf32>
    %291 = tpu.matmul %288, %289, %cst_133 {dimension_numbers = #tpu.dot_dimension_numbers<[1], [1], [0], [0], [0, 0, 1, 0], [], []>} : vector<8x32xbf16>, vector<8x32xbf16>, vector<8x8xf32> -> vector<8x8xf32>
    %292 = arith.addf %291, %75 : vector<8x8xf32>
    %cst_134 = arith.constant dense<0xFF800000> : vector<8xf32>
    %293 = vector.multi_reduction <maximumf>, %292, %cst_134 [1] : vector<8x8xf32> to vector<8xf32>
    %294 = vector.shape_cast %293 : vector<8xf32> to vector<8x1xf32>
    %295 = vector.broadcast %294 : vector<8x1xf32> to vector<8x8xf32>
    %296 = arith.subf %292, %295 : vector<8x8xf32>
    %297 = math.exp %296 : vector<8x8xf32>
    %cst_135 = arith.constant dense<0.000000e+00> : vector<8xf32>
    %298 = vector.multi_reduction <add>, %297, %cst_135 [1] : vector<8x8xf32> to vector<8xf32>
    %299 = vector.shape_cast %298 : vector<8xf32> to vector<8x1xf32>
    %300 = tpu.reciprocal %299 {approx = true} : vector<8x1xf32> -> vector<8x1xf32>
    %301 = vector.broadcast %300 : vector<8x1xf32> to vector<8x8xf32>
    %302 = arith.mulf %297, %301 : vector<8x8xf32>
    %303 = arith.truncf %302 : vector<8x8xf32> to vector<8x8xbf16>
    %cst_136 = arith.constant dense<0.000000e+00> : vector<8x32xf32>
    %304 = tpu.matmul %303, %290, %cst_136 {dimension_numbers = #tpu.dot_dimension_numbers<[1], [0], [0], [1], [0, 0, 1, 1], [], []>} : vector<8x8xbf16>, vector<8x32xbf16>, vector<8x32xf32> -> vector<8x32xf32>
    %305 = arith.truncf %304 : vector<8x32xf32> to vector<8x32xbf16>
    %306 = vector.extract_strided_slice %265 {offsets = [32, 0], sizes = [32, 128], strides = [1, 1]} : vector<128x128xbf16> to vector<32x128xbf16>
    %cst_137 = arith.constant dense<0.000000e+00> : vector<8x128xf32>
    %307 = tpu.matmul %305, %306, %cst_137 {dimension_numbers = #tpu.dot_dimension_numbers<[1], [0], [0], [1], [0, 0, 1, 1], [], []>} : vector<8x32xbf16>, vector<32x128xbf16>, vector<8x128xf32> -> vector<8x128xf32>
    %308 = arith.addf %287, %307 : vector<8x128xf32>
    %309 = vector.extract_strided_slice %263 {offsets = [0, 64], sizes = [8, 32], strides = [1, 1]} : vector<8x384xbf16> to vector<8x32xbf16>
    %310 = vector.extract_strided_slice %263 {offsets = [0, 192], sizes = [8, 32], strides = [1, 1]} : vector<8x384xbf16> to vector<8x32xbf16>
    %311 = vector.extract_strided_slice %263 {offsets = [0, 320], sizes = [8, 32], strides = [1, 1]} : vector<8x384xbf16> to vector<8x32xbf16>
    %cst_138 = arith.constant dense<0.000000e+00> : vector<8x8xf32>
    %312 = tpu.matmul %309, %310, %cst_138 {dimension_numbers = #tpu.dot_dimension_numbers<[1], [1], [0], [0], [0, 0, 1, 0], [], []>} : vector<8x32xbf16>, vector<8x32xbf16>, vector<8x8xf32> -> vector<8x8xf32>
    %313 = arith.addf %312, %75 : vector<8x8xf32>
    %cst_139 = arith.constant dense<0xFF800000> : vector<8xf32>
    %314 = vector.multi_reduction <maximumf>, %313, %cst_139 [1] : vector<8x8xf32> to vector<8xf32>
    %315 = vector.shape_cast %314 : vector<8xf32> to vector<8x1xf32>
    %316 = vector.broadcast %315 : vector<8x1xf32> to vector<8x8xf32>
    %317 = arith.subf %313, %316 : vector<8x8xf32>
    %318 = math.exp %317 : vector<8x8xf32>
    %cst_140 = arith.constant dense<0.000000e+00> : vector<8xf32>
    %319 = vector.multi_reduction <add>, %318, %cst_140 [1] : vector<8x8xf32> to vector<8xf32>
    %320 = vector.shape_cast %319 : vector<8xf32> to vector<8x1xf32>
    %321 = tpu.reciprocal %320 {approx = true} : vector<8x1xf32> -> vector<8x1xf32>
    %322 = vector.broadcast %321 : vector<8x1xf32> to vector<8x8xf32>
    %323 = arith.mulf %318, %322 : vector<8x8xf32>
    %324 = arith.truncf %323 : vector<8x8xf32> to vector<8x8xbf16>
    %cst_141 = arith.constant dense<0.000000e+00> : vector<8x32xf32>
    %325 = tpu.matmul %324, %311, %cst_141 {dimension_numbers = #tpu.dot_dimension_numbers<[1], [0], [0], [1], [0, 0, 1, 1], [], []>} : vector<8x8xbf16>, vector<8x32xbf16>, vector<8x32xf32> -> vector<8x32xf32>
    %326 = arith.truncf %325 : vector<8x32xf32> to vector<8x32xbf16>
    %327 = vector.extract_strided_slice %265 {offsets = [64, 0], sizes = [32, 128], strides = [1, 1]} : vector<128x128xbf16> to vector<32x128xbf16>
    %cst_142 = arith.constant dense<0.000000e+00> : vector<8x128xf32>
    %328 = tpu.matmul %326, %327, %cst_142 {dimension_numbers = #tpu.dot_dimension_numbers<[1], [0], [0], [1], [0, 0, 1, 1], [], []>} : vector<8x32xbf16>, vector<32x128xbf16>, vector<8x128xf32> -> vector<8x128xf32>
    %329 = arith.addf %308, %328 : vector<8x128xf32>
    %330 = vector.extract_strided_slice %263 {offsets = [0, 96], sizes = [8, 32], strides = [1, 1]} : vector<8x384xbf16> to vector<8x32xbf16>
    %331 = vector.extract_strided_slice %263 {offsets = [0, 224], sizes = [8, 32], strides = [1, 1]} : vector<8x384xbf16> to vector<8x32xbf16>
    %332 = vector.extract_strided_slice %263 {offsets = [0, 352], sizes = [8, 32], strides = [1, 1]} : vector<8x384xbf16> to vector<8x32xbf16>
    %cst_143 = arith.constant dense<0.000000e+00> : vector<8x8xf32>
    %333 = tpu.matmul %330, %331, %cst_143 {dimension_numbers = #tpu.dot_dimension_numbers<[1], [1], [0], [0], [0, 0, 1, 0], [], []>} : vector<8x32xbf16>, vector<8x32xbf16>, vector<8x8xf32> -> vector<8x8xf32>
    %334 = arith.addf %333, %75 : vector<8x8xf32>
    %cst_144 = arith.constant dense<0xFF800000> : vector<8xf32>
    %335 = vector.multi_reduction <maximumf>, %334, %cst_144 [1] : vector<8x8xf32> to vector<8xf32>
    %336 = vector.shape_cast %335 : vector<8xf32> to vector<8x1xf32>
    %337 = vector.broadcast %336 : vector<8x1xf32> to vector<8x8xf32>
    %338 = arith.subf %334, %337 : vector<8x8xf32>
    %339 = math.exp %338 : vector<8x8xf32>
    %cst_145 = arith.constant dense<0.000000e+00> : vector<8xf32>
    %340 = vector.multi_reduction <add>, %339, %cst_145 [1] : vector<8x8xf32> to vector<8xf32>
    %341 = vector.shape_cast %340 : vector<8xf32> to vector<8x1xf32>
    %342 = tpu.reciprocal %341 {approx = true} : vector<8x1xf32> -> vector<8x1xf32>
    %343 = vector.broadcast %342 : vector<8x1xf32> to vector<8x8xf32>
    %344 = arith.mulf %339, %343 : vector<8x8xf32>
    %345 = arith.truncf %344 : vector<8x8xf32> to vector<8x8xbf16>
    %cst_146 = arith.constant dense<0.000000e+00> : vector<8x32xf32>
    %346 = tpu.matmul %345, %332, %cst_146 {dimension_numbers = #tpu.dot_dimension_numbers<[1], [0], [0], [1], [0, 0, 1, 1], [], []>} : vector<8x8xbf16>, vector<8x32xbf16>, vector<8x32xf32> -> vector<8x32xf32>
    %347 = arith.truncf %346 : vector<8x32xf32> to vector<8x32xbf16>
    %348 = vector.extract_strided_slice %265 {offsets = [96, 0], sizes = [32, 128], strides = [1, 1]} : vector<128x128xbf16> to vector<32x128xbf16>
    %cst_147 = arith.constant dense<0.000000e+00> : vector<8x128xf32>
    %349 = tpu.matmul %347, %348, %cst_147 {dimension_numbers = #tpu.dot_dimension_numbers<[1], [0], [0], [1], [0, 0, 1, 1], [], []>} : vector<8x32xbf16>, vector<32x128xbf16>, vector<8x128xf32> -> vector<8x128xf32>
    %350 = arith.addf %329, %349 : vector<8x128xf32>
    %c1_148 = arith.constant 1 : index
    %c0_149 = arith.constant 0 : index
    %c0_150 = arith.constant 0 : index
    %351 = vector.load %arg11[%c1_148, %c0_149, %c0_150] : memref<2x1x128xf32, #tpu.memory_space<vmem>>, vector<1x1x128xf32>
    %352 = vector.shape_cast %351 : vector<1x1x128xf32> to vector<1x128xf32>
    %353 = vector.broadcast %352 : vector<1x128xf32> to vector<8x128xf32>
    %354 = arith.addf %350, %353 : vector<8x128xf32>
    %355 = arith.addf %354, %254 : vector<8x128xf32>
    %c1_151 = arith.constant 1 : index
    %c0_152 = arith.constant 0 : index
    %c0_153 = arith.constant 0 : index
    %356 = vector.load %arg12[%c1_151, %c0_152, %c0_153] : memref<2x1x128xf32, #tpu.memory_space<vmem>>, vector<1x1x128xf32>
    %357 = vector.shape_cast %356 : vector<1x1x128xf32> to vector<1x128xf32>
    %c1_154 = arith.constant 1 : index
    %c0_155 = arith.constant 0 : index
    %c0_156 = arith.constant 0 : index
    %358 = vector.load %arg13[%c1_154, %c0_155, %c0_156] : memref<2x1x128xf32, #tpu.memory_space<vmem>>, vector<1x1x128xf32>
    %359 = vector.shape_cast %358 : vector<1x1x128xf32> to vector<1x128xf32>
    %cst_157 = arith.constant dense<0.000000e+00> : vector<8xf32>
    %360 = vector.multi_reduction <add>, %355, %cst_157 [1] : vector<8x128xf32> to vector<8xf32>
    %361 = vector.shape_cast %360 : vector<8xf32> to vector<8x1xf32>
    %cst_158 = arith.constant 1.280000e+02 : f32
    %362 = vector.broadcast %cst_158 : f32 to vector<8x1xf32>
    %363 = arith.divf %361, %362 : vector<8x1xf32>
    %364 = vector.broadcast %363 : vector<8x1xf32> to vector<8x128xf32>
    %365 = arith.subf %355, %364 : vector<8x128xf32>
    %366 = arith.mulf %365, %365 : vector<8x128xf32>
    %cst_159 = arith.constant dense<0.000000e+00> : vector<8xf32>
    %367 = vector.multi_reduction <add>, %366, %cst_159 [1] : vector<8x128xf32> to vector<8xf32>
    %368 = vector.shape_cast %367 : vector<8xf32> to vector<8x1xf32>
    %cst_160 = arith.constant 1.280000e+02 : f32
    %369 = vector.broadcast %cst_160 : f32 to vector<8x1xf32>
    %370 = arith.divf %368, %369 : vector<8x1xf32>
    %cst_161 = arith.constant 9.99999996E-13 : f32
    %371 = vector.broadcast %cst_161 : f32 to vector<8x1xf32>
    %372 = arith.addf %370, %371 : vector<8x1xf32>
    %373 = math.rsqrt %372 : vector<8x1xf32>
    %374 = vector.broadcast %373 : vector<8x1xf32> to vector<8x128xf32>
    %375 = arith.mulf %365, %374 : vector<8x128xf32>
    %376 = vector.broadcast %357 : vector<1x128xf32> to vector<8x128xf32>
    %377 = arith.mulf %375, %376 : vector<8x128xf32>
    %378 = vector.broadcast %359 : vector<1x128xf32> to vector<8x128xf32>
    %379 = arith.addf %377, %378 : vector<8x128xf32>
    %380 = arith.truncf %379 : vector<8x128xf32> to vector<8x128xbf16>
    %c1_162 = arith.constant 1 : index
    %c0_163 = arith.constant 0 : index
    %c0_164 = arith.constant 0 : index
    %381 = vector.load %arg14[%c1_162, %c0_163, %c0_164] : memref<2x128x512xbf16, #tpu.memory_space<vmem>>, vector<1x128x512xbf16>
    %382 = vector.shape_cast %381 : vector<1x128x512xbf16> to vector<128x512xbf16>
    %cst_165 = arith.constant dense<0.000000e+00> : vector<8x512xf32>
    %383 = tpu.matmul %380, %382, %cst_165 {dimension_numbers = #tpu.dot_dimension_numbers<[1], [0], [0], [1], [0, 0, 1, 1], [], []>} : vector<8x128xbf16>, vector<128x512xbf16>, vector<8x512xf32> -> vector<8x512xf32>
    %c1_166 = arith.constant 1 : index
    %c0_167 = arith.constant 0 : index
    %c0_168 = arith.constant 0 : index
    %384 = vector.load %arg15[%c1_166, %c0_167, %c0_168] : memref<2x1x512xf32, #tpu.memory_space<vmem>>, vector<1x1x512xf32>
    %385 = vector.shape_cast %384 : vector<1x1x512xf32> to vector<1x512xf32>
    %386 = vector.broadcast %385 : vector<1x512xf32> to vector<8x512xf32>
    %387 = arith.addf %383, %386 : vector<8x512xf32>
    %cst_169 = arith.constant 5.000000e-01 : f32
    %388 = vector.broadcast %cst_169 : f32 to vector<8x512xf32>
    %389 = arith.mulf %388, %387 : vector<8x512xf32>
    %cst_170 = arith.constant 4.471500e-02 : f32
    %390 = vector.broadcast %cst_170 : f32 to vector<8x512xf32>
    %391 = arith.mulf %390, %387 : vector<8x512xf32>
    %392 = arith.mulf %391, %387 : vector<8x512xf32>
    %393 = arith.mulf %392, %387 : vector<8x512xf32>
    %394 = arith.addf %387, %393 : vector<8x512xf32>
    %cst_171 = arith.constant 0.797884583 : f32
    %395 = vector.broadcast %cst_171 : f32 to vector<8x512xf32>
    %396 = arith.mulf %395, %394 : vector<8x512xf32>
    %397 = math.tanh %396 : vector<8x512xf32>
    %cst_172 = arith.constant 1.000000e+00 : f32
    %398 = vector.broadcast %cst_172 : f32 to vector<8x512xf32>
    %399 = arith.addf %398, %397 : vector<8x512xf32>
    %400 = arith.mulf %389, %399 : vector<8x512xf32>
    %401 = arith.truncf %400 : vector<8x512xf32> to vector<8x512xbf16>
    %c1_173 = arith.constant 1 : index
    %c0_174 = arith.constant 0 : index
    %c0_175 = arith.constant 0 : index
    %402 = vector.load %arg16[%c1_173, %c0_174, %c0_175] : memref<2x512x128xbf16, #tpu.memory_space<vmem>>, vector<1x512x128xbf16>
    %403 = vector.shape_cast %402 : vector<1x512x128xbf16> to vector<512x128xbf16>
    %cst_176 = arith.constant dense<0.000000e+00> : vector<8x128xf32>
    %404 = tpu.matmul %401, %403, %cst_176 {dimension_numbers = #tpu.dot_dimension_numbers<[1], [0], [0], [1], [0, 0, 1, 1], [], []>} : vector<8x512xbf16>, vector<512x128xbf16>, vector<8x128xf32> -> vector<8x128xf32>
    %c1_177 = arith.constant 1 : index
    %c0_178 = arith.constant 0 : index
    %c0_179 = arith.constant 0 : index
    %405 = vector.load %arg17[%c1_177, %c0_178, %c0_179] : memref<2x1x128xf32, #tpu.memory_space<vmem>>, vector<1x1x128xf32>
    %406 = vector.shape_cast %405 : vector<1x1x128xf32> to vector<1x128xf32>
    %407 = vector.broadcast %406 : vector<1x128xf32> to vector<8x128xf32>
    %408 = arith.addf %404, %407 : vector<8x128xf32>
    %409 = arith.addf %408, %379 : vector<8x128xf32>
    %c1_180 = arith.constant 1 : index
    %c0_181 = arith.constant 0 : index
    %c0_182 = arith.constant 0 : index
    %410 = vector.load %arg18[%c1_180, %c0_181, %c0_182] : memref<2x1x128xf32, #tpu.memory_space<vmem>>, vector<1x1x128xf32>
    %411 = vector.shape_cast %410 : vector<1x1x128xf32> to vector<1x128xf32>
    %c1_183 = arith.constant 1 : index
    %c0_184 = arith.constant 0 : index
    %c0_185 = arith.constant 0 : index
    %412 = vector.load %arg19[%c1_183, %c0_184, %c0_185] : memref<2x1x128xf32, #tpu.memory_space<vmem>>, vector<1x1x128xf32>
    %413 = vector.shape_cast %412 : vector<1x1x128xf32> to vector<1x128xf32>
    %cst_186 = arith.constant dense<0.000000e+00> : vector<8xf32>
    %414 = vector.multi_reduction <add>, %409, %cst_186 [1] : vector<8x128xf32> to vector<8xf32>
    %415 = vector.shape_cast %414 : vector<8xf32> to vector<8x1xf32>
    %cst_187 = arith.constant 1.280000e+02 : f32
    %416 = vector.broadcast %cst_187 : f32 to vector<8x1xf32>
    %417 = arith.divf %415, %416 : vector<8x1xf32>
    %418 = vector.broadcast %417 : vector<8x1xf32> to vector<8x128xf32>
    %419 = arith.subf %409, %418 : vector<8x128xf32>
    %420 = arith.mulf %419, %419 : vector<8x128xf32>
    %cst_188 = arith.constant dense<0.000000e+00> : vector<8xf32>
    %421 = vector.multi_reduction <add>, %420, %cst_188 [1] : vector<8x128xf32> to vector<8xf32>
    %422 = vector.shape_cast %421 : vector<8xf32> to vector<8x1xf32>
    %cst_189 = arith.constant 1.280000e+02 : f32
    %423 = vector.broadcast %cst_189 : f32 to vector<8x1xf32>
    %424 = arith.divf %422, %423 : vector<8x1xf32>
    %cst_190 = arith.constant 9.99999996E-13 : f32
    %425 = vector.broadcast %cst_190 : f32 to vector<8x1xf32>
    %426 = arith.addf %424, %425 : vector<8x1xf32>
    %427 = math.rsqrt %426 : vector<8x1xf32>
    %428 = vector.broadcast %427 : vector<8x1xf32> to vector<8x128xf32>
    %429 = arith.mulf %419, %428 : vector<8x128xf32>
    %430 = vector.broadcast %411 : vector<1x128xf32> to vector<8x128xf32>
    %431 = arith.mulf %429, %430 : vector<8x128xf32>
    %432 = vector.broadcast %413 : vector<1x128xf32> to vector<8x128xf32>
    %433 = arith.addf %431, %432 : vector<8x128xf32>
    %434 = vector.extract_strided_slice %433 {offsets = [0, 0], sizes = [1, 128], strides = [1, 1]} : vector<8x128xf32> to vector<1x128xf32>
    %435 = arith.truncf %434 : vector<1x128xf32> to vector<1x128xbf16>
    %c0_191 = arith.constant 0 : index
    %c0_192 = arith.constant 0 : index
    %436 = vector.load %arg20[%c0_191, %c0_192] : memref<128x512xbf16, #tpu.memory_space<vmem>>, vector<128x512xbf16>
    %cst_193 = arith.constant dense<0.000000e+00> : vector<1x512xf32>
    %437 = tpu.matmul %435, %436, %cst_193 {dimension_numbers = #tpu.dot_dimension_numbers<[1], [0], [0], [1], [0, 0, 1, 1], [], []>} : vector<1x128xbf16>, vector<128x512xbf16>, vector<1x512xf32> -> vector<1x512xf32>
    %c0_194 = arith.constant 0 : index
    %c0_195 = arith.constant 0 : index
    %438 = vector.load %arg21[%c0_194, %c0_195] : memref<1x512xf32, #tpu.memory_space<vmem>>, vector<1x512xf32>
    %439 = arith.addf %437, %438 : vector<1x512xf32>
    %440 = vector.shape_cast %439 : vector<1x512xf32> to vector<1x1x512xf32>
    %c0_196 = arith.constant 0 : index
    %c0_197 = arith.constant 0 : index
    %c0_198 = arith.constant 0 : index
    %441 = vector.load %arg22[%c0_196, %c0_197, %c0_198] : memref<1x1x512xf32, #tpu.memory_space<vmem>>, vector<1x1x512xf32>
    tpu.vector_store %arg22[%c0_196, %c0_197, %c0_198], %440 {strides = array<i32>} : memref<1x1x512xf32, #tpu.memory_space<vmem>>, vector<1x1x512xf32>,
    return
  }
  func.func @transform_0(%arg0: i32) -> (i32, i32) {
    %c0_i32 = arith.constant 0 : i32
    %c0_i32_0 = arith.constant 0 : i32
    %c0_i32_1 = arith.constant 0 : i32
    return %c0_i32, %c0_i32_0 : i32, i32
  }
  func.func @transform_1(%arg0: i32) -> (i32, i32) {
    %c0_i32 = arith.constant 0 : i32
    %c0_i32_0 = arith.constant 0 : i32
    %c0_i32_1 = arith.constant 0 : i32
    return %c0_i32, %c0_i32_0 : i32, i32
  }
  func.func @transform_2(%arg0: i32) -> (i32, i32) {
    %c0_i32 = arith.constant 0 : i32
    %c0_i32_0 = arith.constant 0 : i32
    %c0_i32_1 = arith.constant 0 : i32
    return %c0_i32, %c0_i32_0 : i32, i32
  }
  func.func @transform_3(%arg0: i32) -> (i32, i32) {
    %c0_i32 = arith.constant 0 : i32
    %c0_i32_0 = arith.constant 0 : i32
    %c0_i32_1 = arith.constant 0 : i32
    return %c0_i32, %c0_i32_0 : i32, i32
  }
  func.func @transform_4(%arg0: i32) -> (i32, i32, i32) {
    %c0_i32 = arith.constant 0 : i32
    %c0_i32_0 = arith.constant 0 : i32
    %c0_i32_1 = arith.constant 0 : i32
    return %arg0, %c0_i32, %c0_i32_0 : i32, i32, i32
  }
  func.func @transform_5(%arg0: i32) -> (i32, i32) {
    %c0_i32 = arith.constant 0 : i32
    %c0_i32_0 = arith.constant 0 : i32
    %c0_i32_1 = arith.constant 0 : i32
    return %c0_i32, %c0_i32_0 : i32, i32
  }
  func.func @transform_6(%arg0: i32) -> (i32, i32) {
    %c0_i32 = arith.constant 0 : i32
    %c0_i32_0 = arith.constant 0 : i32
    %c0_i32_1 = arith.constant 0 : i32
    return %c0_i32, %c0_i32_0 : i32, i32
  }
  func.func @transform_7(%arg0: i32) -> (i32, i32, i32) {
    %c0_i32 = arith.constant 0 : i32
    %c0_i32_0 = arith.constant 0 : i32
    %c0_i32_1 = arith.constant 0 : i32
    %c0_i32_2 = arith.constant 0 : i32
    return %c0_i32, %c0_i32_0, %c0_i32_1 : i32, i32, i32
  }
  func.func @transform_8(%arg0: i32) -> (i32, i32, i32) {
    %c0_i32 = arith.constant 0 : i32
    %c0_i32_0 = arith.constant 0 : i32
    %c0_i32_1 = arith.constant 0 : i32
    %c0_i32_2 = arith.constant 0 : i32
    return %c0_i32, %c0_i32_0, %c0_i32_1 : i32, i32, i32
  }
  func.func @transform_9(%arg0: i32) -> (i32, i32, i32) {
    %c0_i32 = arith.constant 0 : i32
    %c0_i32_0 = arith.constant 0 : i32
    %c0_i32_1 = arith.constant 0 : i32
    %c0_i32_2 = arith.constant 0 : i32
    return %c0_i32, %c0_i32_0, %c0_i32_1 : i32, i32, i32
  }
  func.func @transform_10(%arg0: i32) -> (i32, i32, i32) {
    %c0_i32 = arith.constant 0 : i32
    %c0_i32_0 = arith.constant 0 : i32
    %c0_i32_1 = arith.constant 0 : i32
    %c0_i32_2 = arith.constant 0 : i32
    return %c0_i32, %c0_i32_0, %c0_i32_1 : i32, i32, i32
  }
  func.func @transform_11(%arg0: i32) -> (i32, i32, i32) {
    %c0_i32 = arith.constant 0 : i32
    %c0_i32_0 = arith.constant 0 : i32
    %c0_i32_1 = arith.constant 0 : i32
    %c0_i32_2 = arith.constant 0 : i32
    return %c0_i32, %c0_i32_0, %c0_i32_1 : i32, i32, i32
  }
  func.func @transform_12(%arg0: i32) -> (i32, i32, i32) {
    %c0_i32 = arith.constant 0 : i32
    %c0_i32_0 = arith.constant 0 : i32
    %c0_i32_1 = arith.constant 0 : i32
    %c0_i32_2 = arith.constant 0 : i32
    return %c0_i32, %c0_i32_0, %c0_i32_1 : i32, i32, i32
  }
  func.func @transform_13(%arg0: i32) -> (i32, i32, i32) {
    %c0_i32 = arith.constant 0 : i32
    %c0_i32_0 = arith.constant 0 : i32
    %c0_i32_1 = arith.constant 0 : i32
    %c0_i32_2 = arith.constant 0 : i32
    return %c0_i32, %c0_i32_0, %c0_i32_1 : i32, i32, i32
  }
  func.func @transform_14(%arg0: i32) -> (i32, i32, i32) {
    %c0_i32 = arith.constant 0 : i32
    %c0_i32_0 = arith.constant 0 : i32
    %c0_i32_1 = arith.constant 0 : i32
    %c0_i32_2 = arith.constant 0 : i32
    return %c0_i32, %c0_i32_0, %c0_i32_1 : i32, i32, i32
  }
  func.func @transform_15(%arg0: i32) -> (i32, i32, i32) {
    %c0_i32 = arith.constant 0 : i32
    %c0_i32_0 = arith.constant 0 : i32
    %c0_i32_1 = arith.constant 0 : i32
    %c0_i32_2 = arith.constant 0 : i32
    return %c0_i32, %c0_i32_0, %c0_i32_1 : i32, i32, i32
  }
  func.func @transform_16(%arg0: i32) -> (i32, i32, i32) {
    %c0_i32 = arith.constant 0 : i32
    %c0_i32_0 = arith.constant 0 : i32
    %c0_i32_1 = arith.constant 0 : i32
    %c0_i32_2 = arith.constant 0 : i32
    return %c0_i32, %c0_i32_0, %c0_i32_1 : i32, i32, i32
  }
  func.func @transform_17(%arg0: i32) -> (i32, i32, i32) {
    %c0_i32 = arith.constant 0 : i32
    %c0_i32_0 = arith.constant 0 : i32
    %c0_i32_1 = arith.constant 0 : i32
    %c0_i32_2 = arith.constant 0 : i32
    return %c0_i32, %c0_i32_0, %c0_i32_1 : i32, i32, i32
  }
  func.func @transform_18(%arg0: i32) -> (i32, i32, i32) {
    %c0_i32 = arith.constant 0 : i32
    %c0_i32_0 = arith.constant 0 : i32
    %c0_i32_1 = arith.constant 0 : i32
    %c0_i32_2 = arith.constant 0 : i32
    return %c0_i32, %c0_i32_0, %c0_i32_1 : i32, i32, i32
  }
  func.func @transform_19(%arg0: i32) -> (i32, i32) {
    %c0_i32 = arith.constant 0 : i32
    %c0_i32_0 = arith.constant 0 : i32
    %c0_i32_1 = arith.constant 0 : i32
    return %c0_i32, %c0_i32_0 : i32, i32
  }
  func.func @transform_20(%arg0: i32) -> (i32, i32) {
    %c0_i32 = arith.constant 0 : i32
    %c0_i32_0 = arith.constant 0 : i32
    %c0_i32_1 = arith.constant 0 : i32
    return %c0_i32, %c0_i32_0 : i32, i32
  }
  func.func @transform_21(%arg0: i32) -> (i32, i32, i32) {
    %c0_i32 = arith.constant 0 : i32
    %c0_i32_0 = arith.constant 0 : i32
    %c0_i32_1 = arith.constant 0 : i32
    return %arg0, %c0_i32, %c0_i32_0 : i32, i32, i32
  }
}

</mosaic_0001>

<llo_original>
// kernel: text_model_forward.1
$region0: #{text_model_forward.1}
  #allocation0 [shape = 'u32[]', space=smem, size = 0x4, offset = 0x4, fixed_abs, tag = 'smem constant byte address 0x4 - core index']
  #allocation1 [shape = 'u32[144,128]{1,0:T(1,128)}', space=vmem, size = 0x12000, scoped, tag = 'internal scratch']
  #allocation2 [shape = 'f32[8,128]{1,0:T(8,128)}', space=vmem, size = 0x1000, scoped, tag = 'scratch operand']
  %s0 = inlined_call_operand.vmem [shape: s32[2,8], index: 0, kind: input, shape index: {}]
  %s1 = inlined_call_operand.hbm [shape: f32[100,128], index: 1, kind: input, shape index: {}]
  %s2 = inlined_call_operand.vmem [shape: f32[16,128], index: 2, kind: input, shape index: {}]
  %s3 = inlined_call_operand.hbm [shape: f32[2,128], index: 3, kind: input, shape index: {}]
  %s4 = inlined_call_operand.vmem [shape: f32[2,1,8], index: 4, kind: input, shape index: {}]
  %s5 = inlined_call_operand.vmem [shape: f32[1,128], index: 5, kind: input, shape index: {}]
  %s6 = inlined_call_operand.hbm [shape: f32[1,128], index: 6, kind: input, shape index: {}]
  %s7 = inlined_call_operand.hbm [shape: bf16[2,128,384], index: 7, kind: input, shape index: {}]
  %s8 = inlined_call_operand.vmem [shape: f32[2,1,384], index: 8, kind: input, shape index: {}]
  %s9 = inlined_call_operand.hbm [shape: bf16[2,128,128], index: 9, kind: input, shape index: {}]
  %s10 = inlined_call_operand.hbm [shape: f32[2,1,128], index: 10, kind: input, shape index: {}]
  %s11 = inlined_call_operand.hbm [shape: f32[2,1,128], index: 11, kind: input, shape index: {}]
  %s12 = inlined_call_operand.hbm [shape: f32[2,1,128], index: 12, kind: input, shape index: {}]
  %s13 = inlined_call_operand.hbm [shape: bf16[2,128,512], index: 13, kind: input, shape index: {}]
  %s14 = inlined_call_operand.hbm [shape: f32[2,1,512], index: 14, kind: input, shape index: {}]
  %s15 = inlined_call_operand.hbm [shape: bf16[2,512,128], index: 15, kind: input, shape index: {}]
  %s16 = inlined_call_operand.hbm [shape: f32[2,1,128], index: 16, kind: input, shape index: {}]
  %s17 = inlined_call_operand.hbm [shape: f32[2,1,128], index: 17, kind: input, shape index: {}]
  %s18 = inlined_call_operand.hbm [shape: f32[2,1,128], index: 18, kind: input, shape index: {}]
  %s19 = inlined_call_operand.hbm [shape: bf16[128,512], index: 19, kind: input, shape index: {}]
  %s20 = inlined_call_operand.vmem [shape: f32[1,512], index: 20, kind: input, shape index: {}]
  %s21 = inlined_call_operand.vmem [shape: f32[2,1,512], index: 21, kind: output, shape index: {}]
  %s22 = sld [smem:[#allocation0]]
  $region181: #{text_model_forward.1} parent=0
    _
  %s24 = ssub.s32 1, %s22
  %s25 = scalar_select 0, %s24, %s22
  $region1: #{text_model_forward.1} parent=0
    #allocation3 [shape = 'u8[1024]{0}', space=smem, size = 0x400, scoped, tag = 'input window, operand 0, single buffered']
    #allocation4 [shape = 's32[2]{0}', space=sflag, size = 0x8, scoped, tag = 'scoped memory for text_model_forward.1']
    #allocation5 [shape = 's32[2]{0}', space=sflag, size = 0x8, scoped, tag = 'scoped memory for text_model_forward.1']
    #allocation6 [shape = 'u8[53248]{0}', space=vmem, size = 0xd000, scoped, tag = 'input window, operand 1, single buffered']
    #allocation7 [shape = 'u8[1024]{0}', space=vmem, size = 0x400, scoped, tag = 'input window, operand 3, single buffered']
    #allocation8 [shape = 's32[1]{0}', space=sflag, size = 0x4, scoped, tag = 'scoped memory for text_model_forward.1']
    #allocation9 [shape = 'u8[512]{0}', space=vmem, size = 0x400, scoped, tag = 'input window, operand 6, single buffered']
    #allocation10 [shape = 'u8[196608]{0}', space=vmem, size = 0x30000, scoped, tag = 'input window, operand 7, single buffered']
    #allocation11 [shape = 's32[1]{0}', space=sflag, size = 0x4, scoped, tag = 'scoped memory for text_model_forward.1']
    #allocation12 [shape = 'u8[65536]{0}', space=vmem, size = 0x10000, scoped, tag = 'input window, operand 9, single buffered']
    #allocation13 [shape = 'u8[1024]{0}', space=vmem, size = 0x400, scoped, tag = 'input window, operand 10, single buffered']
    #allocation14 [shape = 's32[1]{0}', space=sflag, size = 0x4, scoped, tag = 'scoped memory for text_model_forward.1']
    #allocation15 [shape = 'u8[1024]{0}', space=vmem, size = 0x400, scoped, tag = 'input window, operand 11, single buffered']
    #allocation16 [shape = 'u8[1024]{0}', space=vmem, size = 0x400, scoped, tag = 'input window, operand 12, single buffered']
    #allocation17 [shape = 's32[1]{0}', space=sflag, size = 0x4, scoped, tag = 'scoped memory for text_model_forward.1']
    #allocation18 [shape = 'u8[262144]{0}', space=vmem, size = 0x40000, scoped, tag = 'input window, operand 13, single buffered']
    #allocation19 [shape = 'u8[4096]{0}', space=vmem, size = 0x1000, scoped, tag = 'input window, operand 14, single buffered']
    #allocation20 [shape = 's32[1]{0}', space=sflag, size = 0x4, scoped, tag = 'scoped memory for text_model_forward.1']
    #allocation21 [shape = 'u8[262144]{0}', space=vmem, size = 0x40000, scoped, tag = 'input window, operand 15, single buffered']
    #allocation22 [shape = 'u8[1024]{0}', space=vmem, size = 0x400, scoped, tag = 'input window, operand 16, single buffered']
    #allocation23 [shape = 's32[1]{0}', space=sflag, size = 0x4, scoped, tag = 'scoped memory for text_model_forward.1']
    #allocation24 [shape = 'u8[1024]{0}', space=vmem, size = 0x400, scoped, tag = 'input window, operand 17, single buffered']
    #allocation25 [shape = 'u8[1024]{0}', space=vmem, size = 0x400, scoped, tag = 'input window, operand 18, single buffered']
    #allocation26 [shape = 's32[1]{0}', space=sflag, size = 0x4, scoped, tag = 'scoped memory for text_model_forward.1']
    #allocation27 [shape = 'u8[131072]{0}', space=vmem, size = 0x20000, scoped, tag = 'input window, operand 19, single buffered']
    %26 = vsyncpa [#allocation5], 0
    %27 = vsyncpa [#allocation4], 0
    %28 = vsyncpa [#allocation8], 0
    %29 = vsyncpa [#allocation11], 0
    %30 = vsyncpa [#allocation14], 0
    %31 = vsyncpa [#allocation17], 0
    %32 = vsyncpa [#allocation20], 0
    %33 = vsyncpa [#allocation23], 0
    %34 = vsyncpa [#allocation26], 0
    loop: start=0, step=1, limit=4
    $region2: #{text_model_forward.1} parent=1 // loop_pre_header
      _
    $region3: #{text_model_forward.1} parent=1 // loop_header
      %s36 = sphi 0, %s40
      %p37 = scmp.ge.s32.totalorder %s36, 4
      %s44 = sphi 0, %s44
      %s46 = sphi 0, %s44
      %s47 = sphi 0, %s46
      %s61 = sphi 0, %s47
      %s65 = sphi 0, %s65
      %s67 = sphi 0, %s65
      %s68 = sphi 0, %s67
      %s82 = sphi 0, %s68
      %s86 = sphi 0, %s86
      %s88 = sphi 0, %s86
      %s89 = sphi 0, %s88
      %s103 = sphi 0, %s89
      %s107 = sphi 0, %s107
      %s109 = sphi 0, %s107
      %s110 = sphi 0, %s109
      %s124 = sphi 0, %s110
      %s130 = sphi 0, %s132
      %s133 = sphi 0, %s130
      %s134 = sphi 0, %s133
      %s150 = sphi 0, %s134
      %s154 = sphi 0, %s154
      %s156 = sphi 0, %s154
      %s157 = sphi 0, %s156
      %s171 = sphi 0, %s157
      %s175 = sphi 0, %s175
      %s177 = sphi 0, %s175
      %s178 = sphi 0, %s177
      %s192 = sphi 0, %s178
      %s196 = sphi 0, %s196
      %s198 = sphi 0, %s196
      %s199 = sphi 0, %s198
      %s213 = sphi 0, %s199
      %s217 = sphi 0, %s217
      %s219 = sphi 0, %s217
      %s220 = sphi 0, %s219
      %s234 = sphi 0, %s220
      %s238 = sphi 0, %s238
      %s240 = sphi 0, %s238
      %s241 = sphi 0, %s240
      %s255 = sphi 0, %s241
      %s259 = sphi 0, %s259
      %s261 = sphi 0, %s259
      %s262 = sphi 0, %s261
      %s276 = sphi 0, %s262
      %s280 = sphi 0, %s280
      %s282 = sphi 0, %s280
      %s283 = sphi 0, %s282
      %s297 = sphi 0, %s283
      %s301 = sphi 0, %s301
      %s303 = sphi 0, %s301
      %s304 = sphi 0, %s303
      %s318 = sphi 0, %s304
      %s322 = sphi 0, %s322
      %s324 = sphi 0, %s322
      %s325 = sphi 0, %s324
      %s339 = sphi 0, %s325
      %s343 = sphi 0, %s343
      %s345 = sphi 0, %s343
      %s346 = sphi 0, %s345
      %s360 = sphi 0, %s346
      %s364 = sphi 0, %s364
      %s366 = sphi 0, %s364
      %s367 = sphi 0, %s366
      %s381 = sphi 0, %s367
      %s385 = sphi 0, %s385
      %s387 = sphi 0, %s385
      %s388 = sphi 0, %s387
      %s402 = sphi 0, %s388
      %s406 = sphi 0, %s406
      %s408 = sphi 0, %s406
      %s409 = sphi 0, %s408
      %s423 = sphi 0, %s409
      %s427 = sphi 0, %s427
      %s429 = sphi 0, %s427
      %s430 = sphi 0, %s429
      %s444 = sphi 0, %s430
      %s448 = sphi 0, %s448
      %s450 = sphi 0, %s448
      %s451 = sphi 0, %s450
      %s465 = sphi 0, %s451
      %s469 = sphi 0, %s469
      %s471 = sphi 0, %s469
      %s472 = sphi 0, %s471
      %s486 = sphi 0, %s472
      %s492 = sphi 0, %s494
      %s495 = sphi 0, %s492
      %s496 = sphi 0, %s495
      %s512 = sphi 0, %s496
    $region4: #{text_model_forward.1} parent=1 // loop_header_branch
      %39 = sbr.rel (%p37) target = $region8
    $region5: #{text_model_forward.1} parent=1 // loop_body
      %s41 = ssub.s32 %s36, 1
      %s42 = ssub.s32 %s36, 2
      %s43 = sadd.s32 %s36, 1
      %s45 = sadd.s32 %s44, 1
      %p48 = scmp.eq.s32.totalorder %s36, 1
      %p49 = scmp.ne.s32.totalorder %s44, %s46
      %p50 = scmp.eq.s32.totalorder %s36, 0
      %p51 = por %p49, %p50
      %p52 = scmp.ne.s32.totalorder %s44, %s46
      %p53 = scmp.eq.s32.totalorder %s41, 1
      %p54 = por %p52, %p53
      %p55 = scmp.ne.s32.totalorder %s46, %s47
      %p56 = scmp.eq.s32.totalorder %s41, 0
      %p57 = por %p55, %p56
      %p58 = scmp.ne.s32.totalorder %s46, %s47
      %p59 = scmp.eq.s32.totalorder %s42, 1
      %p60 = por %p58, %p59
      %p62 = scmp.ne.s32.totalorder %s47, %s61
      %p63 = scmp.eq.s32.totalorder %s42, 0
      %p64 = por %p62, %p63
      %s66 = sadd.s32 %s65, 1
      %p69 = scmp.eq.s32.totalorder %s36, 1
      %p70 = scmp.ne.s32.totalorder %s65, %s67
      %p71 = scmp.eq.s32.totalorder %s36, 0
      %p72 = por %p70, %p71
      %p73 = scmp.ne.s32.totalorder %s65, %s67
      %p74 = scmp.eq.s32.totalorder %s41, 1
      %p75 = por %p73, %p74
      %p76 = scmp.ne.s32.totalorder %s67, %s68
      %p77 = scmp.eq.s32.totalorder %s41, 0
      %p78 = por %p76, %p77
      %p79 = scmp.ne.s32.totalorder %s67, %s68
      %p80 = scmp.eq.s32.totalorder %s42, 1
      %p81 = por %p79, %p80
      %p83 = scmp.ne.s32.totalorder %s68, %s82
      %p84 = scmp.eq.s32.totalorder %s42, 0
      %p85 = por %p83, %p84
      %s87 = sadd.s32 %s86, 1
      %p90 = scmp.eq.s32.totalorder %s36, 1
      %p91 = scmp.ne.s32.totalorder %s86, %s88
      %p92 = scmp.eq.s32.totalorder %s36, 0
      %p93 = por %p91, %p92
      %p94 = scmp.ne.s32.totalorder %s86, %s88
      %p95 = scmp.eq.s32.totalorder %s41, 1
      %p96 = por %p94, %p95
      %p97 = scmp.ne.s32.totalorder %s88, %s89
      %p98 = scmp.eq.s32.totalorder %s41, 0
      %p99 = por %p97, %p98
      %p100 = scmp.ne.s32.totalorder %s88, %s89
      %p101 = scmp.eq.s32.totalorder %s42, 1
      %p102 = por %p100, %p101
      %p104 = scmp.ne.s32.totalorder %s89, %s103
      %p105 = scmp.eq.s32.totalorder %s42, 0
      %p106 = por %p104, %p105
      %s108 = sadd.s32 %s107, 1
      %p111 = scmp.eq.s32.totalorder %s36, 1
      %p112 = scmp.ne.s32.totalorder %s107, %s109
      %p113 = scmp.eq.s32.totalorder %s36, 0
      %p114 = por %p112, %p113
      %p115 = scmp.ne.s32.totalorder %s107, %s109
      %p116 = scmp.eq.s32.totalorder %s41, 1
      %p117 = por %p115, %p116
      %p118 = scmp.ne.s32.totalorder %s109, %s110
      %p119 = scmp.eq.s32.totalorder %s41, 0
      %p120 = por %p118, %p119
      %p121 = scmp.ne.s32.totalorder %s109, %s110
      %p122 = scmp.eq.s32.totalorder %s42, 1
      %p123 = por %p121, %p122
      %p125 = scmp.ne.s32.totalorder %s110, %s124
      %p126 = scmp.eq.s32.totalorder %s42, 0
      %p127 = por %p125, %p126
      %s128 = ssub.s32 %s36, %s43
      %p129 = scmp.eq.s32.totalorder %s128, 0
      %s131 = sadd.s32 %s130, 1
      %s132 = scalar_select %p129, %s130, %s131
      %p135 = pneg %p129
      %p136 = scmp.eq.s32.totalorder %s36, 1
      %p137 = por %p135, %p136
      %p138 = scmp.ne.s32.totalorder %s130, %s133
      %p139 = scmp.eq.s32.totalorder %s36, 0
      %p140 = por %p138, %p139
      %p141 = scmp.ne.s32.totalorder %s130, %s133
      %p142 = scmp.eq.s32.totalorder %s41, 1
      %p143 = por %p141, %p142
      %p144 = scmp.ne.s32.totalorder %s133, %s134
      %p145 = scmp.eq.s32.totalorder %s41, 0
      %p146 = por %p144, %p145
      %p147 = scmp.ne.s32.totalorder %s133, %s134
      %p148 = scmp.eq.s32.totalorder %s42, 1
      %p149 = por %p147, %p148
      %p151 = scmp.ne.s32.totalorder %s134, %s150
      %p152 = scmp.eq.s32.totalorder %s42, 0
      %p153 = por %p151, %p152
      %s155 = sadd.s32 %s154, 1
      %p158 = scmp.eq.s32.totalorder %s36, 1
      %p159 = scmp.ne.s32.totalorder %s154, %s156
      %p160 = scmp.eq.s32.totalorder %s36, 0
      %p161 = por %p159, %p160
      %p162 = scmp.ne.s32.totalorder %s154, %s156
      %p163 = scmp.eq.s32.totalorder %s41, 1
      %p164 = por %p162, %p163
      %p165 = scmp.ne.s32.totalorder %s156, %s157
      %p166 = scmp.eq.s32.totalorder %s41, 0
      %p167 = por %p165, %p166
      %p168 = scmp.ne.s32.totalorder %s156, %s157
      %p169 = scmp.eq.s32.totalorder %s42, 1
      %p170 = por %p168, %p169
      %p172 = scmp.ne.s32.totalorder %s157, %s171
      %p173 = scmp.eq.s32.totalorder %s42, 0
      %p174 = por %p172, %p173
      %s176 = sadd.s32 %s175, 1
      %p179 = scmp.eq.s32.totalorder %s36, 1
      %p180 = scmp.ne.s32.totalorder %s175, %s177
      %p181 = scmp.eq.s32.totalorder %s36, 0
      %p182 = por %p180, %p181
      %p183 = scmp.ne.s32.totalorder %s175, %s177
      %p184 = scmp.eq.s32.totalorder %s41, 1
      %p185 = por %p183, %p184
      %p186 = scmp.ne.s32.totalorder %s177, %s178
      %p187 = scmp.eq.s32.totalorder %s41, 0
      %p188 = por %p186, %p187
      %p189 = scmp.ne.s32.totalorder %s177, %s178
      %p190 = scmp.eq.s32.totalorder %s42, 1
      %p191 = por %p189, %p190
      %p193 = scmp.ne.s32.totalorder %s178, %s192
      %p194 = scmp.eq.s32.totalorder %s42, 0
      %p195 = por %p193, %p194
      %s197 = sadd.s32 %s196, 1
      %p200 = scmp.eq.s32.totalorder %s36, 1
      %p201 = scmp.ne.s32.totalorder %s196, %s198
      %p202 = scmp.eq.s32.totalorder %s36, 0
      %p203 = por %p201, %p202
      %p204 = scmp.ne.s32.totalorder %s196, %s198
      %p205 = scmp.eq.s32.totalorder %s41, 1
      %p206 = por %p204, %p205
      %p207 = scmp.ne.s32.totalorder %s198, %s199
      %p208 = scmp.eq.s32.totalorder %s41, 0
      %p209 = por %p207, %p208
      %p210 = scmp.ne.s32.totalorder %s198, %s199
      %p211 = scmp.eq.s32.totalorder %s42, 1
      %p212 = por %p210, %p211
      %p214 = scmp.ne.s32.totalorder %s199, %s213
      %p215 = scmp.eq.s32.totalorder %s42, 0
      %p216 = por %p214, %p215
      %s218 = sadd.s32 %s217, 1
      %p221 = scmp.eq.s32.totalorder %s36, 1
      %p222 = scmp.ne.s32.totalorder %s217, %s219
      %p223 = scmp.eq.s32.totalorder %s36, 0
      %p224 = por %p222, %p223
      %p225 = scmp.ne.s32.totalorder %s217, %s219
      %p226 = scmp.eq.s32.totalorder %s41, 1
      %p227 = por %p225, %p226
      %p228 = scmp.ne.s32.totalorder %s219, %s220
      %p229 = scmp.eq.s32.totalorder %s41, 0
      %p230 = por %p228, %p229
      %p231 = scmp.ne.s32.totalorder %s219, %s220
      %p232 = scmp.eq.s32.totalorder %s42, 1
      %p233 = por %p231, %p232
      %p235 = scmp.ne.s32.totalorder %s220, %s234
      %p236 = scmp.eq.s32.totalorder %s42, 0
      %p237 = por %p235, %p236
      %s239 = sadd.s32 %s238, 1
      %p242 = scmp.eq.s32.totalorder %s36, 1
      %p243 = scmp.ne.s32.totalorder %s238, %s240
      %p244 = scmp.eq.s32.totalorder %s36, 0
      %p245 = por %p243, %p244
      %p246 = scmp.ne.s32.totalorder %s238, %s240
      %p247 = scmp.eq.s32.totalorder %s41, 1
      %p248 = por %p246, %p247
      %p249 = scmp.ne.s32.totalorder %s240, %s241
      %p250 = scmp.eq.s32.totalorder %s41, 0
      %p251 = por %p249, %p250
      %p252 = scmp.ne.s32.totalorder %s240, %s241
      %p253 = scmp.eq.s32.totalorder %s42, 1
      %p254 = por %p252, %p253
      %p256 = scmp.ne.s32.totalorder %s241, %s255
      %p257 = scmp.eq.s32.totalorder %s42, 0
      %p258 = por %p256, %p257
      %s260 = sadd.s32 %s259, 1
      %p263 = scmp.eq.s32.totalorder %s36, 1
      %p264 = scmp.ne.s32.totalorder %s259, %s261
      %p265 = scmp.eq.s32.totalorder %s36, 0
      %p266 = por %p264, %p265
      %p267 = scmp.ne.s32.totalorder %s259, %s261
      %p268 = scmp.eq.s32.totalorder %s41, 1
      %p269 = por %p267, %p268
      %p270 = scmp.ne.s32.totalorder %s261, %s262
      %p271 = scmp.eq.s32.totalorder %s41, 0
      %p272 = por %p270, %p271
      %p273 = scmp.ne.s32.totalorder %s261, %s262
      %p274 = scmp.eq.s32.totalorder %s42, 1
      %p275 = por %p273, %p274
      %p277 = scmp.ne.s32.totalorder %s262, %s276
      %p278 = scmp.eq.s32.totalorder %s42, 0
      %p279 = por %p277, %p278
      %s281 = sadd.s32 %s280, 1
      %p284 = scmp.eq.s32.totalorder %s36, 1
      %p285 = scmp.ne.s32.totalorder %s280, %s282
      %p286 = scmp.eq.s32.totalorder %s36, 0
      %p287 = por %p285, %p286
      %p288 = scmp.ne.s32.totalorder %s280, %s282
      %p289 = scmp.eq.s32.totalorder %s41, 1
      %p290 = por %p288, %p289
      %p291 = scmp.ne.s32.totalorder %s282, %s283
      %p292 = scmp.eq.s32.totalorder %s41, 0
      %p293 = por %p291, %p292
      %p294 = scmp.ne.s32.totalorder %s282, %s283
      %p295 = scmp.eq.s32.totalorder %s42, 1
      %p296 = por %p294, %p295
      %p298 = scmp.ne.s32.totalorder %s283, %s297
      %p299 = scmp.eq.s32.totalorder %s42, 0
      %p300 = por %p298, %p299
      %s302 = sadd.s32 %s301, 1
      %p305 = scmp.eq.s32.totalorder %s36, 1
      %p306 = scmp.ne.s32.totalorder %s301, %s303
      %p307 = scmp.eq.s32.totalorder %s36, 0
      %p308 = por %p306, %p307
      %p309 = scmp.ne.s32.totalorder %s301, %s303
      %p310 = scmp.eq.s32.totalorder %s41, 1
      %p311 = por %p309, %p310
      %p312 = scmp.ne.s32.totalorder %s303, %s304
      %p313 = scmp.eq.s32.totalorder %s41, 0
      %p314 = por %p312, %p313
      %p315 = scmp.ne.s32.totalorder %s303, %s304
      %p316 = scmp.eq.s32.totalorder %s42, 1
      %p317 = por %p315, %p316
      %p319 = scmp.ne.s32.totalorder %s304, %s318
      %p320 = scmp.eq.s32.totalorder %s42, 0
      %p321 = por %p319, %p320
      %s323 = sadd.s32 %s322, 1
      %p326 = scmp.eq.s32.totalorder %s36, 1
      %p327 = scmp.ne.s32.totalorder %s322, %s324
      %p328 = scmp.eq.s32.totalorder %s36, 0
      %p329 = por %p327, %p328
      %p330 = scmp.ne.s32.totalorder %s322, %s324
      %p331 = scmp.eq.s32.totalorder %s41, 1
      %p332 = por %p330, %p331
      %p333 = scmp.ne.s32.totalorder %s324, %s325
      %p334 = scmp.eq.s32.totalorder %s41, 0
      %p335 = por %p333, %p334
      %p336 = scmp.ne.s32.totalorder %s324, %s325
      %p337 = scmp.eq.s32.totalorder %s42, 1
      %p338 = por %p336, %p337
      %p340 = scmp.ne.s32.totalorder %s325, %s339
      %p341 = scmp.eq.s32.totalorder %s42, 0
      %p342 = por %p340, %p341
      %s344 = sadd.s32 %s343, 1
      %p347 = scmp.eq.s32.totalorder %s36, 1
      %p348 = scmp.ne.s32.totalorder %s343, %s345
      %p349 = scmp.eq.s32.totalorder %s36, 0
      %p350 = por %p348, %p349
      %p351 = scmp.ne.s32.totalorder %s343, %s345
      %p352 = scmp.eq.s32.totalorder %s41, 1
      %p353 = por %p351, %p352
      %p354 = scmp.ne.s32.totalorder %s345, %s346
      %p355 = scmp.eq.s32.totalorder %s41, 0
      %p356 = por %p354, %p355
      %p357 = scmp.ne.s32.totalorder %s345, %s346
      %p358 = scmp.eq.s32.totalorder %s42, 1
      %p359 = por %p357, %p358
      %p361 = scmp.ne.s32.totalorder %s346, %s360
      %p362 = scmp.eq.s32.totalorder %s42, 0
      %p363 = por %p361, %p362
      %s365 = sadd.s32 %s364, 1
      %p368 = scmp.eq.s32.totalorder %s36, 1
      %p369 = scmp.ne.s32.totalorder %s364, %s366
      %p370 = scmp.eq.s32.totalorder %s36, 0
      %p371 = por %p369, %p370
      %p372 = scmp.ne.s32.totalorder %s364, %s366
      %p373 = scmp.eq.s32.totalorder %s41, 1
      %p374 = por %p372, %p373
      %p375 = scmp.ne.s32.totalorder %s366, %s367
      %p376 = scmp.eq.s32.totalorder %s41, 0
      %p377 = por %p375, %p376
      %p378 = scmp.ne.s32.totalorder %s366, %s367
      %p379 = scmp.eq.s32.totalorder %s42, 1
      %p380 = por %p378, %p379
      %p382 = scmp.ne.s32.totalorder %s367, %s381
      %p383 = scmp.eq.s32.totalorder %s42, 0
      %p384 = por %p382, %p383
      %s386 = sadd.s32 %s385, 1
      %p389 = scmp.eq.s32.totalorder %s36, 1
      %p390 = scmp.ne.s32.totalorder %s385, %s387
      %p391 = scmp.eq.s32.totalorder %s36, 0
      %p392 = por %p390, %p391
      %p393 = scmp.ne.s32.totalorder %s385, %s387
      %p394 = scmp.eq.s32.totalorder %s41, 1
      %p395 = por %p393, %p394
      %p396 = scmp.ne.s32.totalorder %s387, %s388
      %p397 = scmp.eq.s32.totalorder %s41, 0
      %p398 = por %p396, %p397
      %p399 = scmp.ne.s32.totalorder %s387, %s388
      %p400 = scmp.eq.s32.totalorder %s42, 1
      %p401 = por %p399, %p400
      %p403 = scmp.ne.s32.totalorder %s388, %s402
      %p404 = scmp.eq.s32.totalorder %s42, 0
      %p405 = por %p403, %p404
      %s407 = sadd.s32 %s406, 1
      %p410 = scmp.eq.s32.totalorder %s36, 1
      %p411 = scmp.ne.s32.totalorder %s406, %s408
      %p412 = scmp.eq.s32.totalorder %s36, 0
      %p413 = por %p411, %p412
      %p414 = scmp.ne.s32.totalorder %s406, %s408
      %p415 = scmp.eq.s32.totalorder %s41, 1
      %p416 = por %p414, %p415
      %p417 = scmp.ne.s32.totalorder %s408, %s409
      %p418 = scmp.eq.s32.totalorder %s41, 0
      %p419 = por %p417, %p418
      %p420 = scmp.ne.s32.totalorder %s408, %s409
      %p421 = scmp.eq.s32.totalorder %s42, 1
      %p422 = por %p420, %p421
      %p424 = scmp.ne.s32.totalorder %s409, %s423
      %p425 = scmp.eq.s32.totalorder %s42, 0
      %p426 = por %p424, %p425
      %s428 = sadd.s32 %s427, 1
      %p431 = scmp.eq.s32.totalorder %s36, 1
      %p432 = scmp.ne.s32.totalorder %s427, %s429
      %p433 = scmp.eq.s32.totalorder %s36, 0
      %p434 = por %p432, %p433
      %p435 = scmp.ne.s32.totalorder %s427, %s429
      %p436 = scmp.eq.s32.totalorder %s41, 1
      %p437 = por %p435, %p436
      %p438 = scmp.ne.s32.totalorder %s429, %s430
      %p439 = scmp.eq.s32.totalorder %s41, 0
      %p440 = por %p438, %p439
      %p441 = scmp.ne.s32.totalorder %s429, %s430
      %p442 = scmp.eq.s32.totalorder %s42, 1
      %p443 = por %p441, %p442
      %p445 = scmp.ne.s32.totalorder %s430, %s444
      %p446 = scmp.eq.s32.totalorder %s42, 0
      %p447 = por %p445, %p446
      %s449 = sadd.s32 %s448, 1
      %p452 = scmp.eq.s32.totalorder %s36, 1
      %p453 = scmp.ne.s32.totalorder %s448, %s450
      %p454 = scmp.eq.s32.totalorder %s36, 0
      %p455 = por %p453, %p454
      %p456 = scmp.ne.s32.totalorder %s448, %s450
      %p457 = scmp.eq.s32.totalorder %s41, 1
      %p458 = por %p456, %p457
      %p459 = scmp.ne.s32.totalorder %s450, %s451
      %p460 = scmp.eq.s32.totalorder %s41, 0
      %p461 = por %p459, %p460
      %p462 = scmp.ne.s32.totalorder %s450, %s451
      %p463 = scmp.eq.s32.totalorder %s42, 1
      %p464 = por %p462, %p463
      %p466 = scmp.ne.s32.totalorder %s451, %s465
      %p467 = scmp.eq.s32.totalorder %s42, 0
      %p468 = por %p466, %p467
      %s470 = sadd.s32 %s469, 1
      %p473 = scmp.eq.s32.totalorder %s36, 1
      %p474 = scmp.ne.s32.totalorder %s469, %s471
      %p475 = scmp.eq.s32.totalorder %s36, 0
      %p476 = por %p474, %p475
      %p477 = scmp.ne.s32.totalorder %s469, %s471
      %p478 = scmp.eq.s32.totalorder %s41, 1
      %p479 = por %p477, %p478
      %p480 = scmp.ne.s32.totalorder %s471, %s472
      %p481 = scmp.eq.s32.totalorder %s41, 0
      %p482 = por %p480, %p481
      %p483 = scmp.ne.s32.totalorder %s471, %s472
      %p484 = scmp.eq.s32.totalorder %s42, 1
      %p485 = por %p483, %p484
      %p487 = scmp.ne.s32.totalorder %s472, %s486
      %p488 = scmp.eq.s32.totalorder %s42, 0
      %p489 = por %p487, %p488
      %s490 = ssub.s32 %s36, %s43
      %p491 = scmp.eq.s32.totalorder %s490, 0
      %s493 = sadd.s32 %s492, 1
      %s494 = scalar_select %p491, %s492, %s493
      %p497 = pneg %p491
      %p498 = scmp.eq.s32.totalorder %s36, 1
      %p499 = por %p497, %p498
      %p500 = scmp.ne.s32.totalorder %s492, %s495
      %p501 = scmp.eq.s32.totalorder %s36, 0
      %p502 = por %p500, %p501
      %p503 = scmp.ne.s32.totalorder %s492, %s495
      %p504 = scmp.eq.s32.totalorder %s41, 1
      %p505 = por %p503, %p504
      %p506 = scmp.ne.s32.totalorder %s495, %s496
      %p507 = scmp.eq.s32.totalorder %s41, 0
      %p508 = por %p506, %p507
      %p509 = scmp.ne.s32.totalorder %s495, %s496
      %p510 = scmp.eq.s32.totalorder %s42, 1
      %p511 = por %p509, %p510
      %p513 = scmp.ne.s32.totalorder %s496, %s512
      %p514 = scmp.eq.s32.totalorder %s42, 0
      %p515 = por %p513, %p514
      %p516 = scmp.le.s32.totalorder 1, %s36
      %p517 = scmp.lt.s32.totalorder %s36, 3
      %p518 = pnand %p516, %p517
      %p519 = pneg %p518
      // Predicated region
      $region9: #{text_model_forward.1} parent=5 // pred_check
        _
      $region10: #{text_model_forward.1} parent=5 // pred_check_branch
        %521 = sbr.rel (%p518) target = $region12
      $region11: #{text_model_forward.1} parent=5 // pred_region
        %s522 = ssub.s32 %s36, 1
        // Predicated region
        $region13: #{text_model_forward.1} parent=11 // pred_check
          %p523 = pneg %p57
        $region14: #{text_model_forward.1} parent=11 // pred_check_branch
          %525 = sbr.rel (%p523) target = $region16
        $region15: #{text_model_forward.1} parent=11 // pred_region
          %s527 = ssub.s32 32, 32
          %528 = vsyncadd [#allocation5], %s527
          %s530 = sshll.u32 %s0, 4
          %s531 = int_to_ptr.vmem [resolvable:$true] %s530
          %533 = dma.vmem_to_smem %s531, 32, [#allocation3], [#allocation5]
        $region16: #{text_model_forward.1} parent=11 // pred_fallthru
          _
        // Predicated region
        $region17: #{text_model_forward.1} parent=11 // pred_check
          %p534 = pneg %p78
        $region18: #{text_model_forward.1} parent=11 // pred_check_branch
          %536 = sbr.rel (%p534) target = $region20
        $region19: #{text_model_forward.1} parent=11 // pred_region
          %s538 = ssub.s32 1664, 1664
          %539 = vsyncadd [#allocation4], %s538
          %s540 = sshll.u32 [#allocation6], 4
          %s541 = int_to_ptr.vmem [resolvable:$true] %s540
          %546 = dma.hbm_to_vmem [thread:$0]  %s1, 1664, %s541, [#allocation4], 128, 128, 8
        $region20: #{text_model_forward.1} parent=11 // pred_fallthru
          _
        // Predicated region
        $region21: #{text_model_forward.1} parent=11 // pred_check
          %p547 = pneg %p99
        $region22: #{text_model_forward.1} parent=11 // pred_check_branch
          %549 = sbr.rel (%p547) target = $region24
        $region23: #{text_model_forward.1} parent=11 // pred_region
          _
        $region24: #{text_model_forward.1} parent=11 // pred_fallthru
          _
        // Predicated region
        $region25: #{text_model_forward.1} parent=11 // pred_check
          %p550 = pneg %p120
        $region26: #{text_model_forward.1} parent=11 // pred_check_branch
          %552 = sbr.rel (%p550) target = $region28
        $region27: #{text_model_forward.1} parent=11 // pred_region
          %s554 = ssub.s32 32, 32
          %555 = vsyncadd [#allocation8], %s554
          %s557 = sshll.u32 [#allocation7], 4
          %s558 = int_to_ptr.vmem [resolvable:$true] %s557
          %560 = dma.hbm_to_vmem [thread:$0]  %s3, 32, %s558, [#allocation8]
        $region28: #{text_model_forward.1} parent=11 // pred_fallthru
          _
        // Predicated region
        $region29: #{text_model_forward.1} parent=11 // pred_check
          %p561 = pneg %p167
        $region30: #{text_model_forward.1} parent=11 // pred_check_branch
          %563 = sbr.rel (%p561) target = $region32
        $region31: #{text_model_forward.1} parent=11 // pred_region
          _
        $region32: #{text_model_forward.1} parent=11 // pred_fallthru
          _
        // Predicated region
        $region33: #{text_model_forward.1} parent=11 // pred_check
          %p564 = pneg %p188
        $region34: #{text_model_forward.1} parent=11 // pred_check_branch
          %566 = sbr.rel (%p564) target = $region36
        $region35: #{text_model_forward.1} parent=11 // pred_region
          %s568 = ssub.s32 16, 16
          %569 = vsyncadd [#allocation8], %s568
          %s571 = sshll.u32 [#allocation9], 4
          %s572 = int_to_ptr.vmem [resolvable:$true] %s571
          %574 = dma.hbm_to_vmem [thread:$0]  %s6, 16, %s572, [#allocation8]
        $region36: #{text_model_forward.1} parent=11 // pred_fallthru
          _
        // Predicated region
        $region37: #{text_model_forward.1} parent=11 // pred_check
          %p575 = pneg %p209
        $region38: #{text_model_forward.1} parent=11 // pred_check_branch
          %577 = sbr.rel (%p575) target = $region40
        $region39: #{text_model_forward.1} parent=11 // pred_region
          %s579 = ssub.s32 6144, 6144
          %580 = vsyncadd [#allocation11], %s579
          %s581 = sshll.u32 [#allocation10], 4
          %s582 = int_to_ptr.vmem [resolvable:$true] %s581
          %587 = dma.hbm_to_vmem [thread:$0]  %s7, 6144, %s582, [#allocation11], 192, 192, 12
        $region40: #{text_model_forward.1} parent=11 // pred_fallthru
          _
        // Predicated region
        $region41: #{text_model_forward.1} parent=11 // pred_check
          %p588 = pneg %p230
        $region42: #{text_model_forward.1} parent=11 // pred_check_branch
          %590 = sbr.rel (%p588) target = $region44
        $region43: #{text_model_forward.1} parent=11 // pred_region
          _
        $region44: #{text_model_forward.1} parent=11 // pred_fallthru
          _
        // Predicated region
        $region45: #{text_model_forward.1} parent=11 // pred_check
          %p591 = pneg %p251
        $region46: #{text_model_forward.1} parent=11 // pred_check_branch
          %593 = sbr.rel (%p591) target = $region48
        $region47: #{text_model_forward.1} parent=11 // pred_region
          %s595 = ssub.s32 2048, 2048
          %596 = vsyncadd [#allocation11], %s595
          %s597 = sshll.u32 [#allocation12], 4
          %s598 = int_to_ptr.vmem [resolvable:$true] %s597
          %603 = dma.hbm_to_vmem [thread:$0]  %s9, 2048, %s598, [#allocation11], 64, 64, 4
        $region48: #{text_model_forward.1} parent=11 // pred_fallthru
          _
        // Predicated region
        $region49: #{text_model_forward.1} parent=11 // pred_check
          %p604 = pneg %p272
        $region50: #{text_model_forward.1} parent=11 // pred_check_branch
          %606 = sbr.rel (%p604) target = $region52
        $region51: #{text_model_forward.1} parent=11 // pred_region
          %s608 = ssub.s32 32, 32
          %609 = vsyncadd [#allocation14], %s608
          %s610 = sshll.u32 [#allocation13], 4
          %s611 = int_to_ptr.vmem [resolvable:$true] %s610
          %616 = dma.hbm_to_vmem [thread:$0]  %s10, 32, %s611, [#allocation14], 16, 16, 1
        $region52: #{text_model_forward.1} parent=11 // pred_fallthru
          _
        // Predicated region
        $region53: #{text_model_forward.1} parent=11 // pred_check
          %p617 = pneg %p293
        $region54: #{text_model_forward.1} parent=11 // pred_check_branch
          %619 = sbr.rel (%p617) target = $region56
        $region55: #{text_model_forward.1} parent=11 // pred_region
          %s621 = ssub.s32 32, 32
          %622 = vsyncadd [#allocation14], %s621
          %s623 = sshll.u32 [#allocation15], 4
          %s624 = int_to_ptr.vmem [resolvable:$true] %s623
          %629 = dma.hbm_to_vmem [thread:$0]  %s11, 32, %s624, [#allocation14], 16, 16, 1
        $region56: #{text_model_forward.1} parent=11 // pred_fallthru
          _
        // Predicated region
        $region57: #{text_model_forward.1} parent=11 // pred_check
          %p630 = pneg %p314
        $region58: #{text_model_forward.1} parent=11 // pred_check_branch
          %632 = sbr.rel (%p630) target = $region60
        $region59: #{text_model_forward.1} parent=11 // pred_region
          %s634 = ssub.s32 32, 32
          %635 = vsyncadd [#allocation17], %s634
          %s636 = sshll.u32 [#allocation16], 4
          %s637 = int_to_ptr.vmem [resolvable:$true] %s636
          %642 = dma.hbm_to_vmem [thread:$0]  %s12, 32, %s637, [#allocation17], 16, 16, 1
        $region60: #{text_model_forward.1} parent=11 // pred_fallthru
          _
        // Predicated region
        $region61: #{text_model_forward.1} parent=11 // pred_check
          %p643 = pneg %p335
        $region62: #{text_model_forward.1} parent=11 // pred_check_branch
          %645 = sbr.rel (%p643) target = $region64
        $region63: #{text_model_forward.1} parent=11 // pred_region
          %s647 = ssub.s32 8192, 8192
          %648 = vsyncadd [#allocation17], %s647
          %s649 = sshll.u32 [#allocation18], 4
          %s650 = int_to_ptr.vmem [resolvable:$true] %s649
          %655 = dma.hbm_to_vmem [thread:$0]  %s13, 8192, %s650, [#allocation17], 256, 256, 16
        $region64: #{text_model_forward.1} parent=11 // pred_fallthru
          _
        // Predicated region
        $region65: #{text_model_forward.1} parent=11 // pred_check
          %p656 = pneg %p356
        $region66: #{text_model_forward.1} parent=11 // pred_check_branch
          %658 = sbr.rel (%p656) target = $region68
        $region67: #{text_model_forward.1} parent=11 // pred_region
          %s660 = ssub.s32 128, 128
          %661 = vsyncadd [#allocation20], %s660
          %s662 = sshll.u32 [#allocation19], 4
          %s663 = int_to_ptr.vmem [resolvable:$true] %s662
          %668 = dma.hbm_to_vmem [thread:$0]  %s14, 128, %s663, [#allocation20], 64, 64, 4
        $region68: #{text_model_forward.1} parent=11 // pred_fallthru
          _
        // Predicated region
        $region69: #{text_model_forward.1} parent=11 // pred_check
          %p669 = pneg %p377
        $region70: #{text_model_forward.1} parent=11 // pred_check_branch
          %671 = sbr.rel (%p669) target = $region72
        $region71: #{text_model_forward.1} parent=11 // pred_region
          %s673 = ssub.s32 8192, 8192
          %674 = vsyncadd [#allocation20], %s673
          %s675 = sshll.u32 [#allocation21], 4
          %s676 = int_to_ptr.vmem [resolvable:$true] %s675
          %681 = dma.hbm_to_vmem [thread:$0]  %s15, 8192, %s676, [#allocation20], 64, 64, 4
        $region72: #{text_model_forward.1} parent=11 // pred_fallthru
          _
        // Predicated region
        $region73: #{text_model_forward.1} parent=11 // pred_check
          %p682 = pneg %p398
        $region74: #{text_model_forward.1} parent=11 // pred_check_branch
          %684 = sbr.rel (%p682) target = $region76
        $region75: #{text_model_forward.1} parent=11 // pred_region
          %s686 = ssub.s32 32, 32
          %687 = vsyncadd [#allocation23], %s686
          %s688 = sshll.u32 [#allocation22], 4
          %s689 = int_to_ptr.vmem [resolvable:$true] %s688
          %694 = dma.hbm_to_vmem [thread:$0]  %s16, 32, %s689, [#allocation23], 16, 16, 1
        $region76: #{text_model_forward.1} parent=11 // pred_fallthru
          _
        // Predicated region
        $region77: #{text_model_forward.1} parent=11 // pred_check
          %p695 = pneg %p419
        $region78: #{text_model_forward.1} parent=11 // pred_check_branch
          %697 = sbr.rel (%p695) target = $region80
        $region79: #{text_model_forward.1} parent=11 // pred_region
          %s699 = ssub.s32 32, 32
          %700 = vsyncadd [#allocation23], %s699
          %s701 = sshll.u32 [#allocation24], 4
          %s702 = int_to_ptr.vmem [resolvable:$true] %s701
          %707 = dma.hbm_to_vmem [thread:$0]  %s17, 32, %s702, [#allocation23], 16, 16, 1
        $region80: #{text_model_forward.1} parent=11 // pred_fallthru
          _
        // Predicated region
        $region81: #{text_model_forward.1} parent=11 // pred_check
          %p708 = pneg %p440
        $region82: #{text_model_forward.1} parent=11 // pred_check_branch
          %710 = sbr.rel (%p708) target = $region84
        $region83: #{text_model_forward.1} parent=11 // pred_region
          %s712 = ssub.s32 32, 32
          %713 = vsyncadd [#allocation26], %s712
          %s714 = sshll.u32 [#allocation25], 4
          %s715 = int_to_ptr.vmem [resolvable:$true] %s714
          %720 = dma.hbm_to_vmem [thread:$0]  %s18, 32, %s715, [#allocation26], 16, 16, 1
        $region84: #{text_model_forward.1} parent=11 // pred_fallthru
          _
        // Predicated region
        $region85: #{text_model_forward.1} parent=11 // pred_check
          %p721 = pneg %p461
        $region86: #{text_model_forward.1} parent=11 // pred_check_branch
          %723 = sbr.rel (%p721) target = $region88
        $region87: #{text_model_forward.1} parent=11 // pred_region
          %s725 = ssub.s32 4096, 4096
          %726 = vsyncadd [#allocation26], %s725
          %s727 = sshll.u32 [#allocation27], 4
          %s728 = int_to_ptr.vmem [resolvable:$true] %s727
          %733 = dma.hbm_to_vmem [thread:$0]  %s19, 4096, %s728, [#allocation26], 256, 256, 16
        $region88: #{text_model_forward.1} parent=11 // pred_fallthru
          _
        // Predicated region
        $region89: #{text_model_forward.1} parent=11 // pred_check
          %p734 = pneg %p482
        $region90: #{text_model_forward.1} parent=11 // pred_check_branch
          %736 = sbr.rel (%p734) target = $region92
        $region91: #{text_model_forward.1} parent=11 // pred_region
          _
        $region92: #{text_model_forward.1} parent=11 // pred_fallthru
          _
      $region12: #{text_model_forward.1} parent=5 // pred_fallthru
        _
      %p737 = scmp.lt.s32.totalorder %s36, 2
      // Predicated region
      $region93: #{text_model_forward.1} parent=5 // pred_check
        %p738 = pneg %p737
      $region94: #{text_model_forward.1} parent=5 // pred_check_branch
        %740 = sbr.rel (%p738) target = $region96
      $region95: #{text_model_forward.1} parent=5 // pred_region
        // Predicated region
        $region97: #{text_model_forward.1} parent=95 // pred_check
          %p741 = pneg %p140
        $region98: #{text_model_forward.1} parent=95 // pred_check_branch
          %743 = sbr.rel (%p741) target = $region100
        $region99: #{text_model_forward.1} parent=95 // pred_region
          %p744 = scmp.lt.s32.totalorder %s36, 1
          %s745 = scalar_select %p744, %s36, 1
          %s746 = scalar_lea.vmem %s4, %s745
        $region100: #{text_model_forward.1} parent=95 // pred_fallthru
          _
      $region96: #{text_model_forward.1} parent=5 // pred_fallthru
        _
      %p747 = scmp.le.s32.totalorder 1, %s36
      %p748 = scmp.lt.s32.totalorder %s36, 3
      %p749 = pnand %p747, %p748
      %p750 = pneg %p749
      // Predicated region
      $region101: #{text_model_forward.1} parent=5 // pred_check
        _
      $region102: #{text_model_forward.1} parent=5 // pred_check_branch
        %752 = sbr.rel (%p749) target = $region104
      $region103: #{text_model_forward.1} parent=5 // pred_region
        %s753 = ssub.s32 %s36, 1
        // Predicated region
        $region105: #{text_model_forward.1} parent=103 // pred_check
          %p754 = pneg %p57
        $region106: #{text_model_forward.1} parent=103 // pred_check_branch
          %756 = sbr.rel (%p754) target = $region108
        $region107: #{text_model_forward.1} parent=103 // pred_region
          %757 = dma.done [#allocation5], 32
        $region108: #{text_model_forward.1} parent=103 // pred_fallthru
          _
        // Predicated region
        $region109: #{text_model_forward.1} parent=103 // pred_check
          %p758 = pneg %p78
        $region110: #{text_model_forward.1} parent=103 // pred_check_branch
          %760 = sbr.rel (%p758) target = $region112
        $region111: #{text_model_forward.1} parent=103 // pred_region
          %761 = dma.done [#allocation4], 1664
        $region112: #{text_model_forward.1} parent=103 // pred_fallthru
          _
        // Predicated region
        $region113: #{text_model_forward.1} parent=103 // pred_check
          %p762 = pneg %p120
        $region114: #{text_model_forward.1} parent=103 // pred_check_branch
          %764 = sbr.rel (%p762) target = $region116
        $region115: #{text_model_forward.1} parent=103 // pred_region
          %765 = dma.done [#allocation8], 32
        $region116: #{text_model_forward.1} parent=103 // pred_fallthru
          _
        // Predicated region
        $region117: #{text_model_forward.1} parent=103 // pred_check
          %p766 = pneg %p188
        $region118: #{text_model_forward.1} parent=103 // pred_check_branch
          %768 = sbr.rel (%p766) target = $region120
        $region119: #{text_model_forward.1} parent=103 // pred_region
          %769 = dma.done [#allocation8], 16
        $region120: #{text_model_forward.1} parent=103 // pred_fallthru
          _
        // Predicated region
        $region121: #{text_model_forward.1} parent=103 // pred_check
          %p770 = pneg %p209
        $region122: #{text_model_forward.1} parent=103 // pred_check_branch
          %772 = sbr.rel (%p770) target = $region124
        $region123: #{text_model_forward.1} parent=103 // pred_region
          %773 = dma.done [#allocation11], 6144
        $region124: #{text_model_forward.1} parent=103 // pred_fallthru
          _
        // Predicated region
        $region125: #{text_model_forward.1} parent=103 // pred_check
          %p774 = pneg %p251
        $region126: #{text_model_forward.1} parent=103 // pred_check_branch
          %776 = sbr.rel (%p774) target = $region128
        $region127: #{text_model_forward.1} parent=103 // pred_region
          %777 = dma.done [#allocation11], 2048
        $region128: #{text_model_forward.1} parent=103 // pred_fallthru
          _
        // Predicated region
        $region129: #{text_model_forward.1} parent=103 // pred_check
          %p778 = pneg %p272
        $region130: #{text_model_forward.1} parent=103 // pred_check_branch
          %780 = sbr.rel (%p778) target = $region132
        $region131: #{text_model_forward.1} parent=103 // pred_region
          %781 = dma.done [#allocation14], 32
        $region132: #{text_model_forward.1} parent=103 // pred_fallthru
          _
        // Predicated region
        $region133: #{text_model_forward.1} parent=103 // pred_check
          %p782 = pneg %p293
        $region134: #{text_model_forward.1} parent=103 // pred_check_branch
          %784 = sbr.rel (%p782) target = $region136
        $region135: #{text_model_forward.1} parent=103 // pred_region
          %785 = dma.done [#allocation14], 32
        $region136: #{text_model_forward.1} parent=103 // pred_fallthru
          _
        // Predicated region
        $region137: #{text_model_forward.1} parent=103 // pred_check
          %p786 = pneg %p314
        $region138: #{text_model_forward.1} parent=103 // pred_check_branch
          %788 = sbr.rel (%p786) target = $region140
        $region139: #{text_model_forward.1} parent=103 // pred_region
          %789 = dma.done [#allocation17], 32
        $region140: #{text_model_forward.1} parent=103 // pred_fallthru
          _
        // Predicated region
        $region141: #{text_model_forward.1} parent=103 // pred_check
          %p790 = pneg %p335
        $region142: #{text_model_forward.1} parent=103 // pred_check_branch
          %792 = sbr.rel (%p790) target = $region144
        $region143: #{text_model_forward.1} parent=103 // pred_region
          %793 = dma.done [#allocation17], 8192
        $region144: #{text_model_forward.1} parent=103 // pred_fallthru
          _
        // Predicated region
        $region145: #{text_model_forward.1} parent=103 // pred_check
          %p794 = pneg %p356
        $region146: #{text_model_forward.1} parent=103 // pred_check_branch
          %796 = sbr.rel (%p794) target = $region148
        $region147: #{text_model_forward.1} parent=103 // pred_region
          %797 = dma.done [#allocation20], 128
        $region148: #{text_model_forward.1} parent=103 // pred_fallthru
          _
        // Predicated region
        $region149: #{text_model_forward.1} parent=103 // pred_check
          %p798 = pneg %p377
        $region150: #{text_model_forward.1} parent=103 // pred_check_branch
          %800 = sbr.rel (%p798) target = $region152
        $region151: #{text_model_forward.1} parent=103 // pred_region
          %801 = dma.done [#allocation20], 8192
        $region152: #{text_model_forward.1} parent=103 // pred_fallthru
          _
        // Predicated region
        $region153: #{text_model_forward.1} parent=103 // pred_check
          %p802 = pneg %p398
        $region154: #{text_model_forward.1} parent=103 // pred_check_branch
          %804 = sbr.rel (%p802) target = $region156
        $region155: #{text_model_forward.1} parent=103 // pred_region
          %805 = dma.done [#allocation23], 32
        $region156: #{text_model_forward.1} parent=103 // pred_fallthru
          _
        // Predicated region
        $region157: #{text_model_forward.1} parent=103 // pred_check
          %p806 = pneg %p419
        $region158: #{text_model_forward.1} parent=103 // pred_check_branch
          %808 = sbr.rel (%p806) target = $region160
        $region159: #{text_model_forward.1} parent=103 // pred_region
          %809 = dma.done [#allocation23], 32
        $region160: #{text_model_forward.1} parent=103 // pred_fallthru
          _
        // Predicated region
        $region161: #{text_model_forward.1} parent=103 // pred_check
          %p810 = pneg %p440
        $region162: #{text_model_forward.1} parent=103 // pred_check_branch
          %812 = sbr.rel (%p810) target = $region164
        $region163: #{text_model_forward.1} parent=103 // pred_region
          %813 = dma.done [#allocation26], 32
        $region164: #{text_model_forward.1} parent=103 // pred_fallthru
          _
        // Predicated region
        $region165: #{text_model_forward.1} parent=103 // pred_check
          %p814 = pneg %p461
        $region166: #{text_model_forward.1} parent=103 // pred_check_branch
          %816 = sbr.rel (%p814) target = $region168
        $region167: #{text_model_forward.1} parent=103 // pred_region
          %817 = dma.done [#allocation26], 4096
        $region168: #{text_model_forward.1} parent=103 // pred_fallthru
          _
        %818 = sfence
        %p819 = pneg %p57
        %p820 = pneg %p54
        %p821 = pneg %p78
        %p822 = pneg %p75
        %p823 = pneg %p99
        %p824 = pneg %p96
        %p825 = pneg %p120
        %p826 = pneg %p117
        %p827 = scmp.lt.s32.totalorder %s41, 1
        %s828 = scalar_select %p827, %s41, 1
        %s829 = scalar_lea.vmem %s4, %s828
        %p830 = pneg %p146
        %p831 = pneg %p143
        %p832 = pneg %p167
        %p833 = pneg %p164
        %p834 = pneg %p188
        %p835 = pneg %p185
        %p836 = pneg %p209
        %p837 = pneg %p206
        %p838 = pneg %p230
        %p839 = pneg %p227
        %p840 = pneg %p251
        %p841 = pneg %p248
        %p842 = pneg %p272
        %p843 = pneg %p269
        %p844 = pneg %p293
        %p845 = pneg %p290
        %p846 = pneg %p314
        %p847 = pneg %p311
        %p848 = pneg %p335
        %p849 = pneg %p332
        %p850 = pneg %p356
        %p851 = pneg %p353
        %p852 = pneg %p377
        %p853 = pneg %p374
        %p854 = pneg %p398
        %p855 = pneg %p395
        %p856 = pneg %p419
        %p857 = pneg %p416
        %p858 = pneg %p440
        %p859 = pneg %p437
        %p860 = pneg %p461
        %p861 = pneg %p458
        %p862 = pneg %p482
        %p863 = pneg %p479
        %p864 = pneg %p508
        %p865 = pneg %p505
        %p866 = scmp.lt.s32.totalorder %s41, 1
        %s867 = scalar_select %p866, %s41, 1
        %s868 = smul.addr %s867, 4
        %s869 = scalar_lea.vmem %s21, %s868
        %p870 = scmp.lt.s32.totalorder %s41, 1
        %s871 = scalar_select %p870, %s41, 1
        %s872 = scalar_lea.vmem %s4, %s871
        %p873 = scmp.lt.s32.totalorder %s41, 1
        %s874 = scalar_select %p873, %s41, 1
        %s875 = smul.addr %s874, 4
        %s876 = scalar_lea.vmem %s21, %s875
        %s878 = smul.u32 %s41, 128
        %s879 = sld [smem:[#allocation3 + %s878]]
        %s880 = scalar_lea.vmem [#allocation6], %s879
        %v881 = vld [vmem:[%s880] sm:$0x1]
        %882 = vst [vmem:[#allocation2] sm:$0x1] %v881
        %s883 = sadd.s32 %s878, 1
        %s884 = sld [smem:[#allocation3 + %s883]]
        %s885 = scalar_lea.vmem [#allocation6], %s884
        %v886 = vld [vmem:[%s885] sm:$0x1]
        %887 = vst [vmem:[#allocation2 + $0x1] sm:$0x1] %v886
        %s888 = sadd.s32 %s878, 2
        %s889 = sld [smem:[#allocation3 + %s888]]
        %s890 = scalar_lea.vmem [#allocation6], %s889
        %v891 = vld [vmem:[%s890] sm:$0x1]
        %892 = vst [vmem:[#allocation2 + $0x2] sm:$0x1] %v891
        %s893 = sadd.s32 %s878, 3
        %s894 = sld [smem:[#allocation3 + %s893]]
        %s895 = scalar_lea.vmem [#allocation6], %s894
        %v896 = vld [vmem:[%s895] sm:$0x1]
        %897 = vst [vmem:[#allocation2 + $0x3] sm:$0x1] %v896
        %s898 = sadd.s32 %s878, 4
        %s899 = sld [smem:[#allocation3 + %s898]]
        %s900 = scalar_lea.vmem [#allocation6], %s899
        %v901 = vld [vmem:[%s900] sm:$0x1]
        %902 = vst [vmem:[#allocation2 + $0x4] sm:$0x1] %v901
        %s903 = sadd.s32 %s878, 5
        %s904 = sld [smem:[#allocation3 + %s903]]
        %s905 = scalar_lea.vmem [#allocation6], %s904
        %v906 = vld [vmem:[%s905] sm:$0x1]
        %907 = vst [vmem:[#allocation2 + $0x5] sm:$0x1] %v906
        %s908 = sadd.s32 %s878, 6
        %s909 = sld [smem:[#allocation3 + %s908]]
        %s910 = scalar_lea.vmem [#allocation6], %s909
        %v911 = vld [vmem:[%s910] sm:$0x1]
        %912 = vst [vmem:[#allocation2 + $0x6] sm:$0x1] %v911
        %s913 = sadd.s32 %s878, 7
        %s914 = sld [smem:[#allocation3 + %s913]]
        %s915 = scalar_lea.vmem [#allocation6], %s914
        %v916 = vld [vmem:[%s915] sm:$0x1]
        %917 = vst [vmem:[#allocation2 + $0x7] sm:$0x1] %v916
        %v918 = vld [vmem:[#allocation2] sm:$0xff]
        %v919 = vld [vmem:[%s2] sm:$0xff]
        %v920 = vadd.f32 %v918, %v919
        %v921 = vld [vmem:[#allocation7] sm:$0x1]
        %v922 = vlaneseq
        %v923 = vshrl.u32 %v922, 7
        %v924 = vsub.s32 0, %v923
        %v925 = vrot.slane %v921, %v924
        %v926 = vadd.f32 %v920, %v925
        %v927 = vld [vmem:[%s5] sm:$0x1]
        %v928 = vld [vmem:[#allocation9] sm:$0x1]
        %929 = vadd.xlane.f32.xlu0 %v926
        %v930 = vpop.xlane.xlu0 %929
        %v931 = vrcp.pop 128.0
        %v932 = vmul.f32 %v930, %v931
        %v933 = vsub.f32 %v926, %v932
        %v934 = vmul.f32 %v933, %v933
        %935 = vadd.xlane.f32.xlu0 %v934
        %v936 = vpop.xlane.xlu0 %935
        %v937 = vmul.f32 %v936, %v931
        %v938 = vadd.f32 %v937, 1e-12
        %v939 = vrsqrt.pop %v938
        %v940 = vmul.f32 %v933, %v939
        %v942 = vlaneseq
        %v943 = vshrl.u32 %v942, 7
        %v944 = vsub.s32 0, %v943
        %v945 = vrot.slane %v927, %v944
        %v947 = vmul.f32 %v940, %v945
        %v949 = vlaneseq
        %v950 = vshrl.u32 %v949, 7
        %v951 = vsub.s32 0, %v950
        %v952 = vrot.slane %v928, %v951
        %v954 = vadd.f32 %v947, %v952
        %v955 = vld [vmem:[%s872] sm:$0x1]
        %v956 = vsub.f32 1.0, %v955
        %v957 = vmul.f32 %v956, -10000.0
        %v959 = vlaneseq
        %v960 = vshrl.u32 %v959, 7
        %v961 = vsub.s32 0, %v960
        %v962 = vrot.slane %v957, %v961
        %v964 = vpack.c.bf16 %v954, %v954
        %v965 = vld [vmem:[#allocation10] sm:$0xff]
        %v966 = vld [vmem:[#allocation10 + $0x8] sm:$0xf]
        %v967 = vld [vmem:[#allocation10 + $0xc] sm:$0xff]
        %v968 = vld [vmem:[#allocation10 + $0x14] sm:$0xf]
        %v969 = vld [vmem:[#allocation10 + $0x18] sm:$0xff]
        %v970 = vld [vmem:[#allocation10 + $0x20] sm:$0xf]
        %v971 = vld [vmem:[#allocation10 + $0x24] sm:$0xff]
        %v972 = vld [vmem:[#allocation10 + $0x2c] sm:$0xf]
        %v973 = vld [vmem:[#allocation10 + $0x30] sm:$0xff]
        %v974 = vld [vmem:[#allocation10 + $0x38] sm:$0xf]
        %v975 = vld [vmem:[#allocation10 + $0x3c] sm:$0xff]
        %v976 = vld [vmem:[#allocation10 + $0x44] sm:$0xf]
        %v977 = vld [vmem:[#allocation10 + $0x48] sm:$0xff]
        %v978 = vld [vmem:[#allocation10 + $0x50] sm:$0xf]
        %v979 = vld [vmem:[#allocation10 + $0x54] sm:$0xff]
        %v980 = vld [vmem:[#allocation10 + $0x5c] sm:$0xf]
        %v981 = vld [vmem:[#allocation10 + $0x60] sm:$0xff]
        %v982 = vld [vmem:[#allocation10 + $0x68] sm:$0xf]
        %v983 = vld [vmem:[#allocation10 + $0x6c] sm:$0xff]
        %v984 = vld [vmem:[#allocation10 + $0x74] sm:$0xf]
        %v985 = vld [vmem:[#allocation10 + $0x78] sm:$0xff]
        %v986 = vld [vmem:[#allocation10 + $0x80] sm:$0xf]
        %v987 = vld [vmem:[#allocation10 + $0x84] sm:$0xff]
        %v988 = vld [vmem:[#allocation10 + $0x8c] sm:$0xf]
        %v989 = vld [vmem:[#allocation10 + $0x90] sm:$0xff]
        %v990 = vld [vmem:[#allocation10 + $0x98] sm:$0xf]
        %v991 = vld [vmem:[#allocation10 + $0x9c] sm:$0xff]
        %v992 = vld [vmem:[#allocation10 + $0xa4] sm:$0xf]
        %v993 = vld [vmem:[#allocation10 + $0xa8] sm:$0xff]
        %v994 = vld [vmem:[#allocation10 + $0xb0] sm:$0xf]
        %v995 = vld [vmem:[#allocation10 + $0xb4] sm:$0xff]
        %v996 = vld [vmem:[#allocation10 + $0xbc] sm:$0xf]
        %v997 = vld [vmem:[%s8] sm:$0x7]
        %v999 = vlaneseq
        %v1000 = vshrl.u32 %v999, 7
        %v1001 = vsub.s32 0, %v1000
        %v1002 = vrot.slane %v997, %v1001
        %v1003 = vlaneseq
        %v1004 = vshrl.u32 %v1003, 7
        %v1005 = vsub.s32 1, %v1004
        %v1006 = vrot.slane %v997, %v1005
        %v1007 = vlaneseq
        %v1008 = vshrl.u32 %v1007, 7
        %v1009 = vsub.s32 2, %v1008
        %v1010 = vrot.slane %v997, %v1009
        %v1046 = vunpack.c.l.b16 %v965
        %v1047 = vunpack.c.h.b16 %v965
        %v1048 = vunpack.c.l.b16 %v966
        %v1049 = vunpack.c.l.b16 %v967
        %v1050 = vunpack.c.h.b16 %v967
        %v1051 = vunpack.c.l.b16 %v968
        %v1052 = vunpack.c.l.b16 %v969
        %v1053 = vunpack.c.h.b16 %v969
        %v1054 = vunpack.c.l.b16 %v970
        %v1055 = vunpack.c.l.b16 %v971
        %v1056 = vunpack.c.h.b16 %v971
        %v1057 = vunpack.c.l.b16 %v972
        %v1058 = vunpack.c.l.b16 %v973
        %v1059 = vunpack.c.h.b16 %v973
        %v1060 = vunpack.c.l.b16 %v974
        %v1061 = vunpack.c.l.b16 %v975
        %v1062 = vunpack.c.h.b16 %v975
        %v1063 = vunpack.c.l.b16 %v976
        %v1064 = vunpack.c.l.b16 %v977
        %v1065 = vunpack.c.h.b16 %v977
        %v1066 = vunpack.c.l.b16 %v978
        %v1067 = vunpack.c.l.b16 %v979
        %v1068 = vunpack.c.h.b16 %v979
        %v1069 = vunpack.c.l.b16 %v980
        %v1070 = vunpack.c.l.b16 %v981
        %v1071 = vunpack.c.h.b16 %v981
        %v1072 = vunpack.c.l.b16 %v982
        %v1073 = vunpack.c.l.b16 %v983
        %v1074 = vunpack.c.h.b16 %v983
        %v1075 = vunpack.c.l.b16 %v984
        %v1076 = vunpack.c.l.b16 %v985
        %v1077 = vunpack.c.h.b16 %v985
        %v1078 = vunpack.c.l.b16 %v986
        %v1079 = vunpack.c.l.b16 %v987
        %v1080 = vunpack.c.h.b16 %v987
        %v1081 = vunpack.c.l.b16 %v988
        %v1082 = vunpack.c.l.b16 %v989
        %v1083 = vunpack.c.h.b16 %v989
        %v1084 = vunpack.c.l.b16 %v990
        %v1085 = vunpack.c.l.b16 %v991
        %v1086 = vunpack.c.h.b16 %v991
        %v1087 = vunpack.c.l.b16 %v992
        %v1088 = vunpack.c.l.b16 %v993
        %v1089 = vunpack.c.h.b16 %v993
        %v1090 = vunpack.c.l.b16 %v994
        %v1091 = vunpack.c.l.b16 %v995
        %v1092 = vunpack.c.h.b16 %v995
        %v1093 = vunpack.c.l.b16 %v996
        %v1094 = vpack.c.b16 %v1049, %v1046
        %v1095 = vpack.c.b16 %v1050, %v1047
        %v1096 = vpack.c.b16 %v1051, %v1048
        %v1097 = vpack.c.b16 %v1055, %v1052
        %v1098 = vpack.c.b16 %v1056, %v1053
        %v1099 = vpack.c.b16 %v1057, %v1054
        %v1100 = vpack.c.b16 %v1061, %v1058
        %v1101 = vpack.c.b16 %v1062, %v1059
        %v1102 = vpack.c.b16 %v1063, %v1060
        %v1103 = vpack.c.b16 %v1067, %v1064
        %v1104 = vpack.c.b16 %v1068, %v1065
        %v1105 = vpack.c.b16 %v1069, %v1066
        %v1106 = vpack.c.b16 %v1073, %v1070
        %v1107 = vpack.c.b16 %v1074, %v1071
        %v1108 = vpack.c.b16 %v1075, %v1072
        %v1109 = vpack.c.b16 %v1079, %v1076
        %v1110 = vpack.c.b16 %v1080, %v1077
        %v1111 = vpack.c.b16 %v1081, %v1078
        %v1112 = vpack.c.b16 %v1085, %v1082
        %v1113 = vpack.c.b16 %v1086, %v1083
        %v1114 = vpack.c.b16 %v1087, %v1084
        %v1115 = vpack.c.b16 %v1091, %v1088
        %v1116 = vpack.c.b16 %v1092, %v1089
        %v1117 = vpack.c.b16 %v1093, %v1090
        %1142 = vmatprep.subr.bf16.mxu0 %v1116
        %1143 = vmatpush1.bf16.msra.mxu0 %v1115
        %1144 = vmatprep.subr.bf16.mxu0 %v1113
        %1145 = vmatpush1.bf16.msra.mxu0 %v1112
        %1146 = vmatprep.subr.bf16.mxu0 %v1110
        %1147 = vmatpush1.bf16.msra.mxu0 %v1109
        %1148 = vmatprep.subr.bf16.mxu0 %v1107
        %1149 = vmatpush1.bf16.msra.mxu0 %v1106
        %1150 = vmatprep.subr.bf16.mxu0 %v1104
        %1151 = vmatpush1.bf16.msra.mxu0 %v1103
        %1152 = vmatprep.subr.bf16.mxu0 %v1101
        %1153 = vmatpush1.bf16.msra.mxu0 %v1100
        %1154 = vmatprep.subr.bf16.mxu0 %v1098
        %1155 = vmatpush1.bf16.msra.mxu0 %v1097
        %1156 = vmatprep.subr.bf16.mxu0 %v1095
        %1157 = vmatpush1.bf16.msra.mxu0 %v1094
        %1158 = vmatprep.subr.bf16.mxu0 0
        %1159 = vmatpush2.bf16.msra.mxu0 0
        %1160 = vmatprep.subr.bf16.mxu0 0
        %1161 = vmatpush2.bf16.msra.mxu0 0
        %1162 = vmatprep.subr.bf16.mxu0 0
        %1163 = vmatpush2.bf16.msra.mxu0 0
        %1164 = vmatprep.subr.bf16.mxu0 0
        %1165 = vmatpush2.bf16.msra.mxu0 0
        %1166 = vmatprep.subr.bf16.mxu0 0
        %1167 = vmatpush2.bf16.msra.mxu0 0
        %1168 = vmatprep.subr.bf16.mxu0 0
        %1169 = vmatpush2.bf16.msra.mxu0 0
        %1170 = vmatprep.subr.bf16.mxu0 0
        %1171 = vmatpush2.bf16.msra.mxu0 0
        %1172 = vmatprep.subr.bf16.mxu0 0
        %1173 = vmatpush2.bf16.msra.mxu0 0
        %1174 = vmatprep.mubr.bf16.mxu0 0
        %1175 = vmatmul.mubr.bf16.gmra.mxu0 %v964
        %v1176 = vpop.f32.mrf.mxu0
        %v1177 = vadd.f32 %v1002, %v1176
        %v1178 = vpop.f32.mrf.mxu0
        %v1179 = vadd.f32 %v1006, %v1178
        %v1180 = vpop.f32.mrf.mxu0
        %v1181 = vpop.f32.mrf.mxu0
        %1182 = vdwg.mxu0
        %1183 = vmatprep.subr.bf16.mxu0 0
        %1184 = vmatpush1.bf16.msra.mxu0 %v1117
        %1185 = vmatprep.subr.bf16.mxu0 0
        %1186 = vmatpush1.bf16.msra.mxu0 %v1114
        %1187 = vmatprep.subr.bf16.mxu0 0
        %1188 = vmatpush1.bf16.msra.mxu0 %v1111
        %1189 = vmatprep.subr.bf16.mxu0 0
        %1190 = vmatpush1.bf16.msra.mxu0 %v1108
        %1191 = vmatprep.subr.bf16.mxu0 0
        %1192 = vmatpush1.bf16.msra.mxu0 %v1105
        %1193 = vmatprep.subr.bf16.mxu0 0
        %1194 = vmatpush1.bf16.msra.mxu0 %v1102
        %1195 = vmatprep.subr.bf16.mxu0 0
        %1196 = vmatpush1.bf16.msra.mxu0 %v1099
        %1197 = vmatprep.subr.bf16.mxu0 0
        %1198 = vmatpush1.bf16.msra.mxu0 %v1096
        %1199 = vmatprep.subr.bf16.mxu0 0
        %1200 = vmatpush2.bf16.msra.mxu0 0
        %1201 = vmatprep.subr.bf16.mxu0 0
        %1202 = vmatpush2.bf16.msra.mxu0 0
        %1203 = vmatprep.subr.bf16.mxu0 0
        %1204 = vmatpush2.bf16.msra.mxu0 0
        %1205 = vmatprep.subr.bf16.mxu0 0
        %1206 = vmatpush2.bf16.msra.mxu0 0
        %1207 = vmatprep.subr.bf16.mxu0 0
        %1208 = vmatpush2.bf16.msra.mxu0 0
        %1209 = vmatprep.subr.bf16.mxu0 0
        %1210 = vmatpush2.bf16.msra.mxu0 0
        %1211 = vmatprep.subr.bf16.mxu0 0
        %1212 = vmatpush2.bf16.msra.mxu0 0
        %1213 = vmatprep.subr.bf16.mxu0 0
        %1214 = vmatpush2.bf16.msra.mxu0 0
        %1215 = vmatprep.mubr.bf16.mxu0 0
        %1216 = vmatmul.mubr.bf16.gmra.mxu0 %v964
        %v1217 = vpop.f32.mrf.mxu0
        %v1218 = vadd.f32 %v1010, %v1217
        %v1219 = vpop.f32.mrf.mxu0
        %v1220 = vpop.f32.mrf.mxu0
        %v1221 = vpop.f32.mrf.mxu0
        %1222 = vdwg.mxu0
        %v1223 = vpack.c.bf16 %v1177, %v1177
        %v1224 = vpack.c.bf16 %v1179, %v1179
        %v1225 = vpack.c.bf16 %v1218, %v1218
        %v1226 = vld [vmem:[#allocation12] sm:$0xf]
        %v1227 = vld [vmem:[#allocation12 + $0x4] sm:$0xf]
        %v1228 = vld [vmem:[#allocation12 + $0x8] sm:$0xf]
        %v1229 = vld [vmem:[#allocation12 + $0xc] sm:$0xf]
        %v1230 = vld [vmem:[#allocation12 + $0x10] sm:$0xf]
        %v1231 = vld [vmem:[#allocation12 + $0x14] sm:$0xf]
        %v1232 = vld [vmem:[#allocation12 + $0x18] sm:$0xf]
        %v1233 = vld [vmem:[#allocation12 + $0x1c] sm:$0xf]
        %v1234 = vld [vmem:[#allocation12 + $0x20] sm:$0xf]
        %v1235 = vld [vmem:[#allocation12 + $0x24] sm:$0xf]
        %v1236 = vld [vmem:[#allocation12 + $0x28] sm:$0xf]
        %v1237 = vld [vmem:[#allocation12 + $0x2c] sm:$0xf]
        %v1238 = vld [vmem:[#allocation12 + $0x30] sm:$0xf]
        %v1239 = vld [vmem:[#allocation12 + $0x34] sm:$0xf]
        %v1240 = vld [vmem:[#allocation12 + $0x38] sm:$0xf]
        %v1241 = vld [vmem:[#allocation12 + $0x3c] sm:$0xf]
        %vm1242 = vcmask 261120
        %v1244 = vsel %vm1242, %v1223, 0
        %v1247 = vsel %vm1242, %v1224, 0
        %1249 = vmatprep.subr.bf16.mxu0 0
        %1250 = vmatpush1.bf16.xpose.msra.mxu0 0
        %1251 = vmatprep.subr.bf16.mxu0 0
        %1252 = vmatpush1.bf16.xpose.msra.mxu0 0
        %1253 = vmatprep.subr.bf16.mxu0 0
        %1254 = vmatpush1.bf16.xpose.msra.mxu0 0
        %1255 = vmatprep.subr.bf16.mxu0 0
        %1256 = vmatpush1.bf16.xpose.msra.mxu0 0
        %1257 = vmatprep.subr.bf16.mxu0 0
        %1258 = vmatpush1.bf16.xpose.msra.mxu0 0
        %1259 = vmatprep.subr.bf16.mxu0 0
        %1260 = vmatpush1.bf16.xpose.msra.mxu0 0
        %1261 = vmatprep.subr.bf16.mxu0 0
        %1262 = vmatpush1.bf16.xpose.msra.mxu0 0
        %1263 = vmatprep.subr.bf16.mxu0 0
        %1264 = vmatpush1.bf16.xpose.msra.mxu0 %v1247
        %1265 = vmatprep.subr.bf16.mxu0 0
        %1266 = vmatpush2.bf16.xpose.msra.mxu0 0
        %1267 = vmatprep.subr.bf16.mxu0 0
        %1268 = vmatpush2.bf16.xpose.msra.mxu0 0
        %1269 = vmatprep.subr.bf16.mxu0 0
        %1270 = vmatpush2.bf16.xpose.msra.mxu0 0
        %1271 = vmatprep.subr.bf16.mxu0 0
        %1272 = vmatpush2.bf16.xpose.msra.mxu0 0
        %1273 = vmatprep.subr.bf16.mxu0 0
        %1274 = vmatpush2.bf16.xpose.msra.mxu0 0
        %1275 = vmatprep.subr.bf16.mxu0 0
        %1276 = vmatpush2.bf16.xpose.msra.mxu0 0
        %1277 = vmatprep.subr.bf16.mxu0 0
        %1278 = vmatpush2.bf16.xpose.msra.mxu0 0
        %1279 = vmatprep.subr.bf16.mxu0 0
        %1280 = vmatpush2.bf16.xpose.msra.mxu0 0
        %1281 = vmatprep.mubr.bf16.mxu0 0
        %1282 = vmatmul.mubr.bf16.gmra.mxu0 %v1244
        %v1283 = vpop.f32.mrf.mxu0
        %v1284 = vadd.f32 %v962, %v1283
        %v1285 = vpop.f32.mrf.mxu0
        %v1286 = vpop.f32.mrf.mxu0
        %v1287 = vpop.f32.mrf.mxu0
        %1288 = vdwg.mxu0
        %vm1289 = vcmask 64512
        %v1290 = vsel %vm1289, %v1284, -inf
        %1291 = vmax.xlane.f32.xlu0 %v1290
        %v1292 = vpop.xlane.xlu0 %1291
        %v1293 = vsub.f32 %v1284, %v1292
        %v1294 = vmul.f32 %v1293, 1.442695
        %v1295 = vpow.pop %v1294
        %v1296 = vsel %vm1289, %v1295, 0.0
        %1297 = vadd.xlane.f32.xlu0 %v1296
        %v1298 = vpop.xlane.xlu0 %1297
        %v1299 = vrcp.pop %v1298
        %v1300 = vmul.f32 %v1295, %v1299
        %v1301 = vpack.c.bf16 %v1300, %v1300
        %v1303 = vsel %vm1289, %v1301, 0
        %vm1305 = vcmask 1043456
        %v1307 = vsel %vm1305, %v1225, 0
        %1309 = vmatprep.subr.bf16.mxu0 0
        %1310 = vmatpush1.bf16.msra.mxu0 0
        %1311 = vmatprep.subr.bf16.mxu0 0
        %1312 = vmatpush1.bf16.msra.mxu0 0
        %1313 = vmatprep.subr.bf16.mxu0 0
        %1314 = vmatpush1.bf16.msra.mxu0 0
        %1315 = vmatprep.subr.bf16.mxu0 0
        %1316 = vmatpush1.bf16.msra.mxu0 0
        %1317 = vmatprep.subr.bf16.mxu0 0
        %1318 = vmatpush1.bf16.msra.mxu0 0
        %1319 = vmatprep.subr.bf16.mxu0 0
        %1320 = vmatpush1.bf16.msra.mxu0 0
        %1321 = vmatprep.subr.bf16.mxu0 0
        %1322 = vmatpush1.bf16.msra.mxu0 0
        %1323 = vmatprep.subr.bf16.mxu0 0
        %1324 = vmatpush1.bf16.msra.mxu0 %v1307
        %1325 = vmatprep.subr.bf16.mxu0 0
        %1326 = vmatpush2.bf16.msra.mxu0 0
        %1327 = vmatprep.subr.bf16.mxu0 0
        %1328 = vmatpush2.bf16.msra.mxu0 0
        %1329 = vmatprep.subr.bf16.mxu0 0
        %1330 = vmatpush2.bf16.msra.mxu0 0
        %1331 = vmatprep.subr.bf16.mxu0 0
        %1332 = vmatpush2.bf16.msra.mxu0 0
        %1333 = vmatprep.subr.bf16.mxu0 0
        %1334 = vmatpush2.bf16.msra.mxu0 0
        %1335 = vmatprep.subr.bf16.mxu0 0
        %1336 = vmatpush2.bf16.msra.mxu0 0
        %1337 = vmatprep.subr.bf16.mxu0 0
        %1338 = vmatpush2.bf16.msra.mxu0 0
        %1339 = vmatprep.subr.bf16.mxu0 0
        %1340 = vmatpush2.bf16.msra.mxu0 0
        %1341 = vmatprep.mubr.bf16.mxu0 0
        %1342 = vmatmul.mubr.bf16.gmra.mxu0 %v1303
        %v1343 = vpop.f32.mrf.mxu0
        %v1344 = vadd.f32 0.0, %v1343
        %v1345 = vpop.f32.mrf.mxu0
        %v1346 = vpop.f32.mrf.mxu0
        %v1347 = vpop.f32.mrf.mxu0
        %1348 = vdwg.mxu0
        %v1349 = vpack.c.bf16 %v1344, %v1344
        %1351 = vrot.lane.b32.xlu0 %v1223, 96
        %v1352 = vpop.permute.xlu0 %1351
        %1354 = vrot.lane.b32.xlu0 %v1224, 96
        %v1355 = vpop.permute.xlu0 %1354
        %v1357 = vsel %vm1242, %v1352, 0
        %v1360 = vsel %vm1242, %v1355, 0
        %1362 = vmatprep.subr.bf16.mxu0 0
        %1363 = vmatpush1.bf16.xpose.msra.mxu0 0
        %1364 = vmatprep.subr.bf16.mxu0 0
        %1365 = vmatpush1.bf16.xpose.msra.mxu0 0
        %1366 = vmatprep.subr.bf16.mxu0 0
        %1367 = vmatpush1.bf16.xpose.msra.mxu0 0
        %1368 = vmatprep.subr.bf16.mxu0 0
        %1369 = vmatpush1.bf16.xpose.msra.mxu0 0
        %1370 = vmatprep.subr.bf16.mxu0 0
        %1371 = vmatpush1.bf16.xpose.msra.mxu0 0
        %1372 = vmatprep.subr.bf16.mxu0 0
        %1373 = vmatpush1.bf16.xpose.msra.mxu0 0
        %1374 = vmatprep.subr.bf16.mxu0 0
        %1375 = vmatpush1.bf16.xpose.msra.mxu0 0
        %1376 = vmatprep.subr.bf16.mxu0 0
        %1377 = vmatpush1.bf16.xpose.msra.mxu0 %v1360
        %1378 = vmatprep.subr.bf16.mxu0 0
        %1379 = vmatpush2.bf16.xpose.msra.mxu0 0
        %1380 = vmatprep.subr.bf16.mxu0 0
        %1381 = vmatpush2.bf16.xpose.msra.mxu0 0
        %1382 = vmatprep.subr.bf16.mxu0 0
        %1383 = vmatpush2.bf16.xpose.msra.mxu0 0
        %1384 = vmatprep.subr.bf16.mxu0 0
        %1385 = vmatpush2.bf16.xpose.msra.mxu0 0
        %1386 = vmatprep.subr.bf16.mxu0 0
        %1387 = vmatpush2.bf16.xpose.msra.mxu0 0
        %1388 = vmatprep.subr.bf16.mxu0 0
        %1389 = vmatpush2.bf16.xpose.msra.mxu0 0
        %1390 = vmatprep.subr.bf16.mxu0 0
        %1391 = vmatpush2.bf16.xpose.msra.mxu0 0
        %1392 = vmatprep.subr.bf16.mxu0 0
        %1393 = vmatpush2.bf16.xpose.msra.mxu0 0
        %1394 = vmatprep.mubr.bf16.mxu0 0
        %1395 = vmatmul.mubr.bf16.gmra.mxu0 %v1357
        %v1396 = vpop.f32.mrf.mxu0
        %v1397 = vadd.f32 %v962, %v1396
        %v1398 = vpop.f32.mrf.mxu0
        %v1399 = vpop.f32.mrf.mxu0
        %v1400 = vpop.f32.mrf.mxu0
        %1401 = vdwg.mxu0
        %v1402 = vsel %vm1289, %v1397, -inf
        %1403 = vmax.xlane.f32.xlu0 %v1402
        %v1404 = vpop.xlane.xlu0 %1403
        %v1405 = vsub.f32 %v1397, %v1404
        %v1406 = vmul.f32 %v1405, 1.442695
        %v1407 = vpow.pop %v1406
        %v1408 = vsel %vm1289, %v1407, 0.0
        %1409 = vadd.xlane.f32.xlu0 %v1408
        %v1410 = vpop.xlane.xlu0 %1409
        %v1411 = vrcp.pop %v1410
        %v1412 = vmul.f32 %v1407, %v1411
        %v1413 = vpack.c.bf16 %v1412, %v1412
        %1415 = vrot.lane.b32.xlu0 %v1225, 96
        %v1416 = vpop.permute.xlu0 %1415
        %v1418 = vsel %vm1289, %v1413, 0
        %v1421 = vsel %vm1305, %v1416, 0
        %1423 = vmatprep.subr.bf16.mxu0 0
        %1424 = vmatpush1.bf16.msra.mxu0 0
        %1425 = vmatprep.subr.bf16.mxu0 0
        %1426 = vmatpush1.bf16.msra.mxu0 0
        %1427 = vmatprep.subr.bf16.mxu0 0
        %1428 = vmatpush1.bf16.msra.mxu0 0
        %1429 = vmatprep.subr.bf16.mxu0 0
        %1430 = vmatpush1.bf16.msra.mxu0 0
        %1431 = vmatprep.subr.bf16.mxu0 0
        %1432 = vmatpush1.bf16.msra.mxu0 0
        %1433 = vmatprep.subr.bf16.mxu0 0
        %1434 = vmatpush1.bf16.msra.mxu0 0
        %1435 = vmatprep.subr.bf16.mxu0 0
        %1436 = vmatpush1.bf16.msra.mxu0 0
        %1437 = vmatprep.subr.bf16.mxu0 0
        %1438 = vmatpush1.bf16.msra.mxu0 %v1421
        %1439 = vmatprep.subr.bf16.mxu0 0
        %1440 = vmatpush2.bf16.msra.mxu0 0
        %1441 = vmatprep.subr.bf16.mxu0 0
        %1442 = vmatpush2.bf16.msra.mxu0 0
        %1443 = vmatprep.subr.bf16.mxu0 0
        %1444 = vmatpush2.bf16.msra.mxu0 0
        %1445 = vmatprep.subr.bf16.mxu0 0
        %1446 = vmatpush2.bf16.msra.mxu0 0
        %1447 = vmatprep.subr.bf16.mxu0 0
        %1448 = vmatpush2.bf16.msra.mxu0 0
        %1449 = vmatprep.subr.bf16.mxu0 0
        %1450 = vmatpush2.bf16.msra.mxu0 0
        %1451 = vmatprep.subr.bf16.mxu0 0
        %1452 = vmatpush2.bf16.msra.mxu0 0
        %1453 = vmatprep.subr.bf16.mxu0 0
        %1454 = vmatpush2.bf16.msra.mxu0 0
        %1455 = vmatprep.mubr.bf16.mxu0 0
        %1456 = vmatmul.mubr.bf16.gmra.mxu0 %v1418
        %v1457 = vpop.f32.mrf.mxu0
        %v1458 = vadd.f32 0.0, %v1457
        %v1459 = vpop.f32.mrf.mxu0
        %v1460 = vpop.f32.mrf.mxu0
        %v1461 = vpop.f32.mrf.mxu0
        %1462 = vdwg.mxu0
        %v1463 = vpack.c.bf16 %v1458, %v1458
        %v1468 = vunpack.c.l.b16 %v1230
        %v1469 = vunpack.c.l.b16 %v1231
        %v1470 = vunpack.c.l.b16 %v1232
        %v1471 = vunpack.c.l.b16 %v1233
        %v1472 = vpack.c.b16 %v1469, %v1468
        %v1473 = vpack.c.b16 %v1471, %v1470
        %v1477 = vsel %vm1242, %v1463, 0
        %1479 = vmatprep.subr.bf16.mxu0 0
        %1480 = vmatpush1.bf16.msra.mxu0 0
        %1481 = vmatprep.subr.bf16.mxu0 0
        %1482 = vmatpush1.bf16.msra.mxu0 0
        %1483 = vmatprep.subr.bf16.mxu0 0
        %1484 = vmatpush1.bf16.msra.mxu0 0
        %1485 = vmatprep.subr.bf16.mxu0 0
        %1486 = vmatpush1.bf16.msra.mxu0 0
        %1487 = vmatprep.subr.bf16.mxu0 0
        %1488 = vmatpush1.bf16.msra.mxu0 0
        %1489 = vmatprep.subr.bf16.mxu0 0
        %1490 = vmatpush1.bf16.msra.mxu0 0
        %1491 = vmatprep.subr.bf16.mxu0 0
        %1492 = vmatpush1.bf16.msra.mxu0 %v1473
        %1493 = vmatprep.subr.bf16.mxu0 0
        %1494 = vmatpush1.bf16.msra.mxu0 %v1472
        %1495 = vmatprep.subr.bf16.mxu0 0
        %1496 = vmatpush2.bf16.msra.mxu0 0
        %1497 = vmatprep.subr.bf16.mxu0 0
        %1498 = vmatpush2.bf16.msra.mxu0 0
        %1499 = vmatprep.subr.bf16.mxu0 0
        %1500 = vmatpush2.bf16.msra.mxu0 0
        %1501 = vmatprep.subr.bf16.mxu0 0
        %1502 = vmatpush2.bf16.msra.mxu0 0
        %1503 = vmatprep.subr.bf16.mxu0 0
        %1504 = vmatpush2.bf16.msra.mxu0 0
        %1505 = vmatprep.subr.bf16.mxu0 0
        %1506 = vmatpush2.bf16.msra.mxu0 0
        %1507 = vmatprep.subr.bf16.mxu0 0
        %1508 = vmatpush2.bf16.msra.mxu0 0
        %1509 = vmatprep.subr.bf16.mxu0 0
        %1510 = vmatpush2.bf16.msra.mxu0 0
        %1511 = vmatprep.mubr.bf16.mxu0 0
        %1512 = vmatmul.mubr.bf16.gmra.mxu0 %v1477
        %v1513 = vpop.f32.mrf.mxu0
        %v1514 = vadd.f32 0.0, %v1513
        %v1515 = vpop.f32.mrf.mxu0
        %v1516 = vpop.f32.mrf.mxu0
        %v1517 = vpop.f32.mrf.mxu0
        %1518 = vdwg.mxu0
        %v1523 = vunpack.c.l.b16 %v1226
        %v1524 = vunpack.c.l.b16 %v1227
        %v1525 = vunpack.c.l.b16 %v1228
        %v1526 = vunpack.c.l.b16 %v1229
        %v1527 = vpack.c.b16 %v1524, %v1523
        %v1528 = vpack.c.b16 %v1526, %v1525
        %v1532 = vsel %vm1242, %v1349, 0
        %1534 = vmatprep.subr.bf16.mxu0 0
        %1535 = vmatpush1.bf16.msra.mxu0 0
        %1536 = vmatprep.subr.bf16.mxu0 0
        %1537 = vmatpush1.bf16.msra.mxu0 0
        %1538 = vmatprep.subr.bf16.mxu0 0
        %1539 = vmatpush1.bf16.msra.mxu0 0
        %1540 = vmatprep.subr.bf16.mxu0 0
        %1541 = vmatpush1.bf16.msra.mxu0 0
        %1542 = vmatprep.subr.bf16.mxu0 0
        %1543 = vmatpush1.bf16.msra.mxu0 0
        %1544 = vmatprep.subr.bf16.mxu0 0
        %1545 = vmatpush1.bf16.msra.mxu0 0
        %1546 = vmatprep.subr.bf16.mxu0 0
        %1547 = vmatpush1.bf16.msra.mxu0 %v1528
        %1548 = vmatprep.subr.bf16.mxu0 0
        %1549 = vmatpush1.bf16.msra.mxu0 %v1527
        %1550 = vmatprep.subr.bf16.mxu0 0
        %1551 = vmatpush2.bf16.msra.mxu0 0
        %1552 = vmatprep.subr.bf16.mxu0 0
        %1553 = vmatpush2.bf16.msra.mxu0 0
        %1554 = vmatprep.subr.bf16.mxu0 0
        %1555 = vmatpush2.bf16.msra.mxu0 0
        %1556 = vmatprep.subr.bf16.mxu0 0
        %1557 = vmatpush2.bf16.msra.mxu0 0
        %1558 = vmatprep.subr.bf16.mxu0 0
        %1559 = vmatpush2.bf16.msra.mxu0 0
        %1560 = vmatprep.subr.bf16.mxu0 0
        %1561 = vmatpush2.bf16.msra.mxu0 0
        %1562 = vmatprep.subr.bf16.mxu0 0
        %1563 = vmatpush2.bf16.msra.mxu0 0
        %1564 = vmatprep.subr.bf16.mxu0 0
        %1565 = vmatpush2.bf16.msra.mxu0 0
        %1566 = vmatprep.mubr.bf16.mxu0 0
        %1567 = vmatmul.mubr.bf16.gmra.mxu0 %v1532
        %v1568 = vpop.f32.mrf.mxu0
        %v1569 = vadd.f32 %v1514, %v1568
        %v1570 = vpop.f32.mrf.mxu0
        %v1571 = vpop.f32.mrf.mxu0
        %v1572 = vpop.f32.mrf.mxu0
        %1573 = vdwg.mxu0
        %1574 = vrot.lane.b32.xlu0 %v1223, 64
        %v1575 = vpop.permute.xlu0 %1574
        %1576 = vrot.lane.b32.xlu0 %v1224, 64
        %v1577 = vpop.permute.xlu0 %1576
        %v1579 = vsel %vm1242, %v1575, 0
        %v1582 = vsel %vm1242, %v1577, 0
        %1584 = vmatprep.subr.bf16.mxu0 0
        %1585 = vmatpush1.bf16.xpose.msra.mxu0 0
        %1586 = vmatprep.subr.bf16.mxu0 0
        %1587 = vmatpush1.bf16.xpose.msra.mxu0 0
        %1588 = vmatprep.subr.bf16.mxu0 0
        %1589 = vmatpush1.bf16.xpose.msra.mxu0 0
        %1590 = vmatprep.subr.bf16.mxu0 0
        %1591 = vmatpush1.bf16.xpose.msra.mxu0 0
        %1592 = vmatprep.subr.bf16.mxu0 0
        %1593 = vmatpush1.bf16.xpose.msra.mxu0 0
        %1594 = vmatprep.subr.bf16.mxu0 0
        %1595 = vmatpush1.bf16.xpose.msra.mxu0 0
        %1596 = vmatprep.subr.bf16.mxu0 0
        %1597 = vmatpush1.bf16.xpose.msra.mxu0 0
        %1598 = vmatprep.subr.bf16.mxu0 0
        %1599 = vmatpush1.bf16.xpose.msra.mxu0 %v1582
        %1600 = vmatprep.subr.bf16.mxu0 0
        %1601 = vmatpush2.bf16.xpose.msra.mxu0 0
        %1602 = vmatprep.subr.bf16.mxu0 0
        %1603 = vmatpush2.bf16.xpose.msra.mxu0 0
        %1604 = vmatprep.subr.bf16.mxu0 0
        %1605 = vmatpush2.bf16.xpose.msra.mxu0 0
        %1606 = vmatprep.subr.bf16.mxu0 0
        %1607 = vmatpush2.bf16.xpose.msra.mxu0 0
        %1608 = vmatprep.subr.bf16.mxu0 0
        %1609 = vmatpush2.bf16.xpose.msra.mxu0 0
        %1610 = vmatprep.subr.bf16.mxu0 0
        %1611 = vmatpush2.bf16.xpose.msra.mxu0 0
        %1612 = vmatprep.subr.bf16.mxu0 0
        %1613 = vmatpush2.bf16.xpose.msra.mxu0 0
        %1614 = vmatprep.subr.bf16.mxu0 0
        %1615 = vmatpush2.bf16.xpose.msra.mxu0 0
        %1616 = vmatprep.mubr.bf16.mxu0 0
        %1617 = vmatmul.mubr.bf16.gmra.mxu0 %v1579
        %v1618 = vpop.f32.mrf.mxu0
        %v1619 = vadd.f32 %v962, %v1618
        %v1620 = vpop.f32.mrf.mxu0
        %v1621 = vpop.f32.mrf.mxu0
        %v1622 = vpop.f32.mrf.mxu0
        %1623 = vdwg.mxu0
        %v1624 = vsel %vm1289, %v1619, -inf
        %1625 = vmax.xlane.f32.xlu0 %v1624
        %v1626 = vpop.xlane.xlu0 %1625
        %v1627 = vsub.f32 %v1619, %v1626
        %v1628 = vmul.f32 %v1627, 1.442695
        %v1629 = vpow.pop %v1628
        %v1630 = vsel %vm1289, %v1629, 0.0
        %1631 = vadd.xlane.f32.xlu0 %v1630
        %v1632 = vpop.xlane.xlu0 %1631
        %v1633 = vrcp.pop %v1632
        %v1634 = vmul.f32 %v1629, %v1633
        %v1635 = vpack.c.bf16 %v1634, %v1634
        %1636 = vrot.lane.b32.xlu0 %v1225, 64
        %v1637 = vpop.permute.xlu0 %1636
        %v1639 = vsel %vm1289, %v1635, 0
        %v1642 = vsel %vm1305, %v1637, 0
        %1644 = vmatprep.subr.bf16.mxu0 0
        %1645 = vmatpush1.bf16.msra.mxu0 0
        %1646 = vmatprep.subr.bf16.mxu0 0
        %1647 = vmatpush1.bf16.msra.mxu0 0
        %1648 = vmatprep.subr.bf16.mxu0 0
        %1649 = vmatpush1.bf16.msra.mxu0 0
        %1650 = vmatprep.subr.bf16.mxu0 0
        %1651 = vmatpush1.bf16.msra.mxu0 0
        %1652 = vmatprep.subr.bf16.mxu0 0
        %1653 = vmatpush1.bf16.msra.mxu0 0
        %1654 = vmatprep.subr.bf16.mxu0 0
        %1655 = vmatpush1.bf16.msra.mxu0 0
        %1656 = vmatprep.subr.bf16.mxu0 0
        %1657 = vmatpush1.bf16.msra.mxu0 0
        %1658 = vmatprep.subr.bf16.mxu0 0
        %1659 = vmatpush1.bf16.msra.mxu0 %v1642
        %1660 = vmatprep.subr.bf16.mxu0 0
        %1661 = vmatpush2.bf16.msra.mxu0 0
        %1662 = vmatprep.subr.bf16.mxu0 0
        %1663 = vmatpush2.bf16.msra.mxu0 0
        %1664 = vmatprep.subr.bf16.mxu0 0
        %1665 = vmatpush2.bf16.msra.mxu0 0
        %1666 = vmatprep.subr.bf16.mxu0 0
        %1667 = vmatpush2.bf16.msra.mxu0 0
        %1668 = vmatprep.subr.bf16.mxu0 0
        %1669 = vmatpush2.bf16.msra.mxu0 0
        %1670 = vmatprep.subr.bf16.mxu0 0
        %1671 = vmatpush2.bf16.msra.mxu0 0
        %1672 = vmatprep.subr.bf16.mxu0 0
        %1673 = vmatpush2.bf16.msra.mxu0 0
        %1674 = vmatprep.subr.bf16.mxu0 0
        %1675 = vmatpush2.bf16.msra.mxu0 0
        %1676 = vmatprep.mubr.bf16.mxu0 0
        %1677 = vmatmul.mubr.bf16.gmra.mxu0 %v1639
        %v1678 = vpop.f32.mrf.mxu0
        %v1679 = vadd.f32 0.0, %v1678
        %v1680 = vpop.f32.mrf.mxu0
        %v1681 = vpop.f32.mrf.mxu0
        %v1682 = vpop.f32.mrf.mxu0
        %1683 = vdwg.mxu0
        %v1684 = vpack.c.bf16 %v1679, %v1679
        %v1689 = vunpack.c.l.b16 %v1234
        %v1690 = vunpack.c.l.b16 %v1235
        %v1691 = vunpack.c.l.b16 %v1236
        %v1692 = vunpack.c.l.b16 %v1237
        %v1693 = vpack.c.b16 %v1690, %v1689
        %v1694 = vpack.c.b16 %v1692, %v1691
        %v1698 = vsel %vm1242, %v1684, 0
        %1700 = vmatprep.subr.bf16.mxu0 0
        %1701 = vmatpush1.bf16.msra.mxu0 0
        %1702 = vmatprep.subr.bf16.mxu0 0
        %1703 = vmatpush1.bf16.msra.mxu0 0
        %1704 = vmatprep.subr.bf16.mxu0 0
        %1705 = vmatpush1.bf16.msra.mxu0 0
        %1706 = vmatprep.subr.bf16.mxu0 0
        %1707 = vmatpush1.bf16.msra.mxu0 0
        %1708 = vmatprep.subr.bf16.mxu0 0
        %1709 = vmatpush1.bf16.msra.mxu0 0
        %1710 = vmatprep.subr.bf16.mxu0 0
        %1711 = vmatpush1.bf16.msra.mxu0 0
        %1712 = vmatprep.subr.bf16.mxu0 0
        %1713 = vmatpush1.bf16.msra.mxu0 %v1694
        %1714 = vmatprep.subr.bf16.mxu0 0
        %1715 = vmatpush1.bf16.msra.mxu0 %v1693
        %1716 = vmatprep.subr.bf16.mxu0 0
        %1717 = vmatpush2.bf16.msra.mxu0 0
        %1718 = vmatprep.subr.bf16.mxu0 0
        %1719 = vmatpush2.bf16.msra.mxu0 0
        %1720 = vmatprep.subr.bf16.mxu0 0
        %1721 = vmatpush2.bf16.msra.mxu0 0
        %1722 = vmatprep.subr.bf16.mxu0 0
        %1723 = vmatpush2.bf16.msra.mxu0 0
        %1724 = vmatprep.subr.bf16.mxu0 0
        %1725 = vmatpush2.bf16.msra.mxu0 0
        %1726 = vmatprep.subr.bf16.mxu0 0
        %1727 = vmatpush2.bf16.msra.mxu0 0
        %1728 = vmatprep.subr.bf16.mxu0 0
        %1729 = vmatpush2.bf16.msra.mxu0 0
        %1730 = vmatprep.subr.bf16.mxu0 0
        %1731 = vmatpush2.bf16.msra.mxu0 0
        %1732 = vmatprep.mubr.bf16.mxu0 0
        %1733 = vmatmul.mubr.bf16.gmra.mxu0 %v1698
        %v1734 = vpop.f32.mrf.mxu0
        %v1735 = vadd.f32 0.0, %v1734
        %v1736 = vpop.f32.mrf.mxu0
        %v1737 = vpop.f32.mrf.mxu0
        %v1738 = vpop.f32.mrf.mxu0
        %1739 = vdwg.mxu0
        %v1740 = vadd.f32 %v1569, %v1735
        %1741 = vrot.lane.b32.xlu0 %v1223, 32
        %v1742 = vpop.permute.xlu0 %1741
        %1743 = vrot.lane.b32.xlu0 %v1224, 32
        %v1744 = vpop.permute.xlu0 %1743
        %v1746 = vsel %vm1242, %v1742, 0
        %v1749 = vsel %vm1242, %v1744, 0
        %1751 = vmatprep.subr.bf16.mxu0 0
        %1752 = vmatpush1.bf16.xpose.msra.mxu0 0
        %1753 = vmatprep.subr.bf16.mxu0 0
        %1754 = vmatpush1.bf16.xpose.msra.mxu0 0
        %1755 = vmatprep.subr.bf16.mxu0 0
        %1756 = vmatpush1.bf16.xpose.msra.mxu0 0
        %1757 = vmatprep.subr.bf16.mxu0 0
        %1758 = vmatpush1.bf16.xpose.msra.mxu0 0
        %1759 = vmatprep.subr.bf16.mxu0 0
        %1760 = vmatpush1.bf16.xpose.msra.mxu0 0
        %1761 = vmatprep.subr.bf16.mxu0 0
        %1762 = vmatpush1.bf16.xpose.msra.mxu0 0
        %1763 = vmatprep.subr.bf16.mxu0 0
        %1764 = vmatpush1.bf16.xpose.msra.mxu0 0
        %1765 = vmatprep.subr.bf16.mxu0 0
        %1766 = vmatpush1.bf16.xpose.msra.mxu0 %v1749
        %1767 = vmatprep.subr.bf16.mxu0 0
        %1768 = vmatpush2.bf16.xpose.msra.mxu0 0
        %1769 = vmatprep.subr.bf16.mxu0 0
        %1770 = vmatpush2.bf16.xpose.msra.mxu0 0
        %1771 = vmatprep.subr.bf16.mxu0 0
        %1772 = vmatpush2.bf16.xpose.msra.mxu0 0
        %1773 = vmatprep.subr.bf16.mxu0 0
        %1774 = vmatpush2.bf16.xpose.msra.mxu0 0
        %1775 = vmatprep.subr.bf16.mxu0 0
        %1776 = vmatpush2.bf16.xpose.msra.mxu0 0
        %1777 = vmatprep.subr.bf16.mxu0 0
        %1778 = vmatpush2.bf16.xpose.msra.mxu0 0
        %1779 = vmatprep.subr.bf16.mxu0 0
        %1780 = vmatpush2.bf16.xpose.msra.mxu0 0
        %1781 = vmatprep.subr.bf16.mxu0 0
        %1782 = vmatpush2.bf16.xpose.msra.mxu0 0
        %1783 = vmatprep.mubr.bf16.mxu0 0
        %1784 = vmatmul.mubr.bf16.gmra.mxu0 %v1746
        %v1785 = vpop.f32.mrf.mxu0
        %v1786 = vadd.f32 %v962, %v1785
        %v1787 = vpop.f32.mrf.mxu0
        %v1788 = vpop.f32.mrf.mxu0
        %v1789 = vpop.f32.mrf.mxu0
        %1790 = vdwg.mxu0
        %v1791 = vsel %vm1289, %v1786, -inf
        %1792 = vmax.xlane.f32.xlu0 %v1791
        %v1793 = vpop.xlane.xlu0 %1792
        %v1794 = vsub.f32 %v1786, %v1793
        %v1795 = vmul.f32 %v1794, 1.442695
        %v1796 = vpow.pop %v1795
        %v1797 = vsel %vm1289, %v1796, 0.0
        %1798 = vadd.xlane.f32.xlu0 %v1797
        %v1799 = vpop.xlane.xlu0 %1798
        %v1800 = vrcp.pop %v1799
        %v1801 = vmul.f32 %v1796, %v1800
        %v1802 = vpack.c.bf16 %v1801, %v1801
        %1803 = vrot.lane.b32.xlu0 %v1225, 32
        %v1804 = vpop.permute.xlu0 %1803
        %v1806 = vsel %vm1289, %v1802, 0
        %v1809 = vsel %vm1305, %v1804, 0
        %1811 = vmatprep.subr.bf16.mxu0 0
        %1812 = vmatpush1.bf16.msra.mxu0 0
        %1813 = vmatprep.subr.bf16.mxu0 0
        %1814 = vmatpush1.bf16.msra.mxu0 0
        %1815 = vmatprep.subr.bf16.mxu0 0
        %1816 = vmatpush1.bf16.msra.mxu0 0
        %1817 = vmatprep.subr.bf16.mxu0 0
        %1818 = vmatpush1.bf16.msra.mxu0 0
        %1819 = vmatprep.subr.bf16.mxu0 0
        %1820 = vmatpush1.bf16.msra.mxu0 0
        %1821 = vmatprep.subr.bf16.mxu0 0
        %1822 = vmatpush1.bf16.msra.mxu0 0
        %1823 = vmatprep.subr.bf16.mxu0 0
        %1824 = vmatpush1.bf16.msra.mxu0 0
        %1825 = vmatprep.subr.bf16.mxu0 0
        %1826 = vmatpush1.bf16.msra.mxu0 %v1809
        %1827 = vmatprep.subr.bf16.mxu0 0
        %1828 = vmatpush2.bf16.msra.mxu0 0
        %1829 = vmatprep.subr.bf16.mxu0 0
        %1830 = vmatpush2.bf16.msra.mxu0 0
        %1831 = vmatprep.subr.bf16.mxu0 0
        %1832 = vmatpush2.bf16.msra.mxu0 0
        %1833 = vmatprep.subr.bf16.mxu0 0
        %1834 = vmatpush2.bf16.msra.mxu0 0
        %1835 = vmatprep.subr.bf16.mxu0 0
        %1836 = vmatpush2.bf16.msra.mxu0 0
        %1837 = vmatprep.subr.bf16.mxu0 0
        %1838 = vmatpush2.bf16.msra.mxu0 0
        %1839 = vmatprep.subr.bf16.mxu0 0
        %1840 = vmatpush2.bf16.msra.mxu0 0
        %1841 = vmatprep.subr.bf16.mxu0 0
        %1842 = vmatpush2.bf16.msra.mxu0 0
        %1843 = vmatprep.mubr.bf16.mxu0 0
        %1844 = vmatmul.mubr.bf16.gmra.mxu0 %v1806
        %v1845 = vpop.f32.mrf.mxu0
        %v1846 = vadd.f32 0.0, %v1845
        %v1847 = vpop.f32.mrf.mxu0
        %v1848 = vpop.f32.mrf.mxu0
        %v1849 = vpop.f32.mrf.mxu0
        %1850 = vdwg.mxu0
        %v1851 = vpack.c.bf16 %v1846, %v1846
        %v1856 = vunpack.c.l.b16 %v1238
        %v1857 = vunpack.c.l.b16 %v1239
        %v1858 = vunpack.c.l.b16 %v1240
        %v1859 = vunpack.c.l.b16 %v1241
        %v1860 = vpack.c.b16 %v1857, %v1856
        %v1861 = vpack.c.b16 %v1859, %v1858
        %v1865 = vsel %vm1242, %v1851, 0
        %1867 = vmatprep.subr.bf16.mxu0 0
        %1868 = vmatpush1.bf16.msra.mxu0 0
        %1869 = vmatprep.subr.bf16.mxu0 0
        %1870 = vmatpush1.bf16.msra.mxu0 0
        %1871 = vmatprep.subr.bf16.mxu0 0
        %1872 = vmatpush1.bf16.msra.mxu0 0
        %1873 = vmatprep.subr.bf16.mxu0 0
        %1874 = vmatpush1.bf16.msra.mxu0 0
        %1875 = vmatprep.subr.bf16.mxu0 0
        %1876 = vmatpush1.bf16.msra.mxu0 0
        %1877 = vmatprep.subr.bf16.mxu0 0
        %1878 = vmatpush1.bf16.msra.mxu0 0
        %1879 = vmatprep.subr.bf16.mxu0 0
        %1880 = vmatpush1.bf16.msra.mxu0 %v1861
        %1881 = vmatprep.subr.bf16.mxu0 0
        %1882 = vmatpush1.bf16.msra.mxu0 %v1860
        %1883 = vmatprep.subr.bf16.mxu0 0
        %1884 = vmatpush2.bf16.msra.mxu0 0
        %1885 = vmatprep.subr.bf16.mxu0 0
        %1886 = vmatpush2.bf16.msra.mxu0 0
        %1887 = vmatprep.subr.bf16.mxu0 0
        %1888 = vmatpush2.bf16.msra.mxu0 0
        %1889 = vmatprep.subr.bf16.mxu0 0
        %1890 = vmatpush2.bf16.msra.mxu0 0
        %1891 = vmatprep.subr.bf16.mxu0 0
        %1892 = vmatpush2.bf16.msra.mxu0 0
        %1893 = vmatprep.subr.bf16.mxu0 0
        %1894 = vmatpush2.bf16.msra.mxu0 0
        %1895 = vmatprep.subr.bf16.mxu0 0
        %1896 = vmatpush2.bf16.msra.mxu0 0
        %1897 = vmatprep.subr.bf16.mxu0 0
        %1898 = vmatpush2.bf16.msra.mxu0 0
        %1899 = vmatprep.mubr.bf16.mxu0 0
        %1900 = vmatmul.mubr.bf16.gmra.mxu0 %v1865
        %v1901 = vpop.f32.mrf.mxu0
        %v1902 = vadd.f32 0.0, %v1901
        %v1903 = vpop.f32.mrf.mxu0
        %v1904 = vpop.f32.mrf.mxu0
        %v1905 = vpop.f32.mrf.mxu0
        %1906 = vdwg.mxu0
        %v1907 = vadd.f32 %v1740, %v1902
        %v1908 = vld [vmem:[#allocation13] sm:$0x1]
        %v1910 = vlaneseq
        %v1911 = vshrl.u32 %v1910, 7
        %v1912 = vsub.s32 0, %v1911
        %v1913 = vrot.slane %v1908, %v1912
        %v1915 = vadd.f32 %v1907, %v1913
        %v1916 = vadd.f32 %v1915, %v954
        %v1917 = vld [vmem:[#allocation15] sm:$0x1]
        %v1918 = vld [vmem:[#allocation16] sm:$0x1]
        %1919 = vadd.xlane.f32.xlu0 %v1916
        %v1920 = vpop.xlane.xlu0 %1919
        %v1921 = vmul.f32 %v1920, %v931
        %v1922 = vsub.f32 %v1916, %v1921
        %v1923 = vmul.f32 %v1922, %v1922
        %1924 = vadd.xlane.f32.xlu0 %v1923
        %v1925 = vpop.xlane.xlu0 %1924
        %v1926 = vmul.f32 %v1925, %v931
        %v1927 = vadd.f32 %v1926, 1e-12
        %v1928 = vrsqrt.pop %v1927
        %v1929 = vmul.f32 %v1922, %v1928
        %v1931 = vlaneseq
        %v1932 = vshrl.u32 %v1931, 7
        %v1933 = vsub.s32 0, %v1932
        %v1934 = vrot.slane %v1917, %v1933
        %v1936 = vmul.f32 %v1929, %v1934
        %v1938 = vlaneseq
        %v1939 = vshrl.u32 %v1938, 7
        %v1940 = vsub.s32 0, %v1939
        %v1941 = vrot.slane %v1918, %v1940
        %v1943 = vadd.f32 %v1936, %v1941
        %v1944 = vpack.c.bf16 %v1943, %v1943
        %v1945 = vld [vmem:[#allocation18] sm:$0xff]
        %v1946 = vld [vmem:[#allocation18 + $0x8] sm:$0xff]
        %v1947 = vld [vmem:[#allocation18 + $0x10] sm:$0xff]
        %v1948 = vld [vmem:[#allocation18 + $0x18] sm:$0xff]
        %v1949 = vld [vmem:[#allocation18 + $0x20] sm:$0xff]
        %v1950 = vld [vmem:[#allocation18 + $0x28] sm:$0xff]
        %v1951 = vld [vmem:[#allocation18 + $0x30] sm:$0xff]
        %v1952 = vld [vmem:[#allocation18 + $0x38] sm:$0xff]
        %v1953 = vld [vmem:[#allocation18 + $0x40] sm:$0xff]
        %v1954 = vld [vmem:[#allocation18 + $0x48] sm:$0xff]
        %v1955 = vld [vmem:[#allocation18 + $0x50] sm:$0xff]
        %v1956 = vld [vmem:[#allocation18 + $0x58] sm:$0xff]
        %v1957 = vld [vmem:[#allocation18 + $0x60] sm:$0xff]
        %v1958 = vld [vmem:[#allocation18 + $0x68] sm:$0xff]
        %v1959 = vld [vmem:[#allocation18 + $0x70] sm:$0xff]
        %v1960 = vld [vmem:[#allocation18 + $0x78] sm:$0xff]
        %v1961 = vld [vmem:[#allocation18 + $0x80] sm:$0xff]
        %v1962 = vld [vmem:[#allocation18 + $0x88] sm:$0xff]
        %v1963 = vld [vmem:[#allocation18 + $0x90] sm:$0xff]
        %v1964 = vld [vmem:[#allocation18 + $0x98] sm:$0xff]
        %v1965 = vld [vmem:[#allocation18 + $0xa0] sm:$0xff]
        %v1966 = vld [vmem:[#allocation18 + $0xa8] sm:$0xff]
        %v1967 = vld [vmem:[#allocation18 + $0xb0] sm:$0xff]
        %v1968 = vld [vmem:[#allocation18 + $0xb8] sm:$0xff]
        %v1969 = vld [vmem:[#allocation18 + $0xc0] sm:$0xff]
        %v1970 = vld [vmem:[#allocation18 + $0xc8] sm:$0xff]
        %v1971 = vld [vmem:[#allocation18 + $0xd0] sm:$0xff]
        %v1972 = vld [vmem:[#allocation18 + $0xd8] sm:$0xff]
        %v1973 = vld [vmem:[#allocation18 + $0xe0] sm:$0xff]
        %v1974 = vld [vmem:[#allocation18 + $0xe8] sm:$0xff]
        %v1975 = vld [vmem:[#allocation18 + $0xf0] sm:$0xff]
        %v1976 = vld [vmem:[#allocation18 + $0xf8] sm:$0xff]
        %v1977 = vld [vmem:[#allocation19] sm:$0xf]
        %v1979 = vlaneseq
        %v1980 = vshrl.u32 %v1979, 7
        %v1981 = vsub.s32 0, %v1980
        %v1982 = vrot.slane %v1977, %v1981
        %v1983 = vlaneseq
        %v1984 = vshrl.u32 %v1983, 7
        %v1985 = vsub.s32 1, %v1984
        %v1986 = vrot.slane %v1977, %v1985
        %v1987 = vlaneseq
        %v1988 = vshrl.u32 %v1987, 7
        %v1989 = vsub.s32 2, %v1988
        %v1990 = vrot.slane %v1977, %v1989
        %v1991 = vlaneseq
        %v1992 = vshrl.u32 %v1991, 7
        %v1993 = vsub.s32 3, %v1992
        %v1994 = vrot.slane %v1977, %v1993
        %v2031 = vunpack.c.l.b16 %v1945
        %v2032 = vunpack.c.h.b16 %v1945
        %v2033 = vunpack.c.l.b16 %v1946
        %v2034 = vunpack.c.h.b16 %v1946
        %v2035 = vunpack.c.l.b16 %v1947
        %v2036 = vunpack.c.h.b16 %v1947
        %v2037 = vunpack.c.l.b16 %v1948
        %v2038 = vunpack.c.h.b16 %v1948
        %v2039 = vunpack.c.l.b16 %v1949
        %v2040 = vunpack.c.h.b16 %v1949
        %v2041 = vunpack.c.l.b16 %v1950
        %v2042 = vunpack.c.h.b16 %v1950
        %v2043 = vunpack.c.l.b16 %v1951
        %v2044 = vunpack.c.h.b16 %v1951
        %v2045 = vunpack.c.l.b16 %v1952
        %v2046 = vunpack.c.h.b16 %v1952
        %v2047 = vunpack.c.l.b16 %v1953
        %v2048 = vunpack.c.h.b16 %v1953
        %v2049 = vunpack.c.l.b16 %v1954
        %v2050 = vunpack.c.h.b16 %v1954
        %v2051 = vunpack.c.l.b16 %v1955
        %v2052 = vunpack.c.h.b16 %v1955
        %v2053 = vunpack.c.l.b16 %v1956
        %v2054 = vunpack.c.h.b16 %v1956
        %v2055 = vunpack.c.l.b16 %v1957
        %v2056 = vunpack.c.h.b16 %v1957
        %v2057 = vunpack.c.l.b16 %v1958
        %v2058 = vunpack.c.h.b16 %v1958
        %v2059 = vunpack.c.l.b16 %v1959
        %v2060 = vunpack.c.h.b16 %v1959
        %v2061 = vunpack.c.l.b16 %v1960
        %v2062 = vunpack.c.h.b16 %v1960
        %v2063 = vunpack.c.l.b16 %v1961
        %v2064 = vunpack.c.h.b16 %v1961
        %v2065 = vunpack.c.l.b16 %v1962
        %v2066 = vunpack.c.h.b16 %v1962
        %v2067 = vunpack.c.l.b16 %v1963
        %v2068 = vunpack.c.h.b16 %v1963
        %v2069 = vunpack.c.l.b16 %v1964
        %v2070 = vunpack.c.h.b16 %v1964
        %v2071 = vunpack.c.l.b16 %v1965
        %v2072 = vunpack.c.h.b16 %v1965
        %v2073 = vunpack.c.l.b16 %v1966
        %v2074 = vunpack.c.h.b16 %v1966
        %v2075 = vunpack.c.l.b16 %v1967
        %v2076 = vunpack.c.h.b16 %v1967
        %v2077 = vunpack.c.l.b16 %v1968
        %v2078 = vunpack.c.h.b16 %v1968
        %v2079 = vunpack.c.l.b16 %v1969
        %v2080 = vunpack.c.h.b16 %v1969
        %v2081 = vunpack.c.l.b16 %v1970
        %v2082 = vunpack.c.h.b16 %v1970
        %v2083 = vunpack.c.l.b16 %v1971
        %v2084 = vunpack.c.h.b16 %v1971
        %v2085 = vunpack.c.l.b16 %v1972
        %v2086 = vunpack.c.h.b16 %v1972
        %v2087 = vunpack.c.l.b16 %v1973
        %v2088 = vunpack.c.h.b16 %v1973
        %v2089 = vunpack.c.l.b16 %v1974
        %v2090 = vunpack.c.h.b16 %v1974
        %v2091 = vunpack.c.l.b16 %v1975
        %v2092 = vunpack.c.h.b16 %v1975
        %v2093 = vunpack.c.l.b16 %v1976
        %v2094 = vunpack.c.h.b16 %v1976
        %v2095 = vpack.c.b16 %v2035, %v2031
        %v2096 = vpack.c.b16 %v2036, %v2032
        %v2097 = vpack.c.b16 %v2037, %v2033
        %v2098 = vpack.c.b16 %v2038, %v2034
        %v2099 = vpack.c.b16 %v2043, %v2039
        %v2100 = vpack.c.b16 %v2044, %v2040
        %v2101 = vpack.c.b16 %v2045, %v2041
        %v2102 = vpack.c.b16 %v2046, %v2042
        %v2103 = vpack.c.b16 %v2051, %v2047
        %v2104 = vpack.c.b16 %v2052, %v2048
        %v2105 = vpack.c.b16 %v2053, %v2049
        %v2106 = vpack.c.b16 %v2054, %v2050
        %v2107 = vpack.c.b16 %v2059, %v2055
        %v2108 = vpack.c.b16 %v2060, %v2056
        %v2109 = vpack.c.b16 %v2061, %v2057
        %v2110 = vpack.c.b16 %v2062, %v2058
        %v2111 = vpack.c.b16 %v2067, %v2063
        %v2112 = vpack.c.b16 %v2068, %v2064
        %v2113 = vpack.c.b16 %v2069, %v2065
        %v2114 = vpack.c.b16 %v2070, %v2066
        %v2115 = vpack.c.b16 %v2075, %v2071
        %v2116 = vpack.c.b16 %v2076, %v2072
        %v2117 = vpack.c.b16 %v2077, %v2073
        %v2118 = vpack.c.b16 %v2078, %v2074
        %v2119 = vpack.c.b16 %v2083, %v2079
        %v2120 = vpack.c.b16 %v2084, %v2080
        %v2121 = vpack.c.b16 %v2085, %v2081
        %v2122 = vpack.c.b16 %v2086, %v2082
        %v2123 = vpack.c.b16 %v2091, %v2087
        %v2124 = vpack.c.b16 %v2092, %v2088
        %v2125 = vpack.c.b16 %v2093, %v2089
        %v2126 = vpack.c.b16 %v2094, %v2090
        %2159 = vmatprep.subr.bf16.mxu0 %v2124
        %2160 = vmatpush1.bf16.msra.mxu0 %v2123
        %2161 = vmatprep.subr.bf16.mxu0 %v2120
        %2162 = vmatpush1.bf16.msra.mxu0 %v2119
        %2163 = vmatprep.subr.bf16.mxu0 %v2116
        %2164 = vmatpush1.bf16.msra.mxu0 %v2115
        %2165 = vmatprep.subr.bf16.mxu0 %v2112
        %2166 = vmatpush1.bf16.msra.mxu0 %v2111
        %2167 = vmatprep.subr.bf16.mxu0 %v2108
        %2168 = vmatpush1.bf16.msra.mxu0 %v2107
        %2169 = vmatprep.subr.bf16.mxu0 %v2104
        %2170 = vmatpush1.bf16.msra.mxu0 %v2103
        %2171 = vmatprep.subr.bf16.mxu0 %v2100
        %2172 = vmatpush1.bf16.msra.mxu0 %v2099
        %2173 = vmatprep.subr.bf16.mxu0 %v2096
        %2174 = vmatpush1.bf16.msra.mxu0 %v2095
        %2175 = vmatprep.subr.bf16.mxu0 0
        %2176 = vmatpush2.bf16.msra.mxu0 0
        %2177 = vmatprep.subr.bf16.mxu0 0
        %2178 = vmatpush2.bf16.msra.mxu0 0
        %2179 = vmatprep.subr.bf16.mxu0 0
        %2180 = vmatpush2.bf16.msra.mxu0 0
        %2181 = vmatprep.subr.bf16.mxu0 0
        %2182 = vmatpush2.bf16.msra.mxu0 0
        %2183 = vmatprep.subr.bf16.mxu0 0
        %2184 = vmatpush2.bf16.msra.mxu0 0
        %2185 = vmatprep.subr.bf16.mxu0 0
        %2186 = vmatpush2.bf16.msra.mxu0 0
        %2187 = vmatprep.subr.bf16.mxu0 0
        %2188 = vmatpush2.bf16.msra.mxu0 0
        %2189 = vmatprep.subr.bf16.mxu0 0
        %2190 = vmatpush2.bf16.msra.mxu0 0
        %2191 = vmatprep.mubr.bf16.mxu0 0
        %2192 = vmatmul.mubr.bf16.gmra.mxu0 %v1944
        %v2193 = vpop.f32.mrf.mxu0
        %v2194 = vadd.f32 %v1982, %v2193
        %v2195 = vpop.f32.mrf.mxu0
        %v2196 = vadd.f32 %v1986, %v2195
        %v2197 = vpop.f32.mrf.mxu0
        %v2198 = vpop.f32.mrf.mxu0
        %2199 = vdwg.mxu0
        %2200 = vmatprep.subr.bf16.mxu0 %v2126
        %2201 = vmatpush1.bf16.msra.mxu0 %v2125
        %2202 = vmatprep.subr.bf16.mxu0 %v2122
        %2203 = vmatpush1.bf16.msra.mxu0 %v2121
        %2204 = vmatprep.subr.bf16.mxu0 %v2118
        %2205 = vmatpush1.bf16.msra.mxu0 %v2117
        %2206 = vmatprep.subr.bf16.mxu0 %v2114
        %2207 = vmatpush1.bf16.msra.mxu0 %v2113
        %2208 = vmatprep.subr.bf16.mxu0 %v2110
        %2209 = vmatpush1.bf16.msra.mxu0 %v2109
        %2210 = vmatprep.subr.bf16.mxu0 %v2106
        %2211 = vmatpush1.bf16.msra.mxu0 %v2105
        %2212 = vmatprep.subr.bf16.mxu0 %v2102
        %2213 = vmatpush1.bf16.msra.mxu0 %v2101
        %2214 = vmatprep.subr.bf16.mxu0 %v2098
        %2215 = vmatpush1.bf16.msra.mxu0 %v2097
        %2216 = vmatprep.subr.bf16.mxu0 0
        %2217 = vmatpush2.bf16.msra.mxu0 0
        %2218 = vmatprep.subr.bf16.mxu0 0
        %2219 = vmatpush2.bf16.msra.mxu0 0
        %2220 = vmatprep.subr.bf16.mxu0 0
        %2221 = vmatpush2.bf16.msra.mxu0 0
        %2222 = vmatprep.subr.bf16.mxu0 0
        %2223 = vmatpush2.bf16.msra.mxu0 0
        %2224 = vmatprep.subr.bf16.mxu0 0
        %2225 = vmatpush2.bf16.msra.mxu0 0
        %2226 = vmatprep.subr.bf16.mxu0 0
        %2227 = vmatpush2.bf16.msra.mxu0 0
        %2228 = vmatprep.subr.bf16.mxu0 0
        %2229 = vmatpush2.bf16.msra.mxu0 0
        %2230 = vmatprep.subr.bf16.mxu0 0
        %2231 = vmatpush2.bf16.msra.mxu0 0
        %2232 = vmatprep.mubr.bf16.mxu0 0
        %2233 = vmatmul.mubr.bf16.gmra.mxu0 %v1944
        %v2234 = vpop.f32.mrf.mxu0
        %v2235 = vadd.f32 %v1990, %v2234
        %v2236 = vpop.f32.mrf.mxu0
        %v2237 = vadd.f32 %v1994, %v2236
        %v2238 = vpop.f32.mrf.mxu0
        %v2239 = vpop.f32.mrf.mxu0
        %2240 = vdwg.mxu0
        %v2241 = vmul.f32 %v2194, 0.5
        %v2242 = vmul.f32 %v2196, 0.5
        %v2243 = vmul.f32 %v2235, 0.5
        %v2244 = vmul.f32 %v2237, 0.5
        %v2245 = vmul.f32 %v2194, 0.044715
        %v2246 = vmul.f32 %v2196, 0.044715
        %v2247 = vmul.f32 %v2235, 0.044715
        %v2248 = vmul.f32 %v2237, 0.044715
        %v2249 = vmul.f32 %v2245, %v2194
        %v2250 = vmul.f32 %v2246, %v2196
        %v2251 = vmul.f32 %v2247, %v2235
        %v2252 = vmul.f32 %v2248, %v2237
        %v2253 = vmul.f32 %v2249, %v2194
        %v2254 = vmul.f32 %v2250, %v2196
        %v2255 = vmul.f32 %v2251, %v2235
        %v2256 = vmul.f32 %v2252, %v2237
        %v2257 = vadd.f32 %v2194, %v2253
        %v2258 = vadd.f32 %v2196, %v2254
        %v2259 = vadd.f32 %v2235, %v2255
        %v2260 = vadd.f32 %v2237, %v2256
        %v2261 = vmul.f32 %v2257, 0.7978846
        %v2262 = vmul.f32 %v2258, 0.7978846
        %v2263 = vmul.f32 %v2259, 0.7978846
        %v2264 = vmul.f32 %v2260, 0.7978846
        %v2265 = vtanh.pop %v2261
        %v2266 = vtanh.pop %v2262
        %v2267 = vtanh.pop %v2263
        %v2268 = vtanh.pop %v2264
        %v2269 = vadd.f32 %v2265, 1.0
        %v2270 = vadd.f32 %v2266, 1.0
        %v2271 = vadd.f32 %v2267, 1.0
        %v2272 = vadd.f32 %v2268, 1.0
        %v2273 = vmul.f32 %v2241, %v2269
        %v2274 = vmul.f32 %v2242, %v2270
        %v2275 = vmul.f32 %v2243, %v2271
        %v2276 = vmul.f32 %v2244, %v2272
        %v2277 = vpack.c.bf16 %v2273, %v2273
        %v2278 = vpack.c.bf16 %v2274, %v2274
        %v2279 = vpack.c.bf16 %v2275, %v2275
        %v2280 = vpack.c.bf16 %v2276, %v2276
        %v2281 = vld [vmem:[#allocation21] sm:$0xf]
        %v2282 = vld [vmem:[#allocation21 + $0x4] sm:$0xf]
        %v2283 = vld [vmem:[#allocation21 + $0x8] sm:$0xf]
        %v2284 = vld [vmem:[#allocation21 + $0xc] sm:$0xf]
        %v2285 = vld [vmem:[#allocation21 + $0x10] sm:$0xf]
        %v2286 = vld [vmem:[#allocation21 + $0x14] sm:$0xf]
        %v2287 = vld [vmem:[#allocation21 + $0x18] sm:$0xf]
        %v2288 = vld [vmem:[#allocation21 + $0x1c] sm:$0xf]
        %v2289 = vld [vmem:[#allocation21 + $0x20] sm:$0xf]
        %v2290 = vld [vmem:[#allocation21 + $0x24] sm:$0xf]
        %v2291 = vld [vmem:[#allocation21 + $0x28] sm:$0xf]
        %v2292 = vld [vmem:[#allocation21 + $0x2c] sm:$0xf]
        %v2293 = vld [vmem:[#allocation21 + $0x30] sm:$0xf]
        %v2294 = vld [vmem:[#allocation21 + $0x34] sm:$0xf]
        %v2295 = vld [vmem:[#allocation21 + $0x38] sm:$0xf]
        %v2296 = vld [vmem:[#allocation21 + $0x3c] sm:$0xf]
        %v2297 = vld [vmem:[#allocation21 + $0x40] sm:$0xf]
        %v2298 = vld [vmem:[#allocation21 + $0x44] sm:$0xf]
        %v2299 = vld [vmem:[#allocation21 + $0x48] sm:$0xf]
        %v2300 = vld [vmem:[#allocation21 + $0x4c] sm:$0xf]
        %v2301 = vld [vmem:[#allocation21 + $0x50] sm:$0xf]
        %v2302 = vld [vmem:[#allocation21 + $0x54] sm:$0xf]
        %v2303 = vld [vmem:[#allocation21 + $0x58] sm:$0xf]
        %v2304 = vld [vmem:[#allocation21 + $0x5c] sm:$0xf]
        %v2305 = vld [vmem:[#allocation21 + $0x60] sm:$0xf]
        %v2306 = vld [vmem:[#allocation21 + $0x64] sm:$0xf]
        %v2307 = vld [vmem:[#allocation21 + $0x68] sm:$0xf]
        %v2308 = vld [vmem:[#allocation21 + $0x6c] sm:$0xf]
        %v2309 = vld [vmem:[#allocation21 + $0x70] sm:$0xf]
        %v2310 = vld [vmem:[#allocation21 + $0x74] sm:$0xf]
        %v2311 = vld [vmem:[#allocation21 + $0x78] sm:$0xf]
        %v2312 = vld [vmem:[#allocation21 + $0x7c] sm:$0xf]
        %v2313 = vld [vmem:[#allocation21 + $0x80] sm:$0xf]
        %v2314 = vld [vmem:[#allocation21 + $0x84] sm:$0xf]
        %v2315 = vld [vmem:[#allocation21 + $0x88] sm:$0xf]
        %v2316 = vld [vmem:[#allocation21 + $0x8c] sm:$0xf]
        %v2317 = vld [vmem:[#allocation21 + $0x90] sm:$0xf]
        %v2318 = vld [vmem:[#allocation21 + $0x94] sm:$0xf]
        %v2319 = vld [vmem:[#allocation21 + $0x98] sm:$0xf]
        %v2320 = vld [vmem:[#allocation21 + $0x9c] sm:$0xf]
        %v2321 = vld [vmem:[#allocation21 + $0xa0] sm:$0xf]
        %v2322 = vld [vmem:[#allocation21 + $0xa4] sm:$0xf]
        %v2323 = vld [vmem:[#allocation21 + $0xa8] sm:$0xf]
        %v2324 = vld [vmem:[#allocation21 + $0xac] sm:$0xf]
        %v2325 = vld [vmem:[#allocation21 + $0xb0] sm:$0xf]
        %v2326 = vld [vmem:[#allocation21 + $0xb4] sm:$0xf]
        %v2327 = vld [vmem:[#allocation21 + $0xb8] sm:$0xf]
        %v2328 = vld [vmem:[#allocation21 + $0xbc] sm:$0xf]
        %v2329 = vld [vmem:[#allocation21 + $0xc0] sm:$0xf]
        %v2330 = vld [vmem:[#allocation21 + $0xc4] sm:$0xf]
        %v2331 = vld [vmem:[#allocation21 + $0xc8] sm:$0xf]
        %v2332 = vld [vmem:[#allocation21 + $0xcc] sm:$0xf]
        %v2333 = vld [vmem:[#allocation21 + $0xd0] sm:$0xf]
        %v2334 = vld [vmem:[#allocation21 + $0xd4] sm:$0xf]
        %v2335 = vld [vmem:[#allocation21 + $0xd8] sm:$0xf]
        %v2336 = vld [vmem:[#allocation21 + $0xdc] sm:$0xf]
        %v2337 = vld [vmem:[#allocation21 + $0xe0] sm:$0xf]
        %v2338 = vld [vmem:[#allocation21 + $0xe4] sm:$0xf]
        %v2339 = vld [vmem:[#allocation21 + $0xe8] sm:$0xf]
        %v2340 = vld [vmem:[#allocation21 + $0xec] sm:$0xf]
        %v2341 = vld [vmem:[#allocation21 + $0xf0] sm:$0xf]
        %v2342 = vld [vmem:[#allocation21 + $0xf4] sm:$0xf]
        %v2343 = vld [vmem:[#allocation21 + $0xf8] sm:$0xf]
        %v2344 = vld [vmem:[#allocation21 + $0xfc] sm:$0xf]
        %v2345 = vld [vmem:[#allocation22] sm:$0x1]
        %v2347 = vlaneseq
        %v2348 = vshrl.u32 %v2347, 7
        %v2349 = vsub.s32 0, %v2348
        %v2350 = vrot.slane %v2345, %v2349
        %v2416 = vunpack.c.l.b16 %v2281
        %v2417 = vunpack.c.l.b16 %v2282
        %v2418 = vunpack.c.l.b16 %v2283
        %v2419 = vunpack.c.l.b16 %v2284
        %v2420 = vunpack.c.l.b16 %v2285
        %v2421 = vunpack.c.l.b16 %v2286
        %v2422 = vunpack.c.l.b16 %v2287
        %v2423 = vunpack.c.l.b16 %v2288
        %v2424 = vunpack.c.l.b16 %v2289
        %v2425 = vunpack.c.l.b16 %v2290
        %v2426 = vunpack.c.l.b16 %v2291
        %v2427 = vunpack.c.l.b16 %v2292
        %v2428 = vunpack.c.l.b16 %v2293
        %v2429 = vunpack.c.l.b16 %v2294
        %v2430 = vunpack.c.l.b16 %v2295
        %v2431 = vunpack.c.l.b16 %v2296
        %v2432 = vunpack.c.l.b16 %v2297
        %v2433 = vunpack.c.l.b16 %v2298
        %v2434 = vunpack.c.l.b16 %v2299
        %v2435 = vunpack.c.l.b16 %v2300
        %v2436 = vunpack.c.l.b16 %v2301
        %v2437 = vunpack.c.l.b16 %v2302
        %v2438 = vunpack.c.l.b16 %v2303
        %v2439 = vunpack.c.l.b16 %v2304
        %v2440 = vunpack.c.l.b16 %v2305
        %v2441 = vunpack.c.l.b16 %v2306
        %v2442 = vunpack.c.l.b16 %v2307
        %v2443 = vunpack.c.l.b16 %v2308
        %v2444 = vunpack.c.l.b16 %v2309
        %v2445 = vunpack.c.l.b16 %v2310
        %v2446 = vunpack.c.l.b16 %v2311
        %v2447 = vunpack.c.l.b16 %v2312
        %v2448 = vunpack.c.l.b16 %v2313
        %v2449 = vunpack.c.l.b16 %v2314
        %v2450 = vunpack.c.l.b16 %v2315
        %v2451 = vunpack.c.l.b16 %v2316
        %v2452 = vunpack.c.l.b16 %v2317
        %v2453 = vunpack.c.l.b16 %v2318
        %v2454 = vunpack.c.l.b16 %v2319
        %v2455 = vunpack.c.l.b16 %v2320
        %v2456 = vunpack.c.l.b16 %v2321
        %v2457 = vunpack.c.l.b16 %v2322
        %v2458 = vunpack.c.l.b16 %v2323
        %v2459 = vunpack.c.l.b16 %v2324
        %v2460 = vunpack.c.l.b16 %v2325
        %v2461 = vunpack.c.l.b16 %v2326
        %v2462 = vunpack.c.l.b16 %v2327
        %v2463 = vunpack.c.l.b16 %v2328
        %v2464 = vunpack.c.l.b16 %v2329
        %v2465 = vunpack.c.l.b16 %v2330
        %v2466 = vunpack.c.l.b16 %v2331
        %v2467 = vunpack.c.l.b16 %v2332
        %v2468 = vunpack.c.l.b16 %v2333
        %v2469 = vunpack.c.l.b16 %v2334
        %v2470 = vunpack.c.l.b16 %v2335
        %v2471 = vunpack.c.l.b16 %v2336
        %v2472 = vunpack.c.l.b16 %v2337
        %v2473 = vunpack.c.l.b16 %v2338
        %v2474 = vunpack.c.l.b16 %v2339
        %v2475 = vunpack.c.l.b16 %v2340
        %v2476 = vunpack.c.l.b16 %v2341
        %v2477 = vunpack.c.l.b16 %v2342
        %v2478 = vunpack.c.l.b16 %v2343
        %v2479 = vunpack.c.l.b16 %v2344
        %v2480 = vpack.c.b16 %v2417, %v2416
        %v2481 = vpack.c.b16 %v2419, %v2418
        %v2482 = vpack.c.b16 %v2421, %v2420
        %v2483 = vpack.c.b16 %v2423, %v2422
        %v2484 = vpack.c.b16 %v2425, %v2424
        %v2485 = vpack.c.b16 %v2427, %v2426
        %v2486 = vpack.c.b16 %v2429, %v2428
        %v2487 = vpack.c.b16 %v2431, %v2430
        %v2488 = vpack.c.b16 %v2433, %v2432
        %v2489 = vpack.c.b16 %v2435, %v2434
        %v2490 = vpack.c.b16 %v2437, %v2436
        %v2491 = vpack.c.b16 %v2439, %v2438
        %v2492 = vpack.c.b16 %v2441, %v2440
        %v2493 = vpack.c.b16 %v2443, %v2442
        %v2494 = vpack.c.b16 %v2445, %v2444
        %v2495 = vpack.c.b16 %v2447, %v2446
        %v2496 = vpack.c.b16 %v2449, %v2448
        %v2497 = vpack.c.b16 %v2451, %v2450
        %v2498 = vpack.c.b16 %v2453, %v2452
        %v2499 = vpack.c.b16 %v2455, %v2454
        %v2500 = vpack.c.b16 %v2457, %v2456
        %v2501 = vpack.c.b16 %v2459, %v2458
        %v2502 = vpack.c.b16 %v2461, %v2460
        %v2503 = vpack.c.b16 %v2463, %v2462
        %v2504 = vpack.c.b16 %v2465, %v2464
        %v2505 = vpack.c.b16 %v2467, %v2466
        %v2506 = vpack.c.b16 %v2469, %v2468
        %v2507 = vpack.c.b16 %v2471, %v2470
        %v2508 = vpack.c.b16 %v2473, %v2472
        %v2509 = vpack.c.b16 %v2475, %v2474
        %v2510 = vpack.c.b16 %v2477, %v2476
        %v2511 = vpack.c.b16 %v2479, %v2478
        %2544 = vmatprep.subr.bf16.mxu0 0
        %2545 = vmatpush1.bf16.msra.mxu0 %v2487
        %2546 = vmatprep.subr.bf16.mxu0 0
        %2547 = vmatpush1.bf16.msra.mxu0 %v2486
        %2548 = vmatprep.subr.bf16.mxu0 0
        %2549 = vmatpush1.bf16.msra.mxu0 %v2485
        %2550 = vmatprep.subr.bf16.mxu0 0
        %2551 = vmatpush1.bf16.msra.mxu0 %v2484
        %2552 = vmatprep.subr.bf16.mxu0 0
        %2553 = vmatpush1.bf16.msra.mxu0 %v2483
        %2554 = vmatprep.subr.bf16.mxu0 0
        %2555 = vmatpush1.bf16.msra.mxu0 %v2482
        %2556 = vmatprep.subr.bf16.mxu0 0
        %2557 = vmatpush1.bf16.msra.mxu0 %v2481
        %2558 = vmatprep.subr.bf16.mxu0 0
        %2559 = vmatpush1.bf16.msra.mxu0 %v2480
        %2560 = vmatprep.subr.bf16.mxu0 0
        %2561 = vmatpush2.bf16.msra.mxu0 %v2495
        %2562 = vmatprep.subr.bf16.mxu0 0
        %2563 = vmatpush2.bf16.msra.mxu0 %v2494
        %2564 = vmatprep.subr.bf16.mxu0 0
        %2565 = vmatpush2.bf16.msra.mxu0 %v2493
        %2566 = vmatprep.subr.bf16.mxu0 0
        %2567 = vmatpush2.bf16.msra.mxu0 %v2492
        %2568 = vmatprep.subr.bf16.mxu0 0
        %2569 = vmatpush2.bf16.msra.mxu0 %v2491
        %2570 = vmatprep.subr.bf16.mxu0 0
        %2571 = vmatpush2.bf16.msra.mxu0 %v2490
        %2572 = vmatprep.subr.bf16.mxu0 0
        %2573 = vmatpush2.bf16.msra.mxu0 %v2489
        %2574 = vmatprep.subr.bf16.mxu0 0
        %2575 = vmatpush2.bf16.msra.mxu0 %v2488
        %2576 = vmatprep.mubr.bf16.mxu0 %v2278
        %2577 = vmatmul.mubr.bf16.gmra.mxu0 %v2277
        %v2578 = vpop.f32.mrf.mxu0
        %v2579 = vadd.f32 %v2350, %v2578
        %v2580 = vpop.f32.mrf.mxu0
        %v2581 = vpop.f32.mrf.mxu0
        %v2582 = vpop.f32.mrf.mxu0
        %2583 = vdwg.mxu0
        %2584 = vmatprep.subr.bf16.mxu0 0
        %2585 = vmatpush1.bf16.msra.mxu0 %v2503
        %2586 = vmatprep.subr.bf16.mxu0 0
        %2587 = vmatpush1.bf16.msra.mxu0 %v2502
        %2588 = vmatprep.subr.bf16.mxu0 0
        %2589 = vmatpush1.bf16.msra.mxu0 %v2501
        %2590 = vmatprep.subr.bf16.mxu0 0
        %2591 = vmatpush1.bf16.msra.mxu0 %v2500
        %2592 = vmatprep.subr.bf16.mxu0 0
        %2593 = vmatpush1.bf16.msra.mxu0 %v2499
        %2594 = vmatprep.subr.bf16.mxu0 0
        %2595 = vmatpush1.bf16.msra.mxu0 %v2498
        %2596 = vmatprep.subr.bf16.mxu0 0
        %2597 = vmatpush1.bf16.msra.mxu0 %v2497
        %2598 = vmatprep.subr.bf16.mxu0 0
        %2599 = vmatpush1.bf16.msra.mxu0 %v2496
        %2600 = vmatprep.subr.bf16.mxu0 0
        %2601 = vmatpush2.bf16.msra.mxu0 %v2511
        %2602 = vmatprep.subr.bf16.mxu0 0
        %2603 = vmatpush2.bf16.msra.mxu0 %v2510
        %2604 = vmatprep.subr.bf16.mxu0 0
        %2605 = vmatpush2.bf16.msra.mxu0 %v2509
        %2606 = vmatprep.subr.bf16.mxu0 0
        %2607 = vmatpush2.bf16.msra.mxu0 %v2508
        %2608 = vmatprep.subr.bf16.mxu0 0
        %2609 = vmatpush2.bf16.msra.mxu0 %v2507
        %2610 = vmatprep.subr.bf16.mxu0 0
        %2611 = vmatpush2.bf16.msra.mxu0 %v2506
        %2612 = vmatprep.subr.bf16.mxu0 0
        %2613 = vmatpush2.bf16.msra.mxu0 %v2505
        %2614 = vmatprep.subr.bf16.mxu0 0
        %2615 = vmatpush2.bf16.msra.mxu0 %v2504
        %2616 = vmatprep.mubr.bf16.mxu0 %v2280
        %2617 = vmatmul.mubr.bf16.gmra.mxu0 %v2279
        %v2618 = vpop.f32.mrf.mxu0
        %v2619 = vadd.f32 %v2579, %v2618
        %v2620 = vpop.f32.mrf.mxu0
        %v2621 = vpop.f32.mrf.mxu0
        %v2622 = vpop.f32.mrf.mxu0
        %2623 = vdwg.mxu0
        %v2624 = vadd.f32 %v2619, %v1943
        %v2625 = vld [vmem:[#allocation24] sm:$0x1]
        %v2626 = vld [vmem:[#allocation25] sm:$0x1]
        %2627 = vadd.xlane.f32.xlu0 %v2624
        %v2628 = vpop.xlane.xlu0 %2627
        %v2629 = vmul.f32 %v2628, %v931
        %v2630 = vsub.f32 %v2624, %v2629
        %v2631 = vmul.f32 %v2630, %v2630
        %2632 = vadd.xlane.f32.xlu0 %v2631
        %v2633 = vpop.xlane.xlu0 %2632
        %v2634 = vmul.f32 %v2633, %v931
        %v2635 = vadd.f32 %v2634, 1e-12
        %v2636 = vrsqrt.pop %v2635
        %v2637 = vmul.f32 %v2630, %v2636
        %v2639 = vlaneseq
        %v2640 = vshrl.u32 %v2639, 7
        %v2641 = vsub.s32 0, %v2640
        %v2642 = vrot.slane %v2625, %v2641
        %v2644 = vmul.f32 %v2637, %v2642
        %v2646 = vlaneseq
        %v2647 = vshrl.u32 %v2646, 7
        %v2648 = vsub.s32 0, %v2647
        %v2649 = vrot.slane %v2626, %v2648
        %v2651 = vadd.f32 %v2644, %v2649
        %v2652 = vpack.c.bf16 %v2651, %v2651
        %s2653 = scalar_lea.vmem [#allocation10], 192
        %v2654 = vld [vmem:[%s2653] sm:$0xff]
        %v2655 = vld [vmem:[%s2653 + $0x8] sm:$0xf]
        %v2656 = vld [vmem:[%s2653 + $0xc] sm:$0xff]
        %v2657 = vld [vmem:[%s2653 + $0x14] sm:$0xf]
        %v2658 = vld [vmem:[%s2653 + $0x18] sm:$0xff]
        %v2659 = vld [vmem:[%s2653 + $0x20] sm:$0xf]
        %v2660 = vld [vmem:[%s2653 + $0x24] sm:$0xff]
        %v2661 = vld [vmem:[%s2653 + $0x2c] sm:$0xf]
        %v2662 = vld [vmem:[%s2653 + $0x30] sm:$0xff]
        %v2663 = vld [vmem:[%s2653 + $0x38] sm:$0xf]
        %v2664 = vld [vmem:[%s2653 + $0x3c] sm:$0xff]
        %v2665 = vld [vmem:[%s2653 + $0x44] sm:$0xf]
        %v2666 = vld [vmem:[%s2653 + $0x48] sm:$0xff]
        %v2667 = vld [vmem:[%s2653 + $0x50] sm:$0xf]
        %v2668 = vld [vmem:[%s2653 + $0x54] sm:$0xff]
        %v2669 = vld [vmem:[%s2653 + $0x5c] sm:$0xf]
        %v2670 = vld [vmem:[%s2653 + $0x60] sm:$0xff]
        %v2671 = vld [vmem:[%s2653 + $0x68] sm:$0xf]
        %v2672 = vld [vmem:[%s2653 + $0x6c] sm:$0xff]
        %v2673 = vld [vmem:[%s2653 + $0x74] sm:$0xf]
        %v2674 = vld [vmem:[%s2653 + $0x78] sm:$0xff]
        %v2675 = vld [vmem:[%s2653 + $0x80] sm:$0xf]
        %v2676 = vld [vmem:[%s2653 + $0x84] sm:$0xff]
        %v2677 = vld [vmem:[%s2653 + $0x8c] sm:$0xf]
        %v2678 = vld [vmem:[%s2653 + $0x90] sm:$0xff]
        %v2679 = vld [vmem:[%s2653 + $0x98] sm:$0xf]
        %v2680 = vld [vmem:[%s2653 + $0x9c] sm:$0xff]
        %v2681 = vld [vmem:[%s2653 + $0xa4] sm:$0xf]
        %v2682 = vld [vmem:[%s2653 + $0xa8] sm:$0xff]
        %v2683 = vld [vmem:[%s2653 + $0xb0] sm:$0xf]
        %v2684 = vld [vmem:[%s2653 + $0xb4] sm:$0xff]
        %v2685 = vld [vmem:[%s2653 + $0xbc] sm:$0xf]
        %s2686 = scalar_lea.vmem %s8, 3
        %v2687 = vld [vmem:[%s2686] sm:$0x7]
        %v2689 = vlaneseq
        %v2690 = vshrl.u32 %v2689, 7
        %v2691 = vsub.s32 0, %v2690
        %v2692 = vrot.slane %v2687, %v2691
        %v2693 = vlaneseq
        %v2694 = vshrl.u32 %v2693, 7
        %v2695 = vsub.s32 1, %v2694
        %v2696 = vrot.slane %v2687, %v2695
        %v2697 = vlaneseq
        %v2698 = vshrl.u32 %v2697, 7
        %v2699 = vsub.s32 2, %v2698
        %v2700 = vrot.slane %v2687, %v2699
        %v2736 = vunpack.c.l.b16 %v2654
        %v2737 = vunpack.c.h.b16 %v2654
        %v2738 = vunpack.c.l.b16 %v2655
        %v2739 = vunpack.c.l.b16 %v2656
        %v2740 = vunpack.c.h.b16 %v2656
        %v2741 = vunpack.c.l.b16 %v2657
        %v2742 = vunpack.c.l.b16 %v2658
        %v2743 = vunpack.c.h.b16 %v2658
        %v2744 = vunpack.c.l.b16 %v2659
        %v2745 = vunpack.c.l.b16 %v2660
        %v2746 = vunpack.c.h.b16 %v2660
        %v2747 = vunpack.c.l.b16 %v2661
        %v2748 = vunpack.c.l.b16 %v2662
        %v2749 = vunpack.c.h.b16 %v2662
        %v2750 = vunpack.c.l.b16 %v2663
        %v2751 = vunpack.c.l.b16 %v2664
        %v2752 = vunpack.c.h.b16 %v2664
        %v2753 = vunpack.c.l.b16 %v2665
        %v2754 = vunpack.c.l.b16 %v2666
        %v2755 = vunpack.c.h.b16 %v2666
        %v2756 = vunpack.c.l.b16 %v2667
        %v2757 = vunpack.c.l.b16 %v2668
        %v2758 = vunpack.c.h.b16 %v2668
        %v2759 = vunpack.c.l.b16 %v2669
        %v2760 = vunpack.c.l.b16 %v2670
        %v2761 = vunpack.c.h.b16 %v2670
        %v2762 = vunpack.c.l.b16 %v2671
        %v2763 = vunpack.c.l.b16 %v2672
        %v2764 = vunpack.c.h.b16 %v2672
        %v2765 = vunpack.c.l.b16 %v2673
        %v2766 = vunpack.c.l.b16 %v2674
        %v2767 = vunpack.c.h.b16 %v2674
        %v2768 = vunpack.c.l.b16 %v2675
        %v2769 = vunpack.c.l.b16 %v2676
        %v2770 = vunpack.c.h.b16 %v2676
        %v2771 = vunpack.c.l.b16 %v2677
        %v2772 = vunpack.c.l.b16 %v2678
        %v2773 = vunpack.c.h.b16 %v2678
        %v2774 = vunpack.c.l.b16 %v2679
        %v2775 = vunpack.c.l.b16 %v2680
        %v2776 = vunpack.c.h.b16 %v2680
        %v2777 = vunpack.c.l.b16 %v2681
        %v2778 = vunpack.c.l.b16 %v2682
        %v2779 = vunpack.c.h.b16 %v2682
        %v2780 = vunpack.c.l.b16 %v2683
        %v2781 = vunpack.c.l.b16 %v2684
        %v2782 = vunpack.c.h.b16 %v2684
        %v2783 = vunpack.c.l.b16 %v2685
        %v2784 = vpack.c.b16 %v2739, %v2736
        %v2785 = vpack.c.b16 %v2740, %v2737
        %v2786 = vpack.c.b16 %v2741, %v2738
        %v2787 = vpack.c.b16 %v2745, %v2742
        %v2788 = vpack.c.b16 %v2746, %v2743
        %v2789 = vpack.c.b16 %v2747, %v2744
        %v2790 = vpack.c.b16 %v2751, %v2748
        %v2791 = vpack.c.b16 %v2752, %v2749
        %v2792 = vpack.c.b16 %v2753, %v2750
        %v2793 = vpack.c.b16 %v2757, %v2754
        %v2794 = vpack.c.b16 %v2758, %v2755
        %v2795 = vpack.c.b16 %v2759, %v2756
        %v2796 = vpack.c.b16 %v2763, %v2760
        %v2797 = vpack.c.b16 %v2764, %v2761
        %v2798 = vpack.c.b16 %v2765, %v2762
        %v2799 = vpack.c.b16 %v2769, %v2766
        %v2800 = vpack.c.b16 %v2770, %v2767
        %v2801 = vpack.c.b16 %v2771, %v2768
        %v2802 = vpack.c.b16 %v2775, %v2772
        %v2803 = vpack.c.b16 %v2776, %v2773
        %v2804 = vpack.c.b16 %v2777, %v2774
        %v2805 = vpack.c.b16 %v2781, %v2778
        %v2806 = vpack.c.b16 %v2782, %v2779
        %v2807 = vpack.c.b16 %v2783, %v2780
        %2832 = vmatprep.subr.bf16.mxu0 %v2806
        %2833 = vmatpush1.bf16.msra.mxu0 %v2805
        %2834 = vmatprep.subr.bf16.mxu0 %v2803
        %2835 = vmatpush1.bf16.msra.mxu0 %v2802
        %2836 = vmatprep.subr.bf16.mxu0 %v2800
        %2837 = vmatpush1.bf16.msra.mxu0 %v2799
        %2838 = vmatprep.subr.bf16.mxu0 %v2797
        %2839 = vmatpush1.bf16.msra.mxu0 %v2796
        %2840 = vmatprep.subr.bf16.mxu0 %v2794
        %2841 = vmatpush1.bf16.msra.mxu0 %v2793
        %2842 = vmatprep.subr.bf16.mxu0 %v2791
        %2843 = vmatpush1.bf16.msra.mxu0 %v2790
        %2844 = vmatprep.subr.bf16.mxu0 %v2788
        %2845 = vmatpush1.bf16.msra.mxu0 %v2787
        %2846 = vmatprep.subr.bf16.mxu0 %v2785
        %2847 = vmatpush1.bf16.msra.mxu0 %v2784
        %2848 = vmatprep.subr.bf16.mxu0 0
        %2849 = vmatpush2.bf16.msra.mxu0 0
        %2850 = vmatprep.subr.bf16.mxu0 0
        %2851 = vmatpush2.bf16.msra.mxu0 0
        %2852 = vmatprep.subr.bf16.mxu0 0
        %2853 = vmatpush2.bf16.msra.mxu0 0
        %2854 = vmatprep.subr.bf16.mxu0 0
        %2855 = vmatpush2.bf16.msra.mxu0 0
        %2856 = vmatprep.subr.bf16.mxu0 0
        %2857 = vmatpush2.bf16.msra.mxu0 0
        %2858 = vmatprep.subr.bf16.mxu0 0
        %2859 = vmatpush2.bf16.msra.mxu0 0
        %2860 = vmatprep.subr.bf16.mxu0 0
        %2861 = vmatpush2.bf16.msra.mxu0 0
        %2862 = vmatprep.subr.bf16.mxu0 0
        %2863 = vmatpush2.bf16.msra.mxu0 0
        %2864 = vmatprep.mubr.bf16.mxu0 0
        %2865 = vmatmul.mubr.bf16.gmra.mxu0 %v2652
        %v2866 = vpop.f32.mrf.mxu0
        %v2867 = vadd.f32 %v2692, %v2866
        %v2868 = vpop.f32.mrf.mxu0
        %v2869 = vadd.f32 %v2696, %v2868
        %v2870 = vpop.f32.mrf.mxu0
        %v2871 = vpop.f32.mrf.mxu0
        %2872 = vdwg.mxu0
        %2873 = vmatprep.subr.bf16.mxu0 0
        %2874 = vmatpush1.bf16.msra.mxu0 %v2807
        %2875 = vmatprep.subr.bf16.mxu0 0
        %2876 = vmatpush1.bf16.msra.mxu0 %v2804
        %2877 = vmatprep.subr.bf16.mxu0 0
        %2878 = vmatpush1.bf16.msra.mxu0 %v2801
        %2879 = vmatprep.subr.bf16.mxu0 0
        %2880 = vmatpush1.bf16.msra.mxu0 %v2798
        %2881 = vmatprep.subr.bf16.mxu0 0
        %2882 = vmatpush1.bf16.msra.mxu0 %v2795
        %2883 = vmatprep.subr.bf16.mxu0 0
        %2884 = vmatpush1.bf16.msra.mxu0 %v2792
        %2885 = vmatprep.subr.bf16.mxu0 0
        %2886 = vmatpush1.bf16.msra.mxu0 %v2789
        %2887 = vmatprep.subr.bf16.mxu0 0
        %2888 = vmatpush1.bf16.msra.mxu0 %v2786
        %2889 = vmatprep.subr.bf16.mxu0 0
        %2890 = vmatpush2.bf16.msra.mxu0 0
        %2891 = vmatprep.subr.bf16.mxu0 0
        %2892 = vmatpush2.bf16.msra.mxu0 0
        %2893 = vmatprep.subr.bf16.mxu0 0
        %2894 = vmatpush2.bf16.msra.mxu0 0
        %2895 = vmatprep.subr.bf16.mxu0 0
        %2896 = vmatpush2.bf16.msra.mxu0 0
        %2897 = vmatprep.subr.bf16.mxu0 0
        %2898 = vmatpush2.bf16.msra.mxu0 0
        %2899 = vmatprep.subr.bf16.mxu0 0
        %2900 = vmatpush2.bf16.msra.mxu0 0
        %2901 = vmatprep.subr.bf16.mxu0 0
        %2902 = vmatpush2.bf16.msra.mxu0 0
        %2903 = vmatprep.subr.bf16.mxu0 0
        %2904 = vmatpush2.bf16.msra.mxu0 0
        %2905 = vmatprep.mubr.bf16.mxu0 0
        %2906 = vmatmul.mubr.bf16.gmra.mxu0 %v2652
        %v2907 = vpop.f32.mrf.mxu0
        %v2908 = vadd.f32 %v2700, %v2907
        %v2909 = vpop.f32.mrf.mxu0
        %v2910 = vpop.f32.mrf.mxu0
        %v2911 = vpop.f32.mrf.mxu0
        %2912 = vdwg.mxu0
        %v2913 = vpack.c.bf16 %v2867, %v2867
        %v2914 = vpack.c.bf16 %v2869, %v2869
        %v2915 = vpack.c.bf16 %v2908, %v2908
        %s2916 = scalar_lea.vmem [#allocation12], 64
        %v2917 = vld [vmem:[%s2916] sm:$0xf]
        %v2918 = vld [vmem:[%s2916 + $0x4] sm:$0xf]
        %v2919 = vld [vmem:[%s2916 + $0x8] sm:$0xf]
        %v2920 = vld [vmem:[%s2916 + $0xc] sm:$0xf]
        %v2921 = vld [vmem:[%s2916 + $0x10] sm:$0xf]
        %v2922 = vld [vmem:[%s2916 + $0x14] sm:$0xf]
        %v2923 = vld [vmem:[%s2916 + $0x18] sm:$0xf]
        %v2924 = vld [vmem:[%s2916 + $0x1c] sm:$0xf]
        %v2925 = vld [vmem:[%s2916 + $0x20] sm:$0xf]
        %v2926 = vld [vmem:[%s2916 + $0x24] sm:$0xf]
        %v2927 = vld [vmem:[%s2916 + $0x28] sm:$0xf]
        %v2928 = vld [vmem:[%s2916 + $0x2c] sm:$0xf]
        %v2929 = vld [vmem:[%s2916 + $0x30] sm:$0xf]
        %v2930 = vld [vmem:[%s2916 + $0x34] sm:$0xf]
        %v2931 = vld [vmem:[%s2916 + $0x38] sm:$0xf]
        %v2932 = vld [vmem:[%s2916 + $0x3c] sm:$0xf]
        %v2934 = vsel %vm1242, %v2913, 0
        %v2937 = vsel %vm1242, %v2914, 0
        %2939 = vmatprep.subr.bf16.mxu0 0
        %2940 = vmatpush1.bf16.xpose.msra.mxu0 0
        %2941 = vmatprep.subr.bf16.mxu0 0
        %2942 = vmatpush1.bf16.xpose.msra.mxu0 0
        %2943 = vmatprep.subr.bf16.mxu0 0
        %2944 = vmatpush1.bf16.xpose.msra.mxu0 0
        %2945 = vmatprep.subr.bf16.mxu0 0
        %2946 = vmatpush1.bf16.xpose.msra.mxu0 0
        %2947 = vmatprep.subr.bf16.mxu0 0
        %2948 = vmatpush1.bf16.xpose.msra.mxu0 0
        %2949 = vmatprep.subr.bf16.mxu0 0
        %2950 = vmatpush1.bf16.xpose.msra.mxu0 0
        %2951 = vmatprep.subr.bf16.mxu0 0
        %2952 = vmatpush1.bf16.xpose.msra.mxu0 0
        %2953 = vmatprep.subr.bf16.mxu0 0
        %2954 = vmatpush1.bf16.xpose.msra.mxu0 %v2937
        %2955 = vmatprep.subr.bf16.mxu0 0
        %2956 = vmatpush2.bf16.xpose.msra.mxu0 0
        %2957 = vmatprep.subr.bf16.mxu0 0
        %2958 = vmatpush2.bf16.xpose.msra.mxu0 0
        %2959 = vmatprep.subr.bf16.mxu0 0
        %2960 = vmatpush2.bf16.xpose.msra.mxu0 0
        %2961 = vmatprep.subr.bf16.mxu0 0
        %2962 = vmatpush2.bf16.xpose.msra.mxu0 0
        %2963 = vmatprep.subr.bf16.mxu0 0
        %2964 = vmatpush2.bf16.xpose.msra.mxu0 0
        %2965 = vmatprep.subr.bf16.mxu0 0
        %2966 = vmatpush2.bf16.xpose.msra.mxu0 0
        %2967 = vmatprep.subr.bf16.mxu0 0
        %2968 = vmatpush2.bf16.xpose.msra.mxu0 0
        %2969 = vmatprep.subr.bf16.mxu0 0
        %2970 = vmatpush2.bf16.xpose.msra.mxu0 0
        %2971 = vmatprep.mubr.bf16.mxu0 0
        %2972 = vmatmul.mubr.bf16.gmra.mxu0 %v2934
        %v2973 = vpop.f32.mrf.mxu0
        %v2974 = vadd.f32 %v962, %v2973
        %v2975 = vpop.f32.mrf.mxu0
        %v2976 = vpop.f32.mrf.mxu0
        %v2977 = vpop.f32.mrf.mxu0
        %2978 = vdwg.mxu0
        %v2979 = vsel %vm1289, %v2974, -inf
        %2980 = vmax.xlane.f32.xlu0 %v2979
        %v2981 = vpop.xlane.xlu0 %2980
        %v2982 = vsub.f32 %v2974, %v2981
        %v2983 = vmul.f32 %v2982, 1.442695
        %v2984 = vpow.pop %v2983
        %v2985 = vsel %vm1289, %v2984, 0.0
        %2986 = vadd.xlane.f32.xlu0 %v2985
        %v2987 = vpop.xlane.xlu0 %2986
        %v2988 = vrcp.pop %v2987
        %v2989 = vmul.f32 %v2984, %v2988
        %v2990 = vpack.c.bf16 %v2989, %v2989
        %v2992 = vsel %vm1289, %v2990, 0
        %v2995 = vsel %vm1305, %v2915, 0
        %2997 = vmatprep.subr.bf16.mxu0 0
        %2998 = vmatpush1.bf16.msra.mxu0 0
        %2999 = vmatprep.subr.bf16.mxu0 0
        %3000 = vmatpush1.bf16.msra.mxu0 0
        %3001 = vmatprep.subr.bf16.mxu0 0
        %3002 = vmatpush1.bf16.msra.mxu0 0
        %3003 = vmatprep.subr.bf16.mxu0 0
        %3004 = vmatpush1.bf16.msra.mxu0 0
        %3005 = vmatprep.subr.bf16.mxu0 0
        %3006 = vmatpush1.bf16.msra.mxu0 0
        %3007 = vmatprep.subr.bf16.mxu0 0
        %3008 = vmatpush1.bf16.msra.mxu0 0
        %3009 = vmatprep.subr.bf16.mxu0 0
        %3010 = vmatpush1.bf16.msra.mxu0 0
        %3011 = vmatprep.subr.bf16.mxu0 0
        %3012 = vmatpush1.bf16.msra.mxu0 %v2995
        %3013 = vmatprep.subr.bf16.mxu0 0
        %3014 = vmatpush2.bf16.msra.mxu0 0
        %3015 = vmatprep.subr.bf16.mxu0 0
        %3016 = vmatpush2.bf16.msra.mxu0 0
        %3017 = vmatprep.subr.bf16.mxu0 0
        %3018 = vmatpush2.bf16.msra.mxu0 0
        %3019 = vmatprep.subr.bf16.mxu0 0
        %3020 = vmatpush2.bf16.msra.mxu0 0
        %3021 = vmatprep.subr.bf16.mxu0 0
        %3022 = vmatpush2.bf16.msra.mxu0 0
        %3023 = vmatprep.subr.bf16.mxu0 0
        %3024 = vmatpush2.bf16.msra.mxu0 0
        %3025 = vmatprep.subr.bf16.mxu0 0
        %3026 = vmatpush2.bf16.msra.mxu0 0
        %3027 = vmatprep.subr.bf16.mxu0 0
        %3028 = vmatpush2.bf16.msra.mxu0 0
        %3029 = vmatprep.mubr.bf16.mxu0 0
        %3030 = vmatmul.mubr.bf16.gmra.mxu0 %v2992
        %v3031 = vpop.f32.mrf.mxu0
        %v3032 = vadd.f32 0.0, %v3031
        %v3033 = vpop.f32.mrf.mxu0
        %v3034 = vpop.f32.mrf.mxu0
        %v3035 = vpop.f32.mrf.mxu0
        %3036 = vdwg.mxu0
        %v3037 = vpack.c.bf16 %v3032, %v3032
        %3039 = vrot.lane.b32.xlu0 %v2913, 96
        %v3040 = vpop.permute.xlu0 %3039
        %3042 = vrot.lane.b32.xlu0 %v2914, 96
        %v3043 = vpop.permute.xlu0 %3042
        %v3045 = vsel %vm1242, %v3040, 0
        %v3048 = vsel %vm1242, %v3043, 0
        %3050 = vmatprep.subr.bf16.mxu0 0
        %3051 = vmatpush1.bf16.xpose.msra.mxu0 0
        %3052 = vmatprep.subr.bf16.mxu0 0
        %3053 = vmatpush1.bf16.xpose.msra.mxu0 0
        %3054 = vmatprep.subr.bf16.mxu0 0
        %3055 = vmatpush1.bf16.xpose.msra.mxu0 0
        %3056 = vmatprep.subr.bf16.mxu0 0
        %3057 = vmatpush1.bf16.xpose.msra.mxu0 0
        %3058 = vmatprep.subr.bf16.mxu0 0
        %3059 = vmatpush1.bf16.xpose.msra.mxu0 0
        %3060 = vmatprep.subr.bf16.mxu0 0
        %3061 = vmatpush1.bf16.xpose.msra.mxu0 0
        %3062 = vmatprep.subr.bf16.mxu0 0
        %3063 = vmatpush1.bf16.xpose.msra.mxu0 0
        %3064 = vmatprep.subr.bf16.mxu0 0
        %3065 = vmatpush1.bf16.xpose.msra.mxu0 %v3048
        %3066 = vmatprep.subr.bf16.mxu0 0
        %3067 = vmatpush2.bf16.xpose.msra.mxu0 0
        %3068 = vmatprep.subr.bf16.mxu0 0
        %3069 = vmatpush2.bf16.xpose.msra.mxu0 0
        %3070 = vmatprep.subr.bf16.mxu0 0
        %3071 = vmatpush2.bf16.xpose.msra.mxu0 0
        %3072 = vmatprep.subr.bf16.mxu0 0
        %3073 = vmatpush2.bf16.xpose.msra.mxu0 0
        %3074 = vmatprep.subr.bf16.mxu0 0
        %3075 = vmatpush2.bf16.xpose.msra.mxu0 0
        %3076 = vmatprep.subr.bf16.mxu0 0
        %3077 = vmatpush2.bf16.xpose.msra.mxu0 0
        %3078 = vmatprep.subr.bf16.mxu0 0
        %3079 = vmatpush2.bf16.xpose.msra.mxu0 0
        %3080 = vmatprep.subr.bf16.mxu0 0
        %3081 = vmatpush2.bf16.xpose.msra.mxu0 0
        %3082 = vmatprep.mubr.bf16.mxu0 0
        %3083 = vmatmul.mubr.bf16.gmra.mxu0 %v3045
        %v3084 = vpop.f32.mrf.mxu0
        %v3085 = vadd.f32 %v962, %v3084
        %v3086 = vpop.f32.mrf.mxu0
        %v3087 = vpop.f32.mrf.mxu0
        %v3088 = vpop.f32.mrf.mxu0
        %3089 = vdwg.mxu0
        %v3090 = vsel %vm1289, %v3085, -inf
        %3091 = vmax.xlane.f32.xlu0 %v3090
        %v3092 = vpop.xlane.xlu0 %3091
        %v3093 = vsub.f32 %v3085, %v3092
        %v3094 = vmul.f32 %v3093, 1.442695
        %v3095 = vpow.pop %v3094
        %v3096 = vsel %vm1289, %v3095, 0.0
        %3097 = vadd.xlane.f32.xlu0 %v3096
        %v3098 = vpop.xlane.xlu0 %3097
        %v3099 = vrcp.pop %v3098
        %v3100 = vmul.f32 %v3095, %v3099
        %v3101 = vpack.c.bf16 %v3100, %v3100
        %3103 = vrot.lane.b32.xlu0 %v2915, 96
        %v3104 = vpop.permute.xlu0 %3103
        %v3106 = vsel %vm1289, %v3101, 0
        %v3109 = vsel %vm1305, %v3104, 0
        %3111 = vmatprep.subr.bf16.mxu0 0
        %3112 = vmatpush1.bf16.msra.mxu0 0
        %3113 = vmatprep.subr.bf16.mxu0 0
        %3114 = vmatpush1.bf16.msra.mxu0 0
        %3115 = vmatprep.subr.bf16.mxu0 0
        %3116 = vmatpush1.bf16.msra.mxu0 0
        %3117 = vmatprep.subr.bf16.mxu0 0
        %3118 = vmatpush1.bf16.msra.mxu0 0
        %3119 = vmatprep.subr.bf16.mxu0 0
        %3120 = vmatpush1.bf16.msra.mxu0 0
        %3121 = vmatprep.subr.bf16.mxu0 0
        %3122 = vmatpush1.bf16.msra.mxu0 0
        %3123 = vmatprep.subr.bf16.mxu0 0
        %3124 = vmatpush1.bf16.msra.mxu0 0
        %3125 = vmatprep.subr.bf16.mxu0 0
        %3126 = vmatpush1.bf16.msra.mxu0 %v3109
        %3127 = vmatprep.subr.bf16.mxu0 0
        %3128 = vmatpush2.bf16.msra.mxu0 0
        %3129 = vmatprep.subr.bf16.mxu0 0
        %3130 = vmatpush2.bf16.msra.mxu0 0
        %3131 = vmatprep.subr.bf16.mxu0 0
        %3132 = vmatpush2.bf16.msra.mxu0 0
        %3133 = vmatprep.subr.bf16.mxu0 0
        %3134 = vmatpush2.bf16.msra.mxu0 0
        %3135 = vmatprep.subr.bf16.mxu0 0
        %3136 = vmatpush2.bf16.msra.mxu0 0
        %3137 = vmatprep.subr.bf16.mxu0 0
        %3138 = vmatpush2.bf16.msra.mxu0 0
        %3139 = vmatprep.subr.bf16.mxu0 0
        %3140 = vmatpush2.bf16.msra.mxu0 0
        %3141 = vmatprep.subr.bf16.mxu0 0
        %3142 = vmatpush2.bf16.msra.mxu0 0
        %3143 = vmatprep.mubr.bf16.mxu0 0
        %3144 = vmatmul.mubr.bf16.gmra.mxu0 %v3106
        %v3145 = vpop.f32.mrf.mxu0
        %v3146 = vadd.f32 0.0, %v3145
        %v3147 = vpop.f32.mrf.mxu0
        %v3148 = vpop.f32.mrf.mxu0
        %v3149 = vpop.f32.mrf.mxu0
        %3150 = vdwg.mxu0
        %v3151 = vpack.c.bf16 %v3146, %v3146
        %v3156 = vunpack.c.l.b16 %v2921
        %v3157 = vunpack.c.l.b16 %v2922
        %v3158 = vunpack.c.l.b16 %v2923
        %v3159 = vunpack.c.l.b16 %v2924
        %v3160 = vpack.c.b16 %v3157, %v3156
        %v3161 = vpack.c.b16 %v3159, %v3158
        %v3165 = vsel %vm1242, %v3151, 0
        %3167 = vmatprep.subr.bf16.mxu0 0
        %3168 = vmatpush1.bf16.msra.mxu0 0
        %3169 = vmatprep.subr.bf16.mxu0 0
        %3170 = vmatpush1.bf16.msra.mxu0 0
        %3171 = vmatprep.subr.bf16.mxu0 0
        %3172 = vmatpush1.bf16.msra.mxu0 0
        %3173 = vmatprep.subr.bf16.mxu0 0
        %3174 = vmatpush1.bf16.msra.mxu0 0
        %3175 = vmatprep.subr.bf16.mxu0 0
        %3176 = vmatpush1.bf16.msra.mxu0 0
        %3177 = vmatprep.subr.bf16.mxu0 0
        %3178 = vmatpush1.bf16.msra.mxu0 0
        %3179 = vmatprep.subr.bf16.mxu0 0
        %3180 = vmatpush1.bf16.msra.mxu0 %v3161
        %3181 = vmatprep.subr.bf16.mxu0 0
        %3182 = vmatpush1.bf16.msra.mxu0 %v3160
        %3183 = vmatprep.subr.bf16.mxu0 0
        %3184 = vmatpush2.bf16.msra.mxu0 0
        %3185 = vmatprep.subr.bf16.mxu0 0
        %3186 = vmatpush2.bf16.msra.mxu0 0
        %3187 = vmatprep.subr.bf16.mxu0 0
        %3188 = vmatpush2.bf16.msra.mxu0 0
        %3189 = vmatprep.subr.bf16.mxu0 0
        %3190 = vmatpush2.bf16.msra.mxu0 0
        %3191 = vmatprep.subr.bf16.mxu0 0
        %3192 = vmatpush2.bf16.msra.mxu0 0
        %3193 = vmatprep.subr.bf16.mxu0 0
        %3194 = vmatpush2.bf16.msra.mxu0 0
        %3195 = vmatprep.subr.bf16.mxu0 0
        %3196 = vmatpush2.bf16.msra.mxu0 0
        %3197 = vmatprep.subr.bf16.mxu0 0
        %3198 = vmatpush2.bf16.msra.mxu0 0
        %3199 = vmatprep.mubr.bf16.mxu0 0
        %3200 = vmatmul.mubr.bf16.gmra.mxu0 %v3165
        %v3201 = vpop.f32.mrf.mxu0
        %v3202 = vadd.f32 0.0, %v3201
        %v3203 = vpop.f32.mrf.mxu0
        %v3204 = vpop.f32.mrf.mxu0
        %v3205 = vpop.f32.mrf.mxu0
        %3206 = vdwg.mxu0
        %v3211 = vunpack.c.l.b16 %v2917
        %v3212 = vunpack.c.l.b16 %v2918
        %v3213 = vunpack.c.l.b16 %v2919
        %v3214 = vunpack.c.l.b16 %v2920
        %v3215 = vpack.c.b16 %v3212, %v3211
        %v3216 = vpack.c.b16 %v3214, %v3213
        %v3220 = vsel %vm1242, %v3037, 0
        %3222 = vmatprep.subr.bf16.mxu0 0
        %3223 = vmatpush1.bf16.msra.mxu0 0
        %3224 = vmatprep.subr.bf16.mxu0 0
        %3225 = vmatpush1.bf16.msra.mxu0 0
        %3226 = vmatprep.subr.bf16.mxu0 0
        %3227 = vmatpush1.bf16.msra.mxu0 0
        %3228 = vmatprep.subr.bf16.mxu0 0
        %3229 = vmatpush1.bf16.msra.mxu0 0
        %3230 = vmatprep.subr.bf16.mxu0 0
        %3231 = vmatpush1.bf16.msra.mxu0 0
        %3232 = vmatprep.subr.bf16.mxu0 0
        %3233 = vmatpush1.bf16.msra.mxu0 0
        %3234 = vmatprep.subr.bf16.mxu0 0
        %3235 = vmatpush1.bf16.msra.mxu0 %v3216
        %3236 = vmatprep.subr.bf16.mxu0 0
        %3237 = vmatpush1.bf16.msra.mxu0 %v3215
        %3238 = vmatprep.subr.bf16.mxu0 0
        %3239 = vmatpush2.bf16.msra.mxu0 0
        %3240 = vmatprep.subr.bf16.mxu0 0
        %3241 = vmatpush2.bf16.msra.mxu0 0
        %3242 = vmatprep.subr.bf16.mxu0 0
        %3243 = vmatpush2.bf16.msra.mxu0 0
        %3244 = vmatprep.subr.bf16.mxu0 0
        %3245 = vmatpush2.bf16.msra.mxu0 0
        %3246 = vmatprep.subr.bf16.mxu0 0
        %3247 = vmatpush2.bf16.msra.mxu0 0
        %3248 = vmatprep.subr.bf16.mxu0 0
        %3249 = vmatpush2.bf16.msra.mxu0 0
        %3250 = vmatprep.subr.bf16.mxu0 0
        %3251 = vmatpush2.bf16.msra.mxu0 0
        %3252 = vmatprep.subr.bf16.mxu0 0
        %3253 = vmatpush2.bf16.msra.mxu0 0
        %3254 = vmatprep.mubr.bf16.mxu0 0
        %3255 = vmatmul.mubr.bf16.gmra.mxu0 %v3220
        %v3256 = vpop.f32.mrf.mxu0
        %v3257 = vadd.f32 %v3202, %v3256
        %v3258 = vpop.f32.mrf.mxu0
        %v3259 = vpop.f32.mrf.mxu0
        %v3260 = vpop.f32.mrf.mxu0
        %3261 = vdwg.mxu0
        %3262 = vrot.lane.b32.xlu0 %v2913, 64
        %v3263 = vpop.permute.xlu0 %3262
        %3264 = vrot.lane.b32.xlu0 %v2914, 64
        %v3265 = vpop.permute.xlu0 %3264
        %v3267 = vsel %vm1242, %v3263, 0
        %v3270 = vsel %vm1242, %v3265, 0
        %3272 = vmatprep.subr.bf16.mxu0 0
        %3273 = vmatpush1.bf16.xpose.msra.mxu0 0
        %3274 = vmatprep.subr.bf16.mxu0 0
        %3275 = vmatpush1.bf16.xpose.msra.mxu0 0
        %3276 = vmatprep.subr.bf16.mxu0 0
        %3277 = vmatpush1.bf16.xpose.msra.mxu0 0
        %3278 = vmatprep.subr.bf16.mxu0 0
        %3279 = vmatpush1.bf16.xpose.msra.mxu0 0
        %3280 = vmatprep.subr.bf16.mxu0 0
        %3281 = vmatpush1.bf16.xpose.msra.mxu0 0
        %3282 = vmatprep.subr.bf16.mxu0 0
        %3283 = vmatpush1.bf16.xpose.msra.mxu0 0
        %3284 = vmatprep.subr.bf16.mxu0 0
        %3285 = vmatpush1.bf16.xpose.msra.mxu0 0
        %3286 = vmatprep.subr.bf16.mxu0 0
        %3287 = vmatpush1.bf16.xpose.msra.mxu0 %v3270
        %3288 = vmatprep.subr.bf16.mxu0 0
        %3289 = vmatpush2.bf16.xpose.msra.mxu0 0
        %3290 = vmatprep.subr.bf16.mxu0 0
        %3291 = vmatpush2.bf16.xpose.msra.mxu0 0
        %3292 = vmatprep.subr.bf16.mxu0 0
        %3293 = vmatpush2.bf16.xpose.msra.mxu0 0
        %3294 = vmatprep.subr.bf16.mxu0 0
        %3295 = vmatpush2.bf16.xpose.msra.mxu0 0
        %3296 = vmatprep.subr.bf16.mxu0 0
        %3297 = vmatpush2.bf16.xpose.msra.mxu0 0
        %3298 = vmatprep.subr.bf16.mxu0 0
        %3299 = vmatpush2.bf16.xpose.msra.mxu0 0
        %3300 = vmatprep.subr.bf16.mxu0 0
        %3301 = vmatpush2.bf16.xpose.msra.mxu0 0
        %3302 = vmatprep.subr.bf16.mxu0 0
        %3303 = vmatpush2.bf16.xpose.msra.mxu0 0
        %3304 = vmatprep.mubr.bf16.mxu0 0
        %3305 = vmatmul.mubr.bf16.gmra.mxu0 %v3267
        %v3306 = vpop.f32.mrf.mxu0
        %v3307 = vadd.f32 %v962, %v3306
        %v3308 = vpop.f32.mrf.mxu0
        %v3309 = vpop.f32.mrf.mxu0
        %v3310 = vpop.f32.mrf.mxu0
        %3311 = vdwg.mxu0
        %v3312 = vsel %vm1289, %v3307, -inf
        %3313 = vmax.xlane.f32.xlu0 %v3312
        %v3314 = vpop.xlane.xlu0 %3313
        %v3315 = vsub.f32 %v3307, %v3314
        %v3316 = vmul.f32 %v3315, 1.442695
        %v3317 = vpow.pop %v3316
        %v3318 = vsel %vm1289, %v3317, 0.0
        %3319 = vadd.xlane.f32.xlu0 %v3318
        %v3320 = vpop.xlane.xlu0 %3319
        %v3321 = vrcp.pop %v3320
        %v3322 = vmul.f32 %v3317, %v3321
        %v3323 = vpack.c.bf16 %v3322, %v3322
        %3324 = vrot.lane.b32.xlu0 %v2915, 64
        %v3325 = vpop.permute.xlu0 %3324
        %v3327 = vsel %vm1289, %v3323, 0
        %v3330 = vsel %vm1305, %v3325, 0
        %3332 = vmatprep.subr.bf16.mxu0 0
        %3333 = vmatpush1.bf16.msra.mxu0 0
        %3334 = vmatprep.subr.bf16.mxu0 0
        %3335 = vmatpush1.bf16.msra.mxu0 0
        %3336 = vmatprep.subr.bf16.mxu0 0
        %3337 = vmatpush1.bf16.msra.mxu0 0
        %3338 = vmatprep.subr.bf16.mxu0 0
        %3339 = vmatpush1.bf16.msra.mxu0 0
        %3340 = vmatprep.subr.bf16.mxu0 0
        %3341 = vmatpush1.bf16.msra.mxu0 0
        %3342 = vmatprep.subr.bf16.mxu0 0
        %3343 = vmatpush1.bf16.msra.mxu0 0
        %3344 = vmatprep.subr.bf16.mxu0 0
        %3345 = vmatpush1.bf16.msra.mxu0 0
        %3346 = vmatprep.subr.bf16.mxu0 0
        %3347 = vmatpush1.bf16.msra.mxu0 %v3330
        %3348 = vmatprep.subr.bf16.mxu0 0
        %3349 = vmatpush2.bf16.msra.mxu0 0
        %3350 = vmatprep.subr.bf16.mxu0 0
        %3351 = vmatpush2.bf16.msra.mxu0 0
        %3352 = vmatprep.subr.bf16.mxu0 0
        %3353 = vmatpush2.bf16.msra.mxu0 0
        %3354 = vmatprep.subr.bf16.mxu0 0
        %3355 = vmatpush2.bf16.msra.mxu0 0
        %3356 = vmatprep.subr.bf16.mxu0 0
        %3357 = vmatpush2.bf16.msra.mxu0 0
        %3358 = vmatprep.subr.bf16.mxu0 0
        %3359 = vmatpush2.bf16.msra.mxu0 0
        %3360 = vmatprep.subr.bf16.mxu0 0
        %3361 = vmatpush2.bf16.msra.mxu0 0
        %3362 = vmatprep.subr.bf16.mxu0 0
        %3363 = vmatpush2.bf16.msra.mxu0 0
        %3364 = vmatprep.mubr.bf16.mxu0 0
        %3365 = vmatmul.mubr.bf16.gmra.mxu0 %v3327
        %v3366 = vpop.f32.mrf.mxu0
        %v3367 = vadd.f32 0.0, %v3366
        %v3368 = vpop.f32.mrf.mxu0
        %v3369 = vpop.f32.mrf.mxu0
        %v3370 = vpop.f32.mrf.mxu0
        %3371 = vdwg.mxu0
        %v3372 = vpack.c.bf16 %v3367, %v3367
        %v3377 = vunpack.c.l.b16 %v2925
        %v3378 = vunpack.c.l.b16 %v2926
        %v3379 = vunpack.c.l.b16 %v2927
        %v3380 = vunpack.c.l.b16 %v2928
        %v3381 = vpack.c.b16 %v3378, %v3377
        %v3382 = vpack.c.b16 %v3380, %v3379
        %v3386 = vsel %vm1242, %v3372, 0
        %3388 = vmatprep.subr.bf16.mxu0 0
        %3389 = vmatpush1.bf16.msra.mxu0 0
        %3390 = vmatprep.subr.bf16.mxu0 0
        %3391 = vmatpush1.bf16.msra.mxu0 0
        %3392 = vmatprep.subr.bf16.mxu0 0
        %3393 = vmatpush1.bf16.msra.mxu0 0
        %3394 = vmatprep.subr.bf16.mxu0 0
        %3395 = vmatpush1.bf16.msra.mxu0 0
        %3396 = vmatprep.subr.bf16.mxu0 0
        %3397 = vmatpush1.bf16.msra.mxu0 0
        %3398 = vmatprep.subr.bf16.mxu0 0
        %3399 = vmatpush1.bf16.msra.mxu0 0
        %3400 = vmatprep.subr.bf16.mxu0 0
        %3401 = vmatpush1.bf16.msra.mxu0 %v3382
        %3402 = vmatprep.subr.bf16.mxu0 0
        %3403 = vmatpush1.bf16.msra.mxu0 %v3381
        %3404 = vmatprep.subr.bf16.mxu0 0
        %3405 = vmatpush2.bf16.msra.mxu0 0
        %3406 = vmatprep.subr.bf16.mxu0 0
        %3407 = vmatpush2.bf16.msra.mxu0 0
        %3408 = vmatprep.subr.bf16.mxu0 0
        %3409 = vmatpush2.bf16.msra.mxu0 0
        %3410 = vmatprep.subr.bf16.mxu0 0
        %3411 = vmatpush2.bf16.msra.mxu0 0
        %3412 = vmatprep.subr.bf16.mxu0 0
        %3413 = vmatpush2.bf16.msra.mxu0 0
        %3414 = vmatprep.subr.bf16.mxu0 0
        %3415 = vmatpush2.bf16.msra.mxu0 0
        %3416 = vmatprep.subr.bf16.mxu0 0
        %3417 = vmatpush2.bf16.msra.mxu0 0
        %3418 = vmatprep.subr.bf16.mxu0 0
        %3419 = vmatpush2.bf16.msra.mxu0 0
        %3420 = vmatprep.mubr.bf16.mxu0 0
        %3421 = vmatmul.mubr.bf16.gmra.mxu0 %v3386
        %v3422 = vpop.f32.mrf.mxu0
        %v3423 = vadd.f32 0.0, %v3422
        %v3424 = vpop.f32.mrf.mxu0
        %v3425 = vpop.f32.mrf.mxu0
        %v3426 = vpop.f32.mrf.mxu0
        %3427 = vdwg.mxu0
        %v3428 = vadd.f32 %v3257, %v3423
        %3429 = vrot.lane.b32.xlu0 %v2913, 32
        %v3430 = vpop.permute.xlu0 %3429
        %3431 = vrot.lane.b32.xlu0 %v2914, 32
        %v3432 = vpop.permute.xlu0 %3431
        %v3434 = vsel %vm1242, %v3430, 0
        %v3437 = vsel %vm1242, %v3432, 0
        %3439 = vmatprep.subr.bf16.mxu0 0
        %3440 = vmatpush1.bf16.xpose.msra.mxu0 0
        %3441 = vmatprep.subr.bf16.mxu0 0
        %3442 = vmatpush1.bf16.xpose.msra.mxu0 0
        %3443 = vmatprep.subr.bf16.mxu0 0
        %3444 = vmatpush1.bf16.xpose.msra.mxu0 0
        %3445 = vmatprep.subr.bf16.mxu0 0
        %3446 = vmatpush1.bf16.xpose.msra.mxu0 0
        %3447 = vmatprep.subr.bf16.mxu0 0
        %3448 = vmatpush1.bf16.xpose.msra.mxu0 0
        %3449 = vmatprep.subr.bf16.mxu0 0
        %3450 = vmatpush1.bf16.xpose.msra.mxu0 0
        %3451 = vmatprep.subr.bf16.mxu0 0
        %3452 = vmatpush1.bf16.xpose.msra.mxu0 0
        %3453 = vmatprep.subr.bf16.mxu0 0
        %3454 = vmatpush1.bf16.xpose.msra.mxu0 %v3437
        %3455 = vmatprep.subr.bf16.mxu0 0
        %3456 = vmatpush2.bf16.xpose.msra.mxu0 0
        %3457 = vmatprep.subr.bf16.mxu0 0
        %3458 = vmatpush2.bf16.xpose.msra.mxu0 0
        %3459 = vmatprep.subr.bf16.mxu0 0
        %3460 = vmatpush2.bf16.xpose.msra.mxu0 0
        %3461 = vmatprep.subr.bf16.mxu0 0
        %3462 = vmatpush2.bf16.xpose.msra.mxu0 0
        %3463 = vmatprep.subr.bf16.mxu0 0
        %3464 = vmatpush2.bf16.xpose.msra.mxu0 0
        %3465 = vmatprep.subr.bf16.mxu0 0
        %3466 = vmatpush2.bf16.xpose.msra.mxu0 0
        %3467 = vmatprep.subr.bf16.mxu0 0
        %3468 = vmatpush2.bf16.xpose.msra.mxu0 0
        %3469 = vmatprep.subr.bf16.mxu0 0
        %3470 = vmatpush2.bf16.xpose.msra.mxu0 0
        %3471 = vmatprep.mubr.bf16.mxu0 0
        %3472 = vmatmul.mubr.bf16.gmra.mxu0 %v3434
        %v3473 = vpop.f32.mrf.mxu0
        %v3474 = vadd.f32 %v962, %v3473
        %v3475 = vpop.f32.mrf.mxu0
        %v3476 = vpop.f32.mrf.mxu0
        %v3477 = vpop.f32.mrf.mxu0
        %3478 = vdwg.mxu0
        %v3479 = vsel %vm1289, %v3474, -inf
        %3480 = vmax.xlane.f32.xlu0 %v3479
        %v3481 = vpop.xlane.xlu0 %3480
        %v3482 = vsub.f32 %v3474, %v3481
        %v3483 = vmul.f32 %v3482, 1.442695
        %v3484 = vpow.pop %v3483
        %v3485 = vsel %vm1289, %v3484, 0.0
        %3486 = vadd.xlane.f32.xlu0 %v3485
        %v3487 = vpop.xlane.xlu0 %3486
        %v3488 = vrcp.pop %v3487
        %v3489 = vmul.f32 %v3484, %v3488
        %v3490 = vpack.c.bf16 %v3489, %v3489
        %3491 = vrot.lane.b32.xlu0 %v2915, 32
        %v3492 = vpop.permute.xlu0 %3491
        %v3494 = vsel %vm1289, %v3490, 0
        %v3497 = vsel %vm1305, %v3492, 0
        %3499 = vmatprep.subr.bf16.mxu0 0
        %3500 = vmatpush1.bf16.msra.mxu0 0
        %3501 = vmatprep.subr.bf16.mxu0 0
        %3502 = vmatpush1.bf16.msra.mxu0 0
        %3503 = vmatprep.subr.bf16.mxu0 0
        %3504 = vmatpush1.bf16.msra.mxu0 0
        %3505 = vmatprep.subr.bf16.mxu0 0
        %3506 = vmatpush1.bf16.msra.mxu0 0
        %3507 = vmatprep.subr.bf16.mxu0 0
        %3508 = vmatpush1.bf16.msra.mxu0 0
        %3509 = vmatprep.subr.bf16.mxu0 0
        %3510 = vmatpush1.bf16.msra.mxu0 0
        %3511 = vmatprep.subr.bf16.mxu0 0
        %3512 = vmatpush1.bf16.msra.mxu0 0
        %3513 = vmatprep.subr.bf16.mxu0 0
        %3514 = vmatpush1.bf16.msra.mxu0 %v3497
        %3515 = vmatprep.subr.bf16.mxu0 0
        %3516 = vmatpush2.bf16.msra.mxu0 0
        %3517 = vmatprep.subr.bf16.mxu0 0
        %3518 = vmatpush2.bf16.msra.mxu0 0
        %3519 = vmatprep.subr.bf16.mxu0 0
        %3520 = vmatpush2.bf16.msra.mxu0 0
        %3521 = vmatprep.subr.bf16.mxu0 0
        %3522 = vmatpush2.bf16.msra.mxu0 0
        %3523 = vmatprep.subr.bf16.mxu0 0
        %3524 = vmatpush2.bf16.msra.mxu0 0
        %3525 = vmatprep.subr.bf16.mxu0 0
        %3526 = vmatpush2.bf16.msra.mxu0 0
        %3527 = vmatprep.subr.bf16.mxu0 0
        %3528 = vmatpush2.bf16.msra.mxu0 0
        %3529 = vmatprep.subr.bf16.mxu0 0
        %3530 = vmatpush2.bf16.msra.mxu0 0
        %3531 = vmatprep.mubr.bf16.mxu0 0
        %3532 = vmatmul.mubr.bf16.gmra.mxu0 %v3494
        %v3533 = vpop.f32.mrf.mxu0
        %v3534 = vadd.f32 0.0, %v3533
        %v3535 = vpop.f32.mrf.mxu0
        %v3536 = vpop.f32.mrf.mxu0
        %v3537 = vpop.f32.mrf.mxu0
        %3538 = vdwg.mxu0
        %v3539 = vpack.c.bf16 %v3534, %v3534
        %v3544 = vunpack.c.l.b16 %v2929
        %v3545 = vunpack.c.l.b16 %v2930
        %v3546 = vunpack.c.l.b16 %v2931
        %v3547 = vunpack.c.l.b16 %v2932
        %v3548 = vpack.c.b16 %v3545, %v3544
        %v3549 = vpack.c.b16 %v3547, %v3546
        %v3553 = vsel %vm1242, %v3539, 0
        %3555 = vmatprep.subr.bf16.mxu0 0
        %3556 = vmatpush1.bf16.msra.mxu0 0
        %3557 = vmatprep.subr.bf16.mxu0 0
        %3558 = vmatpush1.bf16.msra.mxu0 0
        %3559 = vmatprep.subr.bf16.mxu0 0
        %3560 = vmatpush1.bf16.msra.mxu0 0
        %3561 = vmatprep.subr.bf16.mxu0 0
        %3562 = vmatpush1.bf16.msra.mxu0 0
        %3563 = vmatprep.subr.bf16.mxu0 0
        %3564 = vmatpush1.bf16.msra.mxu0 0
        %3565 = vmatprep.subr.bf16.mxu0 0
        %3566 = vmatpush1.bf16.msra.mxu0 0
        %3567 = vmatprep.subr.bf16.mxu0 0
        %3568 = vmatpush1.bf16.msra.mxu0 %v3549
        %3569 = vmatprep.subr.bf16.mxu0 0
        %3570 = vmatpush1.bf16.msra.mxu0 %v3548
        %3571 = vmatprep.subr.bf16.mxu0 0
        %3572 = vmatpush2.bf16.msra.mxu0 0
        %3573 = vmatprep.subr.bf16.mxu0 0
        %3574 = vmatpush2.bf16.msra.mxu0 0
        %3575 = vmatprep.subr.bf16.mxu0 0
        %3576 = vmatpush2.bf16.msra.mxu0 0
        %3577 = vmatprep.subr.bf16.mxu0 0
        %3578 = vmatpush2.bf16.msra.mxu0 0
        %3579 = vmatprep.subr.bf16.mxu0 0
        %3580 = vmatpush2.bf16.msra.mxu0 0
        %3581 = vmatprep.subr.bf16.mxu0 0
        %3582 = vmatpush2.bf16.msra.mxu0 0
        %3583 = vmatprep.subr.bf16.mxu0 0
        %3584 = vmatpush2.bf16.msra.mxu0 0
        %3585 = vmatprep.subr.bf16.mxu0 0
        %3586 = vmatpush2.bf16.msra.mxu0 0
        %3587 = vmatprep.mubr.bf16.mxu0 0
        %3588 = vmatmul.mubr.bf16.gmra.mxu0 %v3553
        %v3589 = vpop.f32.mrf.mxu0
        %v3590 = vadd.f32 0.0, %v3589
        %v3591 = vpop.f32.mrf.mxu0
        %v3592 = vpop.f32.mrf.mxu0
        %v3593 = vpop.f32.mrf.mxu0
        %3594 = vdwg.mxu0
        %v3595 = vadd.f32 %v3428, %v3590
        %s3596 = scalar_lea.vmem [#allocation13], 1
        %v3597 = vld [vmem:[%s3596] sm:$0x1]
        %v3599 = vlaneseq
        %v3600 = vshrl.u32 %v3599, 7
        %v3601 = vsub.s32 0, %v3600
        %v3602 = vrot.slane %v3597, %v3601
        %v3604 = vadd.f32 %v3595, %v3602
        %v3605 = vadd.f32 %v3604, %v2651
        %s3606 = scalar_lea.vmem [#allocation15], 1
        %v3607 = vld [vmem:[%s3606] sm:$0x1]
        %s3608 = scalar_lea.vmem [#allocation16], 1
        %v3609 = vld [vmem:[%s3608] sm:$0x1]
        %3610 = vadd.xlane.f32.xlu0 %v3605
        %v3611 = vpop.xlane.xlu0 %3610
        %v3612 = vmul.f32 %v3611, %v931
        %v3613 = vsub.f32 %v3605, %v3612
        %v3614 = vmul.f32 %v3613, %v3613
        %3615 = vadd.xlane.f32.xlu0 %v3614
        %v3616 = vpop.xlane.xlu0 %3615
        %v3617 = vmul.f32 %v3616, %v931
        %v3618 = vadd.f32 %v3617, 1e-12
        %v3619 = vrsqrt.pop %v3618
        %v3620 = vmul.f32 %v3613, %v3619
        %v3622 = vlaneseq
        %v3623 = vshrl.u32 %v3622, 7
        %v3624 = vsub.s32 0, %v3623
        %v3625 = vrot.slane %v3607, %v3624
        %v3627 = vmul.f32 %v3620, %v3625
        %v3629 = vlaneseq
        %v3630 = vshrl.u32 %v3629, 7
        %v3631 = vsub.s32 0, %v3630
        %v3632 = vrot.slane %v3609, %v3631
        %v3634 = vadd.f32 %v3627, %v3632
        %v3635 = vpack.c.bf16 %v3634, %v3634
        %s3636 = scalar_lea.vmem [#allocation18], 256
        %v3637 = vld [vmem:[%s3636] sm:$0xff]
        %v3638 = vld [vmem:[%s3636 + $0x8] sm:$0xff]
        %v3639 = vld [vmem:[%s3636 + $0x10] sm:$0xff]
        %v3640 = vld [vmem:[%s3636 + $0x18] sm:$0xff]
        %v3641 = vld [vmem:[%s3636 + $0x20] sm:$0xff]
        %v3642 = vld [vmem:[%s3636 + $0x28] sm:$0xff]
        %v3643 = vld [vmem:[%s3636 + $0x30] sm:$0xff]
        %v3644 = vld [vmem:[%s3636 + $0x38] sm:$0xff]
        %v3645 = vld [vmem:[%s3636 + $0x40] sm:$0xff]
        %v3646 = vld [vmem:[%s3636 + $0x48] sm:$0xff]
        %v3647 = vld [vmem:[%s3636 + $0x50] sm:$0xff]
        %v3648 = vld [vmem:[%s3636 + $0x58] sm:$0xff]
        %v3649 = vld [vmem:[%s3636 + $0x60] sm:$0xff]
        %v3650 = vld [vmem:[%s3636 + $0x68] sm:$0xff]
        %v3651 = vld [vmem:[%s3636 + $0x70] sm:$0xff]
        %v3652 = vld [vmem:[%s3636 + $0x78] sm:$0xff]
        %v3653 = vld [vmem:[%s3636 + $0x80] sm:$0xff]
        %v3654 = vld [vmem:[%s3636 + $0x88] sm:$0xff]
        %v3655 = vld [vmem:[%s3636 + $0x90] sm:$0xff]
        %v3656 = vld [vmem:[%s3636 + $0x98] sm:$0xff]
        %v3657 = vld [vmem:[%s3636 + $0xa0] sm:$0xff]
        %v3658 = vld [vmem:[%s3636 + $0xa8] sm:$0xff]
        %v3659 = vld [vmem:[%s3636 + $0xb0] sm:$0xff]
        %v3660 = vld [vmem:[%s3636 + $0xb8] sm:$0xff]
        %v3661 = vld [vmem:[%s3636 + $0xc0] sm:$0xff]
        %v3662 = vld [vmem:[%s3636 + $0xc8] sm:$0xff]
        %v3663 = vld [vmem:[%s3636 + $0xd0] sm:$0xff]
        %v3664 = vld [vmem:[%s3636 + $0xd8] sm:$0xff]
        %v3665 = vld [vmem:[%s3636 + $0xe0] sm:$0xff]
        %v3666 = vld [vmem:[%s3636 + $0xe8] sm:$0xff]
        %v3667 = vld [vmem:[%s3636 + $0xf0] sm:$0xff]
        %v3668 = vld [vmem:[%s3636 + $0xf8] sm:$0xff]
        %s3669 = scalar_lea.vmem [#allocation19], 4
        %v3670 = vld [vmem:[%s3669] sm:$0xf]
        %v3672 = vlaneseq
        %v3673 = vshrl.u32 %v3672, 7
        %v3674 = vsub.s32 0, %v3673
        %v3675 = vrot.slane %v3670, %v3674
        %v3676 = vlaneseq
        %v3677 = vshrl.u32 %v3676, 7
        %v3678 = vsub.s32 1, %v3677
        %v3679 = vrot.slane %v3670, %v3678
        %v3680 = vlaneseq
        %v3681 = vshrl.u32 %v3680, 7
        %v3682 = vsub.s32 2, %v3681
        %v3683 = vrot.slane %v3670, %v3682
        %v3684 = vlaneseq
        %v3685 = vshrl.u32 %v3684, 7
        %v3686 = vsub.s32 3, %v3685
        %v3687 = vrot.slane %v3670, %v3686
        %v3724 = vunpack.c.l.b16 %v3637
        %v3725 = vunpack.c.h.b16 %v3637
        %v3726 = vunpack.c.l.b16 %v3638
        %v3727 = vunpack.c.h.b16 %v3638
        %v3728 = vunpack.c.l.b16 %v3639
        %v3729 = vunpack.c.h.b16 %v3639
        %v3730 = vunpack.c.l.b16 %v3640
        %v3731 = vunpack.c.h.b16 %v3640
        %v3732 = vunpack.c.l.b16 %v3641
        %v3733 = vunpack.c.h.b16 %v3641
        %v3734 = vunpack.c.l.b16 %v3642
        %v3735 = vunpack.c.h.b16 %v3642
        %v3736 = vunpack.c.l.b16 %v3643
        %v3737 = vunpack.c.h.b16 %v3643
        %v3738 = vunpack.c.l.b16 %v3644
        %v3739 = vunpack.c.h.b16 %v3644
        %v3740 = vunpack.c.l.b16 %v3645
        %v3741 = vunpack.c.h.b16 %v3645
        %v3742 = vunpack.c.l.b16 %v3646
        %v3743 = vunpack.c.h.b16 %v3646
        %v3744 = vunpack.c.l.b16 %v3647
        %v3745 = vunpack.c.h.b16 %v3647
        %v3746 = vunpack.c.l.b16 %v3648
        %v3747 = vunpack.c.h.b16 %v3648
        %v3748 = vunpack.c.l.b16 %v3649
        %v3749 = vunpack.c.h.b16 %v3649
        %v3750 = vunpack.c.l.b16 %v3650
        %v3751 = vunpack.c.h.b16 %v3650
        %v3752 = vunpack.c.l.b16 %v3651
        %v3753 = vunpack.c.h.b16 %v3651
        %v3754 = vunpack.c.l.b16 %v3652
        %v3755 = vunpack.c.h.b16 %v3652
        %v3756 = vunpack.c.l.b16 %v3653
        %v3757 = vunpack.c.h.b16 %v3653
        %v3758 = vunpack.c.l.b16 %v3654
        %v3759 = vunpack.c.h.b16 %v3654
        %v3760 = vunpack.c.l.b16 %v3655
        %v3761 = vunpack.c.h.b16 %v3655
        %v3762 = vunpack.c.l.b16 %v3656
        %v3763 = vunpack.c.h.b16 %v3656
        %v3764 = vunpack.c.l.b16 %v3657
        %v3765 = vunpack.c.h.b16 %v3657
        %v3766 = vunpack.c.l.b16 %v3658
        %v3767 = vunpack.c.h.b16 %v3658
        %v3768 = vunpack.c.l.b16 %v3659
        %v3769 = vunpack.c.h.b16 %v3659
        %v3770 = vunpack.c.l.b16 %v3660
        %v3771 = vunpack.c.h.b16 %v3660
        %v3772 = vunpack.c.l.b16 %v3661
        %v3773 = vunpack.c.h.b16 %v3661
        %v3774 = vunpack.c.l.b16 %v3662
        %v3775 = vunpack.c.h.b16 %v3662
        %v3776 = vunpack.c.l.b16 %v3663
        %v3777 = vunpack.c.h.b16 %v3663
        %v3778 = vunpack.c.l.b16 %v3664
        %v3779 = vunpack.c.h.b16 %v3664
        %v3780 = vunpack.c.l.b16 %v3665
        %v3781 = vunpack.c.h.b16 %v3665
        %v3782 = vunpack.c.l.b16 %v3666
        %v3783 = vunpack.c.h.b16 %v3666
        %v3784 = vunpack.c.l.b16 %v3667
        %v3785 = vunpack.c.h.b16 %v3667
        %v3786 = vunpack.c.l.b16 %v3668
        %v3787 = vunpack.c.h.b16 %v3668
        %v3788 = vpack.c.b16 %v3728, %v3724
        %v3789 = vpack.c.b16 %v3729, %v3725
        %v3790 = vpack.c.b16 %v3730, %v3726
        %v3791 = vpack.c.b16 %v3731, %v3727
        %v3792 = vpack.c.b16 %v3736, %v3732
        %v3793 = vpack.c.b16 %v3737, %v3733
        %v3794 = vpack.c.b16 %v3738, %v3734
        %v3795 = vpack.c.b16 %v3739, %v3735
        %v3796 = vpack.c.b16 %v3744, %v3740
        %v3797 = vpack.c.b16 %v3745, %v3741
        %v3798 = vpack.c.b16 %v3746, %v3742
        %v3799 = vpack.c.b16 %v3747, %v3743
        %v3800 = vpack.c.b16 %v3752, %v3748
        %v3801 = vpack.c.b16 %v3753, %v3749
        %v3802 = vpack.c.b16 %v3754, %v3750
        %v3803 = vpack.c.b16 %v3755, %v3751
        %v3804 = vpack.c.b16 %v3760, %v3756
        %v3805 = vpack.c.b16 %v3761, %v3757
        %v3806 = vpack.c.b16 %v3762, %v3758
        %v3807 = vpack.c.b16 %v3763, %v3759
        %v3808 = vpack.c.b16 %v3768, %v3764
        %v3809 = vpack.c.b16 %v3769, %v3765
        %v3810 = vpack.c.b16 %v3770, %v3766
        %v3811 = vpack.c.b16 %v3771, %v3767
        %v3812 = vpack.c.b16 %v3776, %v3772
        %v3813 = vpack.c.b16 %v3777, %v3773
        %v3814 = vpack.c.b16 %v3778, %v3774
        %v3815 = vpack.c.b16 %v3779, %v3775
        %v3816 = vpack.c.b16 %v3784, %v3780
        %v3817 = vpack.c.b16 %v3785, %v3781
        %v3818 = vpack.c.b16 %v3786, %v3782
        %v3819 = vpack.c.b16 %v3787, %v3783
        %3852 = vmatprep.subr.bf16.mxu0 %v3817
        %3853 = vmatpush1.bf16.msra.mxu0 %v3816
        %3854 = vmatprep.subr.bf16.mxu0 %v3813
        %3855 = vmatpush1.bf16.msra.mxu0 %v3812
        %3856 = vmatprep.subr.bf16.mxu0 %v3809
        %3857 = vmatpush1.bf16.msra.mxu0 %v3808
        %3858 = vmatprep.subr.bf16.mxu0 %v3805
        %3859 = vmatpush1.bf16.msra.mxu0 %v3804
        %3860 = vmatprep.subr.bf16.mxu0 %v3801
        %3861 = vmatpush1.bf16.msra.mxu0 %v3800
        %3862 = vmatprep.subr.bf16.mxu0 %v3797
        %3863 = vmatpush1.bf16.msra.mxu0 %v3796
        %3864 = vmatprep.subr.bf16.mxu0 %v3793
        %3865 = vmatpush1.bf16.msra.mxu0 %v3792
        %3866 = vmatprep.subr.bf16.mxu0 %v3789
        %3867 = vmatpush1.bf16.msra.mxu0 %v3788
        %3868 = vmatprep.subr.bf16.mxu0 0
        %3869 = vmatpush2.bf16.msra.mxu0 0
        %3870 = vmatprep.subr.bf16.mxu0 0
        %3871 = vmatpush2.bf16.msra.mxu0 0
        %3872 = vmatprep.subr.bf16.mxu0 0
        %3873 = vmatpush2.bf16.msra.mxu0 0
        %3874 = vmatprep.subr.bf16.mxu0 0
        %3875 = vmatpush2.bf16.msra.mxu0 0
        %3876 = vmatprep.subr.bf16.mxu0 0
        %3877 = vmatpush2.bf16.msra.mxu0 0
        %3878 = vmatprep.subr.bf16.mxu0 0
        %3879 = vmatpush2.bf16.msra.mxu0 0
        %3880 = vmatprep.subr.bf16.mxu0 0
        %3881 = vmatpush2.bf16.msra.mxu0 0
        %3882 = vmatprep.subr.bf16.mxu0 0
        %3883 = vmatpush2.bf16.msra.mxu0 0
        %3884 = vmatprep.mubr.bf16.mxu0 0
        %3885 = vmatmul.mubr.bf16.gmra.mxu0 %v3635
        %v3886 = vpop.f32.mrf.mxu0
        %v3887 = vadd.f32 %v3675, %v3886
        %v3888 = vpop.f32.mrf.mxu0
        %v3889 = vadd.f32 %v3679, %v3888
        %v3890 = vpop.f32.mrf.mxu0
        %v3891 = vpop.f32.mrf.mxu0
        %3892 = vdwg.mxu0
        %3893 = vmatprep.subr.bf16.mxu0 %v3819
        %3894 = vmatpush1.bf16.msra.mxu0 %v3818
        %3895 = vmatprep.subr.bf16.mxu0 %v3815
        %3896 = vmatpush1.bf16.msra.mxu0 %v3814
        %3897 = vmatprep.subr.bf16.mxu0 %v3811
        %3898 = vmatpush1.bf16.msra.mxu0 %v3810
        %3899 = vmatprep.subr.bf16.mxu0 %v3807
        %3900 = vmatpush1.bf16.msra.mxu0 %v3806
        %3901 = vmatprep.subr.bf16.mxu0 %v3803
        %3902 = vmatpush1.bf16.msra.mxu0 %v3802
        %3903 = vmatprep.subr.bf16.mxu0 %v3799
        %3904 = vmatpush1.bf16.msra.mxu0 %v3798
        %3905 = vmatprep.subr.bf16.mxu0 %v3795
        %3906 = vmatpush1.bf16.msra.mxu0 %v3794
        %3907 = vmatprep.subr.bf16.mxu0 %v3791
        %3908 = vmatpush1.bf16.msra.mxu0 %v3790
        %3909 = vmatprep.subr.bf16.mxu0 0
        %3910 = vmatpush2.bf16.msra.mxu0 0
        %3911 = vmatprep.subr.bf16.mxu0 0
        %3912 = vmatpush2.bf16.msra.mxu0 0
        %3913 = vmatprep.subr.bf16.mxu0 0
        %3914 = vmatpush2.bf16.msra.mxu0 0
        %3915 = vmatprep.subr.bf16.mxu0 0
        %3916 = vmatpush2.bf16.msra.mxu0 0
        %3917 = vmatprep.subr.bf16.mxu0 0
        %3918 = vmatpush2.bf16.msra.mxu0 0
        %3919 = vmatprep.subr.bf16.mxu0 0
        %3920 = vmatpush2.bf16.msra.mxu0 0
        %3921 = vmatprep.subr.bf16.mxu0 0
        %3922 = vmatpush2.bf16.msra.mxu0 0
        %3923 = vmatprep.subr.bf16.mxu0 0
        %3924 = vmatpush2.bf16.msra.mxu0 0
        %3925 = vmatprep.mubr.bf16.mxu0 0
        %3926 = vmatmul.mubr.bf16.gmra.mxu0 %v3635
        %v3927 = vpop.f32.mrf.mxu0
        %v3928 = vadd.f32 %v3683, %v3927
        %v3929 = vpop.f32.mrf.mxu0
        %v3930 = vadd.f32 %v3687, %v3929
        %v3931 = vpop.f32.mrf.mxu0
        %v3932 = vpop.f32.mrf.mxu0
        %3933 = vdwg.mxu0
        %v3934 = vmul.f32 %v3887, 0.5
        %v3935 = vmul.f32 %v3889, 0.5
        %v3936 = vmul.f32 %v3928, 0.5
        %v3937 = vmul.f32 %v3930, 0.5
        %v3938 = vmul.f32 %v3887, 0.044715
        %v3939 = vmul.f32 %v3889, 0.044715
        %v3940 = vmul.f32 %v3928, 0.044715
        %v3941 = vmul.f32 %v3930, 0.044715
        %v3942 = vmul.f32 %v3938, %v3887
        %v3943 = vmul.f32 %v3939, %v3889
        %v3944 = vmul.f32 %v3940, %v3928
        %v3945 = vmul.f32 %v3941, %v3930
        %v3946 = vmul.f32 %v3942, %v3887
        %v3947 = vmul.f32 %v3943, %v3889
        %v3948 = vmul.f32 %v3944, %v3928
        %v3949 = vmul.f32 %v3945, %v3930
        %v3950 = vadd.f32 %v3887, %v3946
        %v3951 = vadd.f32 %v3889, %v3947
        %v3952 = vadd.f32 %v3928, %v3948
        %v3953 = vadd.f32 %v3930, %v3949
        %v3954 = vmul.f32 %v3950, 0.7978846
        %v3955 = vmul.f32 %v3951, 0.7978846
        %v3956 = vmul.f32 %v3952, 0.7978846
        %v3957 = vmul.f32 %v3953, 0.7978846
        %v3958 = vtanh.pop %v3954
        %v3959 = vtanh.pop %v3955
        %v3960 = vtanh.pop %v3956
        %v3961 = vtanh.pop %v3957
        %v3962 = vadd.f32 %v3958, 1.0
        %v3963 = vadd.f32 %v3959, 1.0
        %v3964 = vadd.f32 %v3960, 1.0
        %v3965 = vadd.f32 %v3961, 1.0
        %v3966 = vmul.f32 %v3934, %v3962
        %v3967 = vmul.f32 %v3935, %v3963
        %v3968 = vmul.f32 %v3936, %v3964
        %v3969 = vmul.f32 %v3937, %v3965
        %v3970 = vpack.c.bf16 %v3966, %v3966
        %v3971 = vpack.c.bf16 %v3967, %v3967
        %v3972 = vpack.c.bf16 %v3968, %v3968
        %v3973 = vpack.c.bf16 %v3969, %v3969
        %s3974 = scalar_lea.vmem [#allocation21], 256
        %v3975 = vld [vmem:[%s3974] sm:$0xf]
        %v3976 = vld [vmem:[%s3974 + $0x4] sm:$0xf]
        %v3977 = vld [vmem:[%s3974 + $0x8] sm:$0xf]
        %v3978 = vld [vmem:[%s3974 + $0xc] sm:$0xf]
        %v3979 = vld [vmem:[%s3974 + $0x10] sm:$0xf]
        %v3980 = vld [vmem:[%s3974 + $0x14] sm:$0xf]
        %v3981 = vld [vmem:[%s3974 + $0x18] sm:$0xf]
        %v3982 = vld [vmem:[%s3974 + $0x1c] sm:$0xf]
        %v3983 = vld [vmem:[%s3974 + $0x20] sm:$0xf]
        %v3984 = vld [vmem:[%s3974 + $0x24] sm:$0xf]
        %v3985 = vld [vmem:[%s3974 + $0x28] sm:$0xf]
        %v3986 = vld [vmem:[%s3974 + $0x2c] sm:$0xf]
        %v3987 = vld [vmem:[%s3974 + $0x30] sm:$0xf]
        %v3988 = vld [vmem:[%s3974 + $0x34] sm:$0xf]
        %v3989 = vld [vmem:[%s3974 + $0x38] sm:$0xf]
        %v3990 = vld [vmem:[%s3974 + $0x3c] sm:$0xf]
        %v3991 = vld [vmem:[%s3974 + $0x40] sm:$0xf]
        %v3992 = vld [vmem:[%s3974 + $0x44] sm:$0xf]
        %v3993 = vld [vmem:[%s3974 + $0x48] sm:$0xf]
        %v3994 = vld [vmem:[%s3974 + $0x4c] sm:$0xf]
        %v3995 = vld [vmem:[%s3974 + $0x50] sm:$0xf]
        %v3996 = vld [vmem:[%s3974 + $0x54] sm:$0xf]
        %v3997 = vld [vmem:[%s3974 + $0x58] sm:$0xf]
        %v3998 = vld [vmem:[%s3974 + $0x5c] sm:$0xf]
        %v3999 = vld [vmem:[%s3974 + $0x60] sm:$0xf]
        %v4000 = vld [vmem:[%s3974 + $0x64] sm:$0xf]
        %v4001 = vld [vmem:[%s3974 + $0x68] sm:$0xf]
        %v4002 = vld [vmem:[%s3974 + $0x6c] sm:$0xf]
        %v4003 = vld [vmem:[%s3974 + $0x70] sm:$0xf]
        %v4004 = vld [vmem:[%s3974 + $0x74] sm:$0xf]
        %v4005 = vld [vmem:[%s3974 + $0x78] sm:$0xf]
        %v4006 = vld [vmem:[%s3974 + $0x7c] sm:$0xf]
        %v4007 = vld [vmem:[%s3974 + $0x80] sm:$0xf]
        %v4008 = vld [vmem:[%s3974 + $0x84] sm:$0xf]
        %v4009 = vld [vmem:[%s3974 + $0x88] sm:$0xf]
        %v4010 = vld [vmem:[%s3974 + $0x8c] sm:$0xf]
        %v4011 = vld [vmem:[%s3974 + $0x90] sm:$0xf]
        %v4012 = vld [vmem:[%s3974 + $0x94] sm:$0xf]
        %v4013 = vld [vmem:[%s3974 + $0x98] sm:$0xf]
        %v4014 = vld [vmem:[%s3974 + $0x9c] sm:$0xf]
        %v4015 = vld [vmem:[%s3974 + $0xa0] sm:$0xf]
        %v4016 = vld [vmem:[%s3974 + $0xa4] sm:$0xf]
        %v4017 = vld [vmem:[%s3974 + $0xa8] sm:$0xf]
        %v4018 = vld [vmem:[%s3974 + $0xac] sm:$0xf]
        %v4019 = vld [vmem:[%s3974 + $0xb0] sm:$0xf]
        %v4020 = vld [vmem:[%s3974 + $0xb4] sm:$0xf]
        %v4021 = vld [vmem:[%s3974 + $0xb8] sm:$0xf]
        %v4022 = vld [vmem:[%s3974 + $0xbc] sm:$0xf]
        %v4023 = vld [vmem:[%s3974 + $0xc0] sm:$0xf]
        %v4024 = vld [vmem:[%s3974 + $0xc4] sm:$0xf]
        %v4025 = vld [vmem:[%s3974 + $0xc8] sm:$0xf]
        %v4026 = vld [vmem:[%s3974 + $0xcc] sm:$0xf]
        %v4027 = vld [vmem:[%s3974 + $0xd0] sm:$0xf]
        %v4028 = vld [vmem:[%s3974 + $0xd4] sm:$0xf]
        %v4029 = vld [vmem:[%s3974 + $0xd8] sm:$0xf]
        %v4030 = vld [vmem:[%s3974 + $0xdc] sm:$0xf]
        %v4031 = vld [vmem:[%s3974 + $0xe0] sm:$0xf]
        %v4032 = vld [vmem:[%s3974 + $0xe4] sm:$0xf]
        %v4033 = vld [vmem:[%s3974 + $0xe8] sm:$0xf]
        %v4034 = vld [vmem:[%s3974 + $0xec] sm:$0xf]
        %v4035 = vld [vmem:[%s3974 + $0xf0] sm:$0xf]
        %v4036 = vld [vmem:[%s3974 + $0xf4] sm:$0xf]
        %v4037 = vld [vmem:[%s3974 + $0xf8] sm:$0xf]
        %v4038 = vld [vmem:[%s3974 + $0xfc] sm:$0xf]
        %s4039 = scalar_lea.vmem [#allocation22], 1
        %v4040 = vld [vmem:[%s4039] sm:$0x1]
        %v4042 = vlaneseq
        %v4043 = vshrl.u32 %v4042, 7
        %v4044 = vsub.s32 0, %v4043
        %v4045 = vrot.slane %v4040, %v4044
        %v4111 = vunpack.c.l.b16 %v3975
        %v4112 = vunpack.c.l.b16 %v3976
        %v4113 = vunpack.c.l.b16 %v3977
        %v4114 = vunpack.c.l.b16 %v3978
        %v4115 = vunpack.c.l.b16 %v3979
        %v4116 = vunpack.c.l.b16 %v3980
        %v4117 = vunpack.c.l.b16 %v3981
        %v4118 = vunpack.c.l.b16 %v3982
        %v4119 = vunpack.c.l.b16 %v3983
        %v4120 = vunpack.c.l.b16 %v3984
        %v4121 = vunpack.c.l.b16 %v3985
        %v4122 = vunpack.c.l.b16 %v3986
        %v4123 = vunpack.c.l.b16 %v3987
        %v4124 = vunpack.c.l.b16 %v3988
        %v4125 = vunpack.c.l.b16 %v3989
        %v4126 = vunpack.c.l.b16 %v3990
        %v4127 = vunpack.c.l.b16 %v3991
        %v4128 = vunpack.c.l.b16 %v3992
        %v4129 = vunpack.c.l.b16 %v3993
        %v4130 = vunpack.c.l.b16 %v3994
        %v4131 = vunpack.c.l.b16 %v3995
        %v4132 = vunpack.c.l.b16 %v3996
        %v4133 = vunpack.c.l.b16 %v3997
        %v4134 = vunpack.c.l.b16 %v3998
        %v4135 = vunpack.c.l.b16 %v3999
        %v4136 = vunpack.c.l.b16 %v4000
        %v4137 = vunpack.c.l.b16 %v4001
        %v4138 = vunpack.c.l.b16 %v4002
        %v4139 = vunpack.c.l.b16 %v4003
        %v4140 = vunpack.c.l.b16 %v4004
        %v4141 = vunpack.c.l.b16 %v4005
        %v4142 = vunpack.c.l.b16 %v4006
        %v4143 = vunpack.c.l.b16 %v4007
        %v4144 = vunpack.c.l.b16 %v4008
        %v4145 = vunpack.c.l.b16 %v4009
        %v4146 = vunpack.c.l.b16 %v4010
        %v4147 = vunpack.c.l.b16 %v4011
        %v4148 = vunpack.c.l.b16 %v4012
        %v4149 = vunpack.c.l.b16 %v4013
        %v4150 = vunpack.c.l.b16 %v4014
        %v4151 = vunpack.c.l.b16 %v4015
        %v4152 = vunpack.c.l.b16 %v4016
        %v4153 = vunpack.c.l.b16 %v4017
        %v4154 = vunpack.c.l.b16 %v4018
        %v4155 = vunpack.c.l.b16 %v4019
        %v4156 = vunpack.c.l.b16 %v4020
        %v4157 = vunpack.c.l.b16 %v4021
        %v4158 = vunpack.c.l.b16 %v4022
        %v4159 = vunpack.c.l.b16 %v4023
        %v4160 = vunpack.c.l.b16 %v4024
        %v4161 = vunpack.c.l.b16 %v4025
        %v4162 = vunpack.c.l.b16 %v4026
        %v4163 = vunpack.c.l.b16 %v4027
        %v4164 = vunpack.c.l.b16 %v4028
        %v4165 = vunpack.c.l.b16 %v4029
        %v4166 = vunpack.c.l.b16 %v4030
        %v4167 = vunpack.c.l.b16 %v4031
        %v4168 = vunpack.c.l.b16 %v4032
        %v4169 = vunpack.c.l.b16 %v4033
        %v4170 = vunpack.c.l.b16 %v4034
        %v4171 = vunpack.c.l.b16 %v4035
        %v4172 = vunpack.c.l.b16 %v4036
        %v4173 = vunpack.c.l.b16 %v4037
        %v4174 = vunpack.c.l.b16 %v4038
        %v4175 = vpack.c.b16 %v4112, %v4111
        %v4176 = vpack.c.b16 %v4114, %v4113
        %v4177 = vpack.c.b16 %v4116, %v4115
        %v4178 = vpack.c.b16 %v4118, %v4117
        %v4179 = vpack.c.b16 %v4120, %v4119
        %v4180 = vpack.c.b16 %v4122, %v4121
        %v4181 = vpack.c.b16 %v4124, %v4123
        %v4182 = vpack.c.b16 %v4126, %v4125
        %v4183 = vpack.c.b16 %v4128, %v4127
        %v4184 = vpack.c.b16 %v4130, %v4129
        %v4185 = vpack.c.b16 %v4132, %v4131
        %v4186 = vpack.c.b16 %v4134, %v4133
        %v4187 = vpack.c.b16 %v4136, %v4135
        %v4188 = vpack.c.b16 %v4138, %v4137
        %v4189 = vpack.c.b16 %v4140, %v4139
        %v4190 = vpack.c.b16 %v4142, %v4141
        %v4191 = vpack.c.b16 %v4144, %v4143
        %v4192 = vpack.c.b16 %v4146, %v4145
        %v4193 = vpack.c.b16 %v4148, %v4147
        %v4194 = vpack.c.b16 %v4150, %v4149
        %v4195 = vpack.c.b16 %v4152, %v4151
        %v4196 = vpack.c.b16 %v4154, %v4153
        %v4197 = vpack.c.b16 %v4156, %v4155
        %v4198 = vpack.c.b16 %v4158, %v4157
        %v4199 = vpack.c.b16 %v4160, %v4159
        %v4200 = vpack.c.b16 %v4162, %v4161
        %v4201 = vpack.c.b16 %v4164, %v4163
        %v4202 = vpack.c.b16 %v4166, %v4165
        %v4203 = vpack.c.b16 %v4168, %v4167
        %v4204 = vpack.c.b16 %v4170, %v4169
        %v4205 = vpack.c.b16 %v4172, %v4171
        %v4206 = vpack.c.b16 %v4174, %v4173
        %4239 = vmatprep.subr.bf16.mxu0 0
        %4240 = vmatpush1.bf16.msra.mxu0 %v4182
        %4241 = vmatprep.subr.bf16.mxu0 0
        %4242 = vmatpush1.bf16.msra.mxu0 %v4181
        %4243 = vmatprep.subr.bf16.mxu0 0
        %4244 = vmatpush1.bf16.msra.mxu0 %v4180
        %4245 = vmatprep.subr.bf16.mxu0 0
        %4246 = vmatpush1.bf16.msra.mxu0 %v4179
        %4247 = vmatprep.subr.bf16.mxu0 0
        %4248 = vmatpush1.bf16.msra.mxu0 %v4178
        %4249 = vmatprep.subr.bf16.mxu0 0
        %4250 = vmatpush1.bf16.msra.mxu0 %v4177
        %4251 = vmatprep.subr.bf16.mxu0 0
        %4252 = vmatpush1.bf16.msra.mxu0 %v4176
        %4253 = vmatprep.subr.bf16.mxu0 0
        %4254 = vmatpush1.bf16.msra.mxu0 %v4175
        %4255 = vmatprep.subr.bf16.mxu0 0
        %4256 = vmatpush2.bf16.msra.mxu0 %v4190
        %4257 = vmatprep.subr.bf16.mxu0 0
        %4258 = vmatpush2.bf16.msra.mxu0 %v4189
        %4259 = vmatprep.subr.bf16.mxu0 0
        %4260 = vmatpush2.bf16.msra.mxu0 %v4188
        %4261 = vmatprep.subr.bf16.mxu0 0
        %4262 = vmatpush2.bf16.msra.mxu0 %v4187
        %4263 = vmatprep.subr.bf16.mxu0 0
        %4264 = vmatpush2.bf16.msra.mxu0 %v4186
        %4265 = vmatprep.subr.bf16.mxu0 0
        %4266 = vmatpush2.bf16.msra.mxu0 %v4185
        %4267 = vmatprep.subr.bf16.mxu0 0
        %4268 = vmatpush2.bf16.msra.mxu0 %v4184
        %4269 = vmatprep.subr.bf16.mxu0 0
        %4270 = vmatpush2.bf16.msra.mxu0 %v4183
        %4271 = vmatprep.mubr.bf16.mxu0 %v3971
        %4272 = vmatmul.mubr.bf16.gmra.mxu0 %v3970
        %v4273 = vpop.f32.mrf.mxu0
        %v4274 = vadd.f32 %v4045, %v4273
        %v4275 = vpop.f32.mrf.mxu0
        %v4276 = vpop.f32.mrf.mxu0
        %v4277 = vpop.f32.mrf.mxu0
        %4278 = vdwg.mxu0
        %4279 = vmatprep.subr.bf16.mxu0 0
        %4280 = vmatpush1.bf16.msra.mxu0 %v4198
        %4281 = vmatprep.subr.bf16.mxu0 0
        %4282 = vmatpush1.bf16.msra.mxu0 %v4197
        %4283 = vmatprep.subr.bf16.mxu0 0
        %4284 = vmatpush1.bf16.msra.mxu0 %v4196
        %4285 = vmatprep.subr.bf16.mxu0 0
        %4286 = vmatpush1.bf16.msra.mxu0 %v4195
        %4287 = vmatprep.subr.bf16.mxu0 0
        %4288 = vmatpush1.bf16.msra.mxu0 %v4194
        %4289 = vmatprep.subr.bf16.mxu0 0
        %4290 = vmatpush1.bf16.msra.mxu0 %v4193
        %4291 = vmatprep.subr.bf16.mxu0 0
        %4292 = vmatpush1.bf16.msra.mxu0 %v4192
        %4293 = vmatprep.subr.bf16.mxu0 0
        %4294 = vmatpush1.bf16.msra.mxu0 %v4191
        %4295 = vmatprep.subr.bf16.mxu0 0
        %4296 = vmatpush2.bf16.msra.mxu0 %v4206
        %4297 = vmatprep.subr.bf16.mxu0 0
        %4298 = vmatpush2.bf16.msra.mxu0 %v4205
        %4299 = vmatprep.subr.bf16.mxu0 0
        %4300 = vmatpush2.bf16.msra.mxu0 %v4204
        %4301 = vmatprep.subr.bf16.mxu0 0
        %4302 = vmatpush2.bf16.msra.mxu0 %v4203
        %4303 = vmatprep.subr.bf16.mxu0 0
        %4304 = vmatpush2.bf16.msra.mxu0 %v4202
        %4305 = vmatprep.subr.bf16.mxu0 0
        %4306 = vmatpush2.bf16.msra.mxu0 %v4201
        %4307 = vmatprep.subr.bf16.mxu0 0
        %4308 = vmatpush2.bf16.msra.mxu0 %v4200
        %4309 = vmatprep.subr.bf16.mxu0 0
        %4310 = vmatpush2.bf16.msra.mxu0 %v4199
        %4311 = vmatprep.mubr.bf16.mxu0 %v3973
        %4312 = vmatmul.mubr.bf16.gmra.mxu0 %v3972
        %v4313 = vpop.f32.mrf.mxu0
        %v4314 = vadd.f32 %v4274, %v4313
        %v4315 = vpop.f32.mrf.mxu0
        %v4316 = vpop.f32.mrf.mxu0
        %v4317 = vpop.f32.mrf.mxu0
        %4318 = vdwg.mxu0
        %v4319 = vadd.f32 %v4314, %v3634
        %s4320 = scalar_lea.vmem [#allocation24], 1
        %v4321 = vld [vmem:[%s4320] sm:$0x1]
        %s4322 = scalar_lea.vmem [#allocation25], 1
        %v4323 = vld [vmem:[%s4322] sm:$0x1]
        %4324 = vadd.xlane.f32.xlu0 %v4319
        %v4325 = vpop.xlane.xlu0 %4324
        %v4326 = vmul.f32 %v4325, %v931
        %v4327 = vsub.f32 %v4319, %v4326
        %v4328 = vmul.f32 %v4327, %v4327
        %4329 = vadd.xlane.f32.xlu0 %v4328
        %v4330 = vpop.xlane.xlu0 %4329
        %v4331 = vmul.f32 %v4330, %v931
        %v4332 = vadd.f32 %v4331, 1e-12
        %v4333 = vrsqrt.pop %v4332
        %v4334 = vmul.f32 %v4327, %v4333
        %v4336 = vlaneseq
        %v4337 = vshrl.u32 %v4336, 7
        %v4338 = vsub.s32 0, %v4337
        %v4339 = vrot.slane %v4321, %v4338
        %v4341 = vmul.f32 %v4334, %v4339
        %v4343 = vlaneseq
        %v4344 = vshrl.u32 %v4343, 7
        %v4345 = vsub.s32 0, %v4344
        %v4346 = vrot.slane %v4323, %v4345
        %v4348 = vadd.f32 %v4341, %v4346
        %v4349 = vpack.c.bf16 %v4348, %v4348
        %v4350 = vld [vmem:[#allocation27] sm:$0xff]
        %v4351 = vld [vmem:[#allocation27 + $0x8] sm:$0xff]
        %v4352 = vld [vmem:[#allocation27 + $0x10] sm:$0xff]
        %v4353 = vld [vmem:[#allocation27 + $0x18] sm:$0xff]
        %v4354 = vld [vmem:[#allocation27 + $0x20] sm:$0xff]
        %v4355 = vld [vmem:[#allocation27 + $0x28] sm:$0xff]
        %v4356 = vld [vmem:[#allocation27 + $0x30] sm:$0xff]
        %v4357 = vld [vmem:[#allocation27 + $0x38] sm:$0xff]
        %v4358 = vld [vmem:[#allocation27 + $0x40] sm:$0xff]
        %v4359 = vld [vmem:[#allocation27 + $0x48] sm:$0xff]
        %v4360 = vld [vmem:[#allocation27 + $0x50] sm:$0xff]
        %v4361 = vld [vmem:[#allocation27 + $0x58] sm:$0xff]
        %v4362 = vld [vmem:[#allocation27 + $0x60] sm:$0xff]
        %v4363 = vld [vmem:[#allocation27 + $0x68] sm:$0xff]
        %v4364 = vld [vmem:[#allocation27 + $0x70] sm:$0xff]
        %v4365 = vld [vmem:[#allocation27 + $0x78] sm:$0xff]
        %v4366 = vld [vmem:[#allocation27 + $0x80] sm:$0xff]
        %v4367 = vld [vmem:[#allocation27 + $0x88] sm:$0xff]
        %v4368 = vld [vmem:[#allocation27 + $0x90] sm:$0xff]
        %v4369 = vld [vmem:[#allocation27 + $0x98] sm:$0xff]
        %v4370 = vld [vmem:[#allocation27 + $0xa0] sm:$0xff]
        %v4371 = vld [vmem:[#allocation27 + $0xa8] sm:$0xff]
        %v4372 = vld [vmem:[#allocation27 + $0xb0] sm:$0xff]
        %v4373 = vld [vmem:[#allocation27 + $0xb8] sm:$0xff]
        %v4374 = vld [vmem:[#allocation27 + $0xc0] sm:$0xff]
        %v4375 = vld [vmem:[#allocation27 + $0xc8] sm:$0xff]
        %v4376 = vld [vmem:[#allocation27 + $0xd0] sm:$0xff]
        %v4377 = vld [vmem:[#allocation27 + $0xd8] sm:$0xff]
        %v4378 = vld [vmem:[#allocation27 + $0xe0] sm:$0xff]
        %v4379 = vld [vmem:[#allocation27 + $0xe8] sm:$0xff]
        %v4380 = vld [vmem:[#allocation27 + $0xf0] sm:$0xff]
        %v4381 = vld [vmem:[#allocation27 + $0xf8] sm:$0xff]
        %v4382 = vld [vmem:[%s20] sm:$0xf]
        %v4415 = vunpack.c.l.b16 %v4350
        %v4416 = vunpack.c.h.b16 %v4350
        %v4417 = vunpack.c.l.b16 %v4351
        %v4418 = vunpack.c.h.b16 %v4351
        %v4419 = vunpack.c.l.b16 %v4352
        %v4420 = vunpack.c.h.b16 %v4352
        %v4421 = vunpack.c.l.b16 %v4353
        %v4422 = vunpack.c.h.b16 %v4353
        %v4423 = vunpack.c.l.b16 %v4354
        %v4424 = vunpack.c.h.b16 %v4354
        %v4425 = vunpack.c.l.b16 %v4355
        %v4426 = vunpack.c.h.b16 %v4355
        %v4427 = vunpack.c.l.b16 %v4356
        %v4428 = vunpack.c.h.b16 %v4356
        %v4429 = vunpack.c.l.b16 %v4357
        %v4430 = vunpack.c.h.b16 %v4357
        %v4431 = vunpack.c.l.b16 %v4358
        %v4432 = vunpack.c.h.b16 %v4358
        %v4433 = vunpack.c.l.b16 %v4359
        %v4434 = vunpack.c.h.b16 %v4359
        %v4435 = vunpack.c.l.b16 %v4360
        %v4436 = vunpack.c.h.b16 %v4360
        %v4437 = vunpack.c.l.b16 %v4361
        %v4438 = vunpack.c.h.b16 %v4361
        %v4439 = vunpack.c.l.b16 %v4362
        %v4440 = vunpack.c.h.b16 %v4362
        %v4441 = vunpack.c.l.b16 %v4363
        %v4442 = vunpack.c.h.b16 %v4363
        %v4443 = vunpack.c.l.b16 %v4364
        %v4444 = vunpack.c.h.b16 %v4364
        %v4445 = vunpack.c.l.b16 %v4365
        %v4446 = vunpack.c.h.b16 %v4365
        %v4447 = vunpack.c.l.b16 %v4366
        %v4448 = vunpack.c.h.b16 %v4366
        %v4449 = vunpack.c.l.b16 %v4367
        %v4450 = vunpack.c.h.b16 %v4367
        %v4451 = vunpack.c.l.b16 %v4368
        %v4452 = vunpack.c.h.b16 %v4368
        %v4453 = vunpack.c.l.b16 %v4369
        %v4454 = vunpack.c.h.b16 %v4369
        %v4455 = vunpack.c.l.b16 %v4370
        %v4456 = vunpack.c.h.b16 %v4370
        %v4457 = vunpack.c.l.b16 %v4371
        %v4458 = vunpack.c.h.b16 %v4371
        %v4459 = vunpack.c.l.b16 %v4372
        %v4460 = vunpack.c.h.b16 %v4372
        %v4461 = vunpack.c.l.b16 %v4373
        %v4462 = vunpack.c.h.b16 %v4373
        %v4463 = vunpack.c.l.b16 %v4374
        %v4464 = vunpack.c.h.b16 %v4374
        %v4465 = vunpack.c.l.b16 %v4375
        %v4466 = vunpack.c.h.b16 %v4375
        %v4467 = vunpack.c.l.b16 %v4376
        %v4468 = vunpack.c.h.b16 %v4376
        %v4469 = vunpack.c.l.b16 %v4377
        %v4470 = vunpack.c.h.b16 %v4377
        %v4471 = vunpack.c.l.b16 %v4378
        %v4472 = vunpack.c.h.b16 %v4378
        %v4473 = vunpack.c.l.b16 %v4379
        %v4474 = vunpack.c.h.b16 %v4379
        %v4475 = vunpack.c.l.b16 %v4380
        %v4476 = vunpack.c.h.b16 %v4380
        %v4477 = vunpack.c.l.b16 %v4381
        %v4478 = vunpack.c.h.b16 %v4381
        %v4479 = vpack.c.b16 %v4419, %v4415
        %v4480 = vpack.c.b16 %v4420, %v4416
        %v4481 = vpack.c.b16 %v4421, %v4417
        %v4482 = vpack.c.b16 %v4422, %v4418
        %v4483 = vpack.c.b16 %v4427, %v4423
        %v4484 = vpack.c.b16 %v4428, %v4424
        %v4485 = vpack.c.b16 %v4429, %v4425
        %v4486 = vpack.c.b16 %v4430, %v4426
        %v4487 = vpack.c.b16 %v4435, %v4431
        %v4488 = vpack.c.b16 %v4436, %v4432
        %v4489 = vpack.c.b16 %v4437, %v4433
        %v4490 = vpack.c.b16 %v4438, %v4434
        %v4491 = vpack.c.b16 %v4443, %v4439
        %v4492 = vpack.c.b16 %v4444, %v4440
        %v4493 = vpack.c.b16 %v4445, %v4441
        %v4494 = vpack.c.b16 %v4446, %v4442
        %v4495 = vpack.c.b16 %v4451, %v4447
        %v4496 = vpack.c.b16 %v4452, %v4448
        %v4497 = vpack.c.b16 %v4453, %v4449
        %v4498 = vpack.c.b16 %v4454, %v4450
        %v4499 = vpack.c.b16 %v4459, %v4455
        %v4500 = vpack.c.b16 %v4460, %v4456
        %v4501 = vpack.c.b16 %v4461, %v4457
        %v4502 = vpack.c.b16 %v4462, %v4458
        %v4503 = vpack.c.b16 %v4467, %v4463
        %v4504 = vpack.c.b16 %v4468, %v4464
        %v4505 = vpack.c.b16 %v4469, %v4465
        %v4506 = vpack.c.b16 %v4470, %v4466
        %v4507 = vpack.c.b16 %v4475, %v4471
        %v4508 = vpack.c.b16 %v4476, %v4472
        %v4509 = vpack.c.b16 %v4477, %v4473
        %v4510 = vpack.c.b16 %v4478, %v4474
        %v4544 = vlaneseq
        %v4545 = vshrl.u32 %v4544, 7
        %v4546 = vsub.s32 0, %v4545
        %v4547 = vrot.slane %v4382, %v4546
        %v4548 = vlaneseq
        %v4549 = vshrl.u32 %v4548, 7
        %v4550 = vsub.s32 1, %v4549
        %v4551 = vrot.slane %v4382, %v4550
        %v4552 = vlaneseq
        %v4553 = vshrl.u32 %v4552, 7
        %v4554 = vsub.s32 2, %v4553
        %v4555 = vrot.slane %v4382, %v4554
        %v4556 = vlaneseq
        %v4557 = vshrl.u32 %v4556, 7
        %v4558 = vsub.s32 3, %v4557
        %v4559 = vrot.slane %v4382, %v4558
        %4564 = vmatprep.subr.bf16.mxu0 %v4508
        %4565 = vmatpush1.bf16.msra.mxu0 %v4507
        %4566 = vmatprep.subr.bf16.mxu0 %v4504
        %4567 = vmatpush1.bf16.msra.mxu0 %v4503
        %4568 = vmatprep.subr.bf16.mxu0 %v4500
        %4569 = vmatpush1.bf16.msra.mxu0 %v4499
        %4570 = vmatprep.subr.bf16.mxu0 %v4496
        %4571 = vmatpush1.bf16.msra.mxu0 %v4495
        %4572 = vmatprep.subr.bf16.mxu0 %v4492
        %4573 = vmatpush1.bf16.msra.mxu0 %v4491
        %4574 = vmatprep.subr.bf16.mxu0 %v4488
        %4575 = vmatpush1.bf16.msra.mxu0 %v4487
        %4576 = vmatprep.subr.bf16.mxu0 %v4484
        %4577 = vmatpush1.bf16.msra.mxu0 %v4483
        %4578 = vmatprep.subr.bf16.mxu0 %v4480
        %4579 = vmatpush1.bf16.msra.mxu0 %v4479
        %4580 = vmatprep.subr.bf16.mxu0 0
        %4581 = vmatpush2.bf16.msra.mxu0 0
        %4582 = vmatprep.subr.bf16.mxu0 0
        %4583 = vmatpush2.bf16.msra.mxu0 0
        %4584 = vmatprep.subr.bf16.mxu0 0
        %4585 = vmatpush2.bf16.msra.mxu0 0
        %4586 = vmatprep.subr.bf16.mxu0 0
        %4587 = vmatpush2.bf16.msra.mxu0 0
        %4588 = vmatprep.subr.bf16.mxu0 0
        %4589 = vmatpush2.bf16.msra.mxu0 0
        %4590 = vmatprep.subr.bf16.mxu0 0
        %4591 = vmatpush2.bf16.msra.mxu0 0
        %4592 = vmatprep.subr.bf16.mxu0 0
        %4593 = vmatpush2.bf16.msra.mxu0 0
        %4594 = vmatprep.subr.bf16.mxu0 0
        %4595 = vmatpush2.bf16.msra.mxu0 0
        %4596 = vmatprep.mubr.bf16.mxu0 0
        %4597 = vmatmul.mubr.bf16.gmra.mxu0 %v4349
        %v4598 = vpop.f32.mrf.mxu0
        %v4599 = vadd.f32 %v4547, %v4598
        %v4600 = vpop.f32.mrf.mxu0
        %v4601 = vadd.f32 %v4551, %v4600
        %v4602 = vpop.f32.mrf.mxu0
        %v4603 = vpop.f32.mrf.mxu0
        %4604 = vdwg.mxu0
        %4605 = vmatprep.subr.bf16.mxu0 %v4510
        %4606 = vmatpush1.bf16.msra.mxu0 %v4509
        %4607 = vmatprep.subr.bf16.mxu0 %v4506
        %4608 = vmatpush1.bf16.msra.mxu0 %v4505
        %4609 = vmatprep.subr.bf16.mxu0 %v4502
        %4610 = vmatpush1.bf16.msra.mxu0 %v4501
        %4611 = vmatprep.subr.bf16.mxu0 %v4498
        %4612 = vmatpush1.bf16.msra.mxu0 %v4497
        %4613 = vmatprep.subr.bf16.mxu0 %v4494
        %4614 = vmatpush1.bf16.msra.mxu0 %v4493
        %4615 = vmatprep.subr.bf16.mxu0 %v4490
        %4616 = vmatpush1.bf16.msra.mxu0 %v4489
        %4617 = vmatprep.subr.bf16.mxu0 %v4486
        %4618 = vmatpush1.bf16.msra.mxu0 %v4485
        %4619 = vmatprep.subr.bf16.mxu0 %v4482
        %4620 = vmatpush1.bf16.msra.mxu0 %v4481
        %4621 = vmatprep.subr.bf16.mxu0 0
        %4622 = vmatpush2.bf16.msra.mxu0 0
        %4623 = vmatprep.subr.bf16.mxu0 0
        %4624 = vmatpush2.bf16.msra.mxu0 0
        %4625 = vmatprep.subr.bf16.mxu0 0
        %4626 = vmatpush2.bf16.msra.mxu0 0
        %4627 = vmatprep.subr.bf16.mxu0 0
        %4628 = vmatpush2.bf16.msra.mxu0 0
        %4629 = vmatprep.subr.bf16.mxu0 0
        %4630 = vmatpush2.bf16.msra.mxu0 0
        %4631 = vmatprep.subr.bf16.mxu0 0
        %4632 = vmatpush2.bf16.msra.mxu0 0
        %4633 = vmatprep.subr.bf16.mxu0 0
        %4634 = vmatpush2.bf16.msra.mxu0 0
        %4635 = vmatprep.subr.bf16.mxu0 0
        %4636 = vmatpush2.bf16.msra.mxu0 0
        %4637 = vmatprep.mubr.bf16.mxu0 0
        %4638 = vmatmul.mubr.bf16.gmra.mxu0 %v4349
        %v4639 = vpop.f32.mrf.mxu0
        %v4640 = vadd.f32 %v4555, %v4639
        %v4641 = vpop.f32.mrf.mxu0
        %v4642 = vadd.f32 %v4559, %v4641
        %v4643 = vpop.f32.mrf.mxu0
        %v4644 = vpop.f32.mrf.mxu0
        %4645 = vdwg.mxu0
        %v4650 = vcombine.low %v4599, %v4601
        %v4651 = vcombine.low %v4640, %v4642
        %v4653 = vunpack.c.l.s4 1966171168
        %v4654 = vunpack.c.0.s8 %v4653
        %v4655 = vlaneseq
        %v4656 = vshrl.u32 %v4655, 7
        %v4657 = vsub.s32 %v4654, %v4656
        %v4658 = vrot.slane %v4650, %v4657
        %v4660 = vunpack.c.l.s4 1966171168
        %v4661 = vunpack.c.0.s8 %v4660
        %v4662 = vlaneseq
        %v4663 = vshrl.u32 %v4662, 7
        %v4664 = vsub.s32 %v4661, %v4663
        %v4665 = vrot.slane %v4651, %v4664
        %v4666 = vcombine.low %v4658, %v4665
        %v4668 = vunpack.c.l.s4 1966171168
        %v4669 = vunpack.c.0.s8 %v4668
        %v4670 = vlaneseq
        %v4671 = vshrl.u32 %v4670, 7
        %v4672 = vsub.s32 %v4669, %v4671
        %v4673 = vrot.slane %v4666, %v4672
        %v4675 = vlaneseq
        %vm4676 = vcmp.ge.s32.totalorder %v4675, 0
        %vm4677 = vcmp.lt.s32.totalorder %v4675, 512
        %vm4678 = vmand %vm4676, %vm4677
        %4679 = vst.msk [vmem:[%s876] sm:$0xf] %vm4678, %v4673
        %p4680 = scmp.lt.s32.totalorder %s41, 1
        %s4681 = scalar_select %p4680, %s41, 1
        %s4682 = smul.addr %s4681, 4
        %s4683 = scalar_lea.vmem %s21, %s4682
        // Predicated region
        $region169: #{text_model_forward.1} parent=103 // pred_check
          %p4684 = pneg %p505
        $region170: #{text_model_forward.1} parent=103 // pred_check_branch
          %4686 = sbr.rel (%p4684) target = $region172
        $region171: #{text_model_forward.1} parent=103 // pred_region
          _
        $region172: #{text_model_forward.1} parent=103 // pred_fallthru
          _
      $region104: #{text_model_forward.1} parent=5 // pred_fallthru
        _
      %p4687 = scmp.le.s32.totalorder 2, %s36
      // Predicated region
      $region173: #{text_model_forward.1} parent=5 // pred_check
        %p4688 = pneg %p4687
      $region174: #{text_model_forward.1} parent=5 // pred_check_branch
        %4690 = sbr.rel (%p4688) target = $region176
      $region175: #{text_model_forward.1} parent=5 // pred_region
        %s4691 = ssub.s32 %s36, 2
        // Predicated region
        $region177: #{text_model_forward.1} parent=175 // pred_check
          %p4692 = pneg %p511
        $region178: #{text_model_forward.1} parent=175 // pred_check_branch
          %4694 = sbr.rel (%p4692) target = $region180
        $region179: #{text_model_forward.1} parent=175 // pred_region
          %p4695 = scmp.lt.s32.totalorder %s42, 1
          %s4696 = scalar_select %p4695, %s42, 1
          %s4697 = smul.addr %s4696, 4
          %s4698 = scalar_lea.vmem %s21, %s4697
        $region180: #{text_model_forward.1} parent=175 // pred_fallthru
          _
      $region176: #{text_model_forward.1} parent=5 // pred_fallthru
        _
    $region6: #{text_model_forward.1} parent=1 // loop_footer
      %s40 = sadd.s32 1, %s36
    $region7: #{text_model_forward.1} parent=1 // loop_footer_branch
      %35 = sbr.rel target = $region3
    $region8: #{text_model_forward.1} parent=1 // loop_exit
      _
    %4699 = vsyncpa [#allocation4], 1
    %s4700 = scalar_lea.sflag [#allocation4], 1
    %4701 = vsyncpa %s4700, 1
    %4702 = vsyncpa [#allocation8], 1
    %4703 = vsyncpa [#allocation11], 1
    %4704 = vsyncpa [#allocation14], 1
    %4705 = vsyncpa [#allocation17], 1
    %4706 = vsyncpa [#allocation20], 1
    %4707 = vsyncpa [#allocation23], 1
    %4708 = vsyncpa [#allocation26], 1
    %4709 = vsyncpa [#allocation5], 1
    %s4710 = scalar_lea.sflag [#allocation5], 1
    %4711 = vsyncpa %s4710, 1

</llo_original>
